<compile_context>
chip_gen: v7x
topology: tpu7x:2x2x1
jax: 0.10.0
libtpu: 0.0.40
codegen_flags: <defaults>
</compile_context>

<pallas_src>
import math

import jax
import jax.numpy as jnp
from jax.experimental import pallas as pl
from jax.experimental.pallas import tpu as pltpu

EMBED_DIM = 64
FFN_HIDDEN_DIM = 128
NHEAD = 4
NUM_LAYERS = 2
SEQ_LEN = 16          # small stand-in for the original 1900
BATCH = 2

_LN_EPS = 1e-5
_P_WIDTH = 128                                      # bias/LN slab lane width
_W_STRIDE = 3 * EMBED_DIM + FFN_HIDDEN_DIM          # 320 weight-slab rows/layer
_P_STRIDE = 6                                       # bias/LN slab rows/layer
_Q_BLOCK = 256                                      # query tile for attention


def _mm(a, b):
    """a @ b on the MXU, bf16 operands, fp32 accumulation."""
    return jax.lax.dot_general(
        a.astype(jnp.bfloat16), b.astype(jnp.bfloat16),
        (((1,), (0,)), ((), ())), preferred_element_type=jnp.float32)


def _mm_t(a, b):
    """a @ b.T on the MXU, bf16 operands, fp32 accumulation."""
    return jax.lax.dot_general(
        a.astype(jnp.bfloat16), b.astype(jnp.bfloat16),
        (((1,), (1,)), ((), ())), preferred_element_type=jnp.float32)


def _layer_norm(z, w, b):
    mu = jnp.mean(z, axis=-1, keepdims=True)
    c = z - mu
    var = jnp.mean(c * c, axis=-1, keepdims=True)
    return c * jax.lax.rsqrt(var + _LN_EPS) * w + b


def discriminator_kernel(x_ref, pe_ref, w_ref, p_ref, o_ref, ctx_ref):
    """One grid step == one batch element."""
    S, E = pe_ref.shape
    H = NHEAD
    hd = E // H
    F = FFN_HIDDEN_DIM
    scale = 1.0 / math.sqrt(hd)
    TQ = min(S, _Q_BLOCK)
    n_qblk = (S + TQ - 1) // TQ

    pe = pe_ref[...]                                # (S, E) f32
    ilw = p_ref[0:1, 0:E]                           # Linear(1,E) weight (row)
    ilb = p_ref[0:1, E:2 * E]                       # Linear(1,E) bias

    # input_linear + positional encoding for this batch element: (S, E).
    x_col = jnp.transpose(x_ref[0])                 # (S, 1)
    h = x_col * ilw + (pe + ilb)                    # hoisted (pe + bias)

    for l in range(NUM_LAYERS):
        wb = l * _W_STRIDE                          # weight-slab row base
        rb = 2 + l * _P_STRIDE                      # bias/LN-slab row base

        h_bf = h.astype(jnp.bfloat16)

        # ---- projections (lane-dense weight slab) ----
        qk = _mm(h_bf, w_ref[wb:wb + E, :])                         # (S, 2E)
        # pre-scale Q here instead of scaling the (TQ,S) score tiles
        q = ((qk[:, 0:E] + p_ref[rb:rb + 1, 0:E]) * scale).astype(jnp.bfloat16)
        k = (qk[:, E:2 * E] + p_ref[rb:rb + 1, E:2 * E]).astype(jnp.bfloat16)
        v = (_mm(h_bf, w_ref[wb + E:wb + 2 * E, 0:E])
             + p_ref[rb + 1:rb + 2, 0:E]).astype(jnp.bfloat16)      # (S, E)

        # ---- attention: per (head, query-block), PV written into scratch ----
        for hh in range(H):
            lo = hh * hd
            kh = k[:, lo:lo + hd]
            vh = v[:, lo:lo + hd]
            for qb in range(n_qblk):
                q0 = qb * TQ
                tq = min(TQ, S - q0)
                qh = q[q0:q0 + tq, lo:lo + hd]
                s = _mm_t(qh, kh)                                   # (tq, S)
                s = s - jnp.max(s, axis=-1, keepdims=True)
                p = jnp.exp(s)
                p = p * pl.reciprocal(
                    jnp.sum(p, axis=-1, keepdims=True), approx=True)
                ctx_ref[q0:q0 + tq, lo:lo + hd] = _mm(p, vh)        # (tq, hd)

        # single K=64 out-projection over all heads
        attn = (_mm(ctx_ref[...].astype(jnp.bfloat16),
                    w_ref[wb + E:wb + 2 * E, E:2 * E])
                + p_ref[rb + 1:rb + 2, E:2 * E])

        h = _layer_norm(h + attn,
                        p_ref[rb + 3:rb + 4, E:2 * E],              # norm1 w
                        p_ref[rb + 4:rb + 5, 0:E])                  # norm1 b

        # ---- feed-forward (ReLU) ----
        ff = _mm(h.astype(jnp.bfloat16), w_ref[wb + 2 * E:wb + 3 * E, :]) \
            + p_ref[rb + 2:rb + 3, 0:F]                             # linear1+b1
        ff = jnp.maximum(ff, 0.0)
        ff = _mm(ff.astype(jnp.bfloat16),
                 w_ref[wb + 3 * E:wb + 3 * E + F, 0:E]) \
            + p_ref[rb + 3:rb + 4, 0:E]                             # linear2+b2

        h = _layer_norm(h + ff,
                        p_ref[rb + 4:rb + 5, E:2 * E],              # norm2 w
                        p_ref[rb + 5:rb + 6, 0:E])                  # norm2 b

    # ---- token-0 readout + Linear(E,1) on the VPU ----
    tok = h[0:1, :]
    olw = p_ref[1:2, 0:E]
    olb = p_ref[1:2, E:E + 1]
    res = jnp.sum(tok * olw, axis=-1, keepdims=True) + olb          # (1, 1)
    o_ref[0] = jnp.broadcast_to(res, (1, _P_WIDTH))


def build_positional_encoding(seq_len, emb):
    pos = jnp.arange(seq_len, dtype=jnp.float32)[:, None]
    div = jnp.exp(jnp.arange(0, emb, 2, dtype=jnp.float32) *
                  (-math.log(10000.0) / emb))
    pe = jnp.zeros((seq_len, emb), jnp.float32)
    pe = pe.at[:, 0::2].set(jnp.sin(pos * div))
    pe = pe.at[:, 1::2].set(jnp.cos(pos * div))
    return pe


def build_params(key, emb=EMBED_DIM, ffn=FFN_HIDDEN_DIM, nlayers=NUM_LAYERS):
    def nrm(k, shape, scl=0.1):
        return (scl * jax.random.normal(k, shape)).astype(jnp.float32)

    ks = iter(jax.random.split(key, 4 + nlayers * 8))
    params = {
        "ilw": nrm(next(ks), (emb,)),      # Linear(1, emb) weight (col view)
        "ilb": nrm(next(ks), (emb,)),
        "olw": nrm(next(ks), (emb,)),      # Linear(emb, 1) weight (row view)
        "olb": nrm(next(ks), (1,)),
        "layers": [],
    }
    for _ in range(nlayers):
        params["layers"].append(dict(
            wqkv=nrm(next(ks), (3 * emb, emb)),   # in_proj weight
            bqkv=nrm(next(ks), (3 * emb,)),       # in_proj bias
            wo=nrm(next(ks), (emb, emb)),         # out_proj weight
            bo=nrm(next(ks), (emb,)),             # out_proj bias
            w1=nrm(next(ks), (ffn, emb)),         # linear1 weight
            b1=nrm(next(ks), (ffn,)),             # linear1 bias
            w2=nrm(next(ks), (emb, ffn)),         # linear2 weight
            b2=nrm(next(ks), (emb,)),             # linear2 bias
            n1w=jnp.ones((emb,), jnp.float32),
            n1b=jnp.zeros((emb,), jnp.float32),
            n2w=jnp.ones((emb,), jnp.float32),
            n2b=jnp.zeros((emb,), jnp.float32),
        ))
    return params


def _row(*pieces):
    """Concatenate 1-D pieces into one zero-padded (1, _P_WIDTH) f32 row."""
    v = jnp.concatenate([jnp.asarray(p, jnp.float32).reshape(-1) for p in pieces])
    return jnp.pad(v, (0, _P_WIDTH - v.shape[0]))[None, :]


def pack_params(params, emb=EMBED_DIM):
    """Lane-dense packing: weights -> (rows, 128) bf16 slab, biases/LN ->
    (rows, 128) f32 slab.  Per-layer weight rows:
      [ Wq^T | Wk^T ] (E,128), [ Wv^T | Wo^T ] (E,128), W1^T (E,128),
      [ W2^T | 0 ] (F,128)."""
    wrows, prows = [], []
    prows.append(_row(params["ilw"], params["ilb"]))
    prows.append(_row(params["olw"], params["olb"]))
    for L in params["layers"]:
        wqkv = L["wqkv"]
        wq, wk, wv = wqkv[0:emb], wqkv[emb:2 * emb], wqkv[2 * emb:3 * emb]
        wrows.append(jnp.concatenate([wq.T, wk.T], axis=1))           # (E, 128)
        wrows.append(jnp.concatenate([wv.T, L["wo"].T], axis=1))      # (E, 128)
        wrows.append(L["w1"].T)                                       # (E, 128)
        w2t = L["w2"].T                                                # (F, E)
        wrows.append(jnp.concatenate([w2t, jnp.zeros_like(w2t)], axis=1))
        bqkv = L["bqkv"]
        prows += [
            _row(bqkv[0:emb], bqkv[emb:2 * emb]),       # [q bias | k bias]
            _row(bqkv[2 * emb:3 * emb], L["bo"]),       # [v bias | out bias]
            _row(L["b1"]),                              # linear1 bias
            _row(L["b2"], L["n1w"]),                    # [b2 | norm1 w]
            _row(L["n1b"], L["n2w"]),                   # [norm1 b | norm2 w]
            _row(L["n2b"]),                             # [norm2 b | pad]
        ]
    wslab = jnp.concatenate(wrows, axis=0).astype(jnp.bfloat16)
    pslab = jnp.concatenate(prows, axis=0)
    return wslab, pslab


def discriminator_forward(x, params, pe):
    B, S = x.shape
    wslab, pslab = pack_params(params)
    full_vmem = pl.BlockSpec(memory_space=pltpu.MemorySpace.VMEM)
    out = pl.pallas_call(
        discriminator_kernel,
        out_shape=jax.ShapeDtypeStruct((B, 1, _P_WIDTH), jnp.float32),
        grid_spec=pltpu.PrefetchScalarGridSpec(
            num_scalar_prefetch=0,
            grid=(B,),
            in_specs=[
                pl.BlockSpec((1, 1, S), lambda b: (b, 0, 0)),   # x row, lane-dense
                full_vmem,                                      # pe
                full_vmem,                                      # weight slab
                full_vmem,                                      # bias/LN slab
            ],
            out_specs=pl.BlockSpec((1, 1, _P_WIDTH), lambda b: (b, 0, 0)),
            scratch_shapes=[pltpu.VMEM((S, EMBED_DIM), jnp.float32)],
        ),
        compiler_params=pltpu.CompilerParams(
            dimension_semantics=("parallel",),
            vmem_limit_bytes=32 * 1024 * 1024,
        ),
    )(x.reshape(B, 1, S).astype(jnp.float32), pe.astype(jnp.float32),
      wslab, pslab)
    return out[:, 0, 0:1]


if __name__ == "__main__":
    key = jax.random.PRNGKey(0)
    kx, kp = jax.random.split(key)
    x = jax.random.normal(kx, (BATCH, SEQ_LEN), dtype=jnp.float32)
    params = build_params(kp)
    pe = build_positional_encoding(SEQ_LEN, EMBED_DIM)

    out = discriminator_forward(x, params, pe)
    out = jax.block_until_ready(out)

    assert out.shape == (BATCH, 1), out.shape
    assert bool(jnp.all(jnp.isfinite(out)))
    print("KERNEL_OK")
</pallas_src>

<mosaic_0001>
module attributes {stable_mosaic.version = 11 : i64} {
  func.func @discriminator_kernel(%arg0: i32, %arg1: memref<1x1x16xf32, #tpu.memory_space<vmem>>, %arg2: memref<16x64xf32, #tpu.memory_space<vmem>>, %arg3: memref<640x128xbf16, #tpu.memory_space<vmem>>, %arg4: memref<14x128xf32, #tpu.memory_space<vmem>>, %arg5: memref<1x1x128xf32, #tpu.memory_space<vmem>>, %arg6: memref<16x64xf32, #tpu.memory_space<vmem>>) attributes {dimension_semantics = [#tpu.dimension_semantics<parallel>], iteration_bounds = array<i64: 2>, scalar_prefetch = 0 : i64, scratch_operands = 1 : i64, tpu.core_type = #tpu.core_type<tc>, window_params = [{transform_indices = @transform_0, window_bounds = array<i64: 1, 1, 16>}, {pipeline_mode = #tpu.pipeline_mode<synchronous>, transform_indices = @transform_1, window_bounds = array<i64: 16, 64>}, {pipeline_mode = #tpu.pipeline_mode<synchronous>, transform_indices = @transform_2, window_bounds = array<i64: 640, 128>}, {pipeline_mode = #tpu.pipeline_mode<synchronous>, transform_indices = @transform_3, window_bounds = array<i64: 14, 128>}, {transform_indices = @transform_4, window_bounds = array<i64: 1, 1, 128>}]} {
    %c0 = arith.constant 0 : index
    %c0_0 = arith.constant 0 : index
    %0 = vector.load %arg2[%c0, %c0_0] : memref<16x64xf32, #tpu.memory_space<vmem>>, vector<16x64xf32>
    %c0_1 = arith.constant 0 : index
    %c0_2 = arith.constant 0 : index
    %1 = vector.load %arg4[%c0_1, %c0_2] : memref<14x128xf32, #tpu.memory_space<vmem>>, vector<1x64xf32>
    %c0_3 = arith.constant 0 : index
    %c64 = arith.constant 64 : index
    %2 = vector.load %arg4[%c0_3, %c64] : memref<14x128xf32, #tpu.memory_space<vmem>>, vector<1x64xf32>
    %c0_4 = arith.constant 0 : index
    %c0_5 = arith.constant 0 : index
    %c0_6 = arith.constant 0 : index
    %3 = vector.load %arg1[%c0_4, %c0_5, %c0_6] : memref<1x1x16xf32, #tpu.memory_space<vmem>>, vector<1x1x16xf32>
    %4 = vector.shape_cast %3 : vector<1x1x16xf32> to vector<1x16xf32>
    %5 = tpu.transpose %4, [1, 0] : vector<1x16xf32> -> vector<16x1xf32>
    %6 = vector.broadcast %5 : vector<16x1xf32> to vector<16x64xf32>
    %7 = vector.broadcast %1 : vector<1x64xf32> to vector<16x64xf32>
    %8 = arith.mulf %6, %7 : vector<16x64xf32>
    %9 = vector.broadcast %2 : vector<1x64xf32> to vector<16x64xf32>
    %10 = arith.addf %0, %9 : vector<16x64xf32>
    %11 = arith.addf %8, %10 : vector<16x64xf32>
    %12 = arith.truncf %11 : vector<16x64xf32> to vector<16x64xbf16>
    %c0_7 = arith.constant 0 : index
    %c0_8 = arith.constant 0 : index
    %13 = vector.load %arg3[%c0_7, %c0_8] : memref<640x128xbf16, #tpu.memory_space<vmem>>, vector<64x128xbf16>
    %cst = arith.constant dense<0.000000e+00> : vector<16x128xf32>
    %14 = tpu.matmul %12, %13, %cst {dimension_numbers = #tpu.dot_dimension_numbers<[1], [0], [0], [1], [0, 0, 1, 1], [], []>} : vector<16x64xbf16>, vector<64x128xbf16>, vector<16x128xf32> -> vector<16x128xf32>
    %15 = vector.extract_strided_slice %14 {offsets = [0, 0], sizes = [16, 64], strides = [1, 1]} : vector<16x128xf32> to vector<16x64xf32>
    %c2 = arith.constant 2 : index
    %c0_9 = arith.constant 0 : index
    %16 = vector.load %arg4[%c2, %c0_9] : memref<14x128xf32, #tpu.memory_space<vmem>>, vector<1x64xf32>
    %17 = vector.broadcast %16 : vector<1x64xf32> to vector<16x64xf32>
    %18 = arith.addf %15, %17 : vector<16x64xf32>
    %cst_10 = arith.constant 2.500000e-01 : f32
    %19 = vector.broadcast %cst_10 : f32 to vector<16x64xf32>
    %20 = arith.mulf %18, %19 : vector<16x64xf32>
    %21 = arith.truncf %20 : vector<16x64xf32> to vector<16x64xbf16>
    %22 = vector.extract_strided_slice %14 {offsets = [0, 64], sizes = [16, 64], strides = [1, 1]} : vector<16x128xf32> to vector<16x64xf32>
    %c2_11 = arith.constant 2 : index
    %c64_12 = arith.constant 64 : index
    %23 = vector.load %arg4[%c2_11, %c64_12] : memref<14x128xf32, #tpu.memory_space<vmem>>, vector<1x64xf32>
    %24 = vector.broadcast %23 : vector<1x64xf32> to vector<16x64xf32>
    %25 = arith.addf %22, %24 : vector<16x64xf32>
    %26 = arith.truncf %25 : vector<16x64xf32> to vector<16x64xbf16>
    %c64_13 = arith.constant 64 : index
    %c0_14 = arith.constant 0 : index
    %27 = vector.load %arg3[%c64_13, %c0_14] : memref<640x128xbf16, #tpu.memory_space<vmem>>, vector<64x64xbf16>
    %cst_15 = arith.constant dense<0.000000e+00> : vector<16x64xf32>
    %28 = tpu.matmul %12, %27, %cst_15 {dimension_numbers = #tpu.dot_dimension_numbers<[1], [0], [0], [1], [0, 0, 1, 1], [], []>} : vector<16x64xbf16>, vector<64x64xbf16>, vector<16x64xf32> -> vector<16x64xf32>
    %c3 = arith.constant 3 : index
    %c0_16 = arith.constant 0 : index
    %29 = vector.load %arg4[%c3, %c0_16] : memref<14x128xf32, #tpu.memory_space<vmem>>, vector<1x64xf32>
    %30 = vector.broadcast %29 : vector<1x64xf32> to vector<16x64xf32>
    %31 = arith.addf %28, %30 : vector<16x64xf32>
    %32 = arith.truncf %31 : vector<16x64xf32> to vector<16x64xbf16>
    %33 = vector.extract_strided_slice %26 {offsets = [0, 0], sizes = [16, 16], strides = [1, 1]} : vector<16x64xbf16> to vector<16x16xbf16>
    %34 = vector.extract_strided_slice %32 {offsets = [0, 0], sizes = [16, 16], strides = [1, 1]} : vector<16x64xbf16> to vector<16x16xbf16>
    %35 = vector.extract_strided_slice %21 {offsets = [0, 0], sizes = [16, 16], strides = [1, 1]} : vector<16x64xbf16> to vector<16x16xbf16>
    %cst_17 = arith.constant dense<0.000000e+00> : vector<16x16xf32>
    %36 = tpu.matmul %35, %33, %cst_17 {dimension_numbers = #tpu.dot_dimension_numbers<[1], [1], [0], [0], [0, 0, 1, 0], [], []>} : vector<16x16xbf16>, vector<16x16xbf16>, vector<16x16xf32> -> vector<16x16xf32>
    %cst_18 = arith.constant dense<0xFF800000> : vector<16xf32>
    %37 = vector.multi_reduction <maximumf>, %36, %cst_18 [1] : vector<16x16xf32> to vector<16xf32>
    %38 = vector.shape_cast %37 : vector<16xf32> to vector<16x1xf32>
    %39 = vector.broadcast %38 : vector<16x1xf32> to vector<16x16xf32>
    %40 = arith.subf %36, %39 : vector<16x16xf32>
    %41 = math.exp %40 : vector<16x16xf32>
    %cst_19 = arith.constant dense<0.000000e+00> : vector<16xf32>
    %42 = vector.multi_reduction <add>, %41, %cst_19 [1] : vector<16x16xf32> to vector<16xf32>
    %43 = vector.shape_cast %42 : vector<16xf32> to vector<16x1xf32>
    %44 = tpu.reciprocal %43 {approx = true} : vector<16x1xf32> -> vector<16x1xf32>
    %45 = vector.broadcast %44 : vector<16x1xf32> to vector<16x16xf32>
    %46 = arith.mulf %41, %45 : vector<16x16xf32>
    %47 = arith.truncf %46 : vector<16x16xf32> to vector<16x16xbf16>
    %cst_20 = arith.constant dense<0.000000e+00> : vector<16x16xf32>
    %48 = tpu.matmul %47, %34, %cst_20 {dimension_numbers = #tpu.dot_dimension_numbers<[1], [0], [0], [1], [0, 0, 1, 1], [], []>} : vector<16x16xbf16>, vector<16x16xbf16>, vector<16x16xf32> -> vector<16x16xf32>
    %c0_21 = arith.constant 0 : index
    %c0_22 = arith.constant 0 : index
    %49 = vector.load %arg6[%c0_21, %c0_22] : memref<16x64xf32, #tpu.memory_space<vmem>>, vector<16x16xf32>
    tpu.vector_store %arg6[%c0_21, %c0_22], %48 {strides = array<i32>} : memref<16x64xf32, #tpu.memory_space<vmem>>, vector<16x16xf32>,
    %50 = vector.extract_strided_slice %26 {offsets = [0, 16], sizes = [16, 16], strides = [1, 1]} : vector<16x64xbf16> to vector<16x16xbf16>
    %51 = vector.extract_strided_slice %32 {offsets = [0, 16], sizes = [16, 16], strides = [1, 1]} : vector<16x64xbf16> to vector<16x16xbf16>
    %52 = vector.extract_strided_slice %21 {offsets = [0, 16], sizes = [16, 16], strides = [1, 1]} : vector<16x64xbf16> to vector<16x16xbf16>
    %cst_23 = arith.constant dense<0.000000e+00> : vector<16x16xf32>
    %53 = tpu.matmul %52, %50, %cst_23 {dimension_numbers = #tpu.dot_dimension_numbers<[1], [1], [0], [0], [0, 0, 1, 0], [], []>} : vector<16x16xbf16>, vector<16x16xbf16>, vector<16x16xf32> -> vector<16x16xf32>
    %cst_24 = arith.constant dense<0xFF800000> : vector<16xf32>
    %54 = vector.multi_reduction <maximumf>, %53, %cst_24 [1] : vector<16x16xf32> to vector<16xf32>
    %55 = vector.shape_cast %54 : vector<16xf32> to vector<16x1xf32>
    %56 = vector.broadcast %55 : vector<16x1xf32> to vector<16x16xf32>
    %57 = arith.subf %53, %56 : vector<16x16xf32>
    %58 = math.exp %57 : vector<16x16xf32>
    %cst_25 = arith.constant dense<0.000000e+00> : vector<16xf32>
    %59 = vector.multi_reduction <add>, %58, %cst_25 [1] : vector<16x16xf32> to vector<16xf32>
    %60 = vector.shape_cast %59 : vector<16xf32> to vector<16x1xf32>
    %61 = tpu.reciprocal %60 {approx = true} : vector<16x1xf32> -> vector<16x1xf32>
    %62 = vector.broadcast %61 : vector<16x1xf32> to vector<16x16xf32>
    %63 = arith.mulf %58, %62 : vector<16x16xf32>
    %64 = arith.truncf %63 : vector<16x16xf32> to vector<16x16xbf16>
    %cst_26 = arith.constant dense<0.000000e+00> : vector<16x16xf32>
    %65 = tpu.matmul %64, %51, %cst_26 {dimension_numbers = #tpu.dot_dimension_numbers<[1], [0], [0], [1], [0, 0, 1, 1], [], []>} : vector<16x16xbf16>, vector<16x16xbf16>, vector<16x16xf32> -> vector<16x16xf32>
    %c0_27 = arith.constant 0 : index
    %c16 = arith.constant 16 : index
    %66 = vector.load %arg6[%c0_27, %c16] : memref<16x64xf32, #tpu.memory_space<vmem>>, vector<16x16xf32>
    tpu.vector_store %arg6[%c0_27, %c16], %65 {strides = array<i32>} : memref<16x64xf32, #tpu.memory_space<vmem>>, vector<16x16xf32>,
    %67 = vector.extract_strided_slice %26 {offsets = [0, 32], sizes = [16, 16], strides = [1, 1]} : vector<16x64xbf16> to vector<16x16xbf16>
    %68 = vector.extract_strided_slice %32 {offsets = [0, 32], sizes = [16, 16], strides = [1, 1]} : vector<16x64xbf16> to vector<16x16xbf16>
    %69 = vector.extract_strided_slice %21 {offsets = [0, 32], sizes = [16, 16], strides = [1, 1]} : vector<16x64xbf16> to vector<16x16xbf16>
    %cst_28 = arith.constant dense<0.000000e+00> : vector<16x16xf32>
    %70 = tpu.matmul %69, %67, %cst_28 {dimension_numbers = #tpu.dot_dimension_numbers<[1], [1], [0], [0], [0, 0, 1, 0], [], []>} : vector<16x16xbf16>, vector<16x16xbf16>, vector<16x16xf32> -> vector<16x16xf32>
    %cst_29 = arith.constant dense<0xFF800000> : vector<16xf32>
    %71 = vector.multi_reduction <maximumf>, %70, %cst_29 [1] : vector<16x16xf32> to vector<16xf32>
    %72 = vector.shape_cast %71 : vector<16xf32> to vector<16x1xf32>
    %73 = vector.broadcast %72 : vector<16x1xf32> to vector<16x16xf32>
    %74 = arith.subf %70, %73 : vector<16x16xf32>
    %75 = math.exp %74 : vector<16x16xf32>
    %cst_30 = arith.constant dense<0.000000e+00> : vector<16xf32>
    %76 = vector.multi_reduction <add>, %75, %cst_30 [1] : vector<16x16xf32> to vector<16xf32>
    %77 = vector.shape_cast %76 : vector<16xf32> to vector<16x1xf32>
    %78 = tpu.reciprocal %77 {approx = true} : vector<16x1xf32> -> vector<16x1xf32>
    %79 = vector.broadcast %78 : vector<16x1xf32> to vector<16x16xf32>
    %80 = arith.mulf %75, %79 : vector<16x16xf32>
    %81 = arith.truncf %80 : vector<16x16xf32> to vector<16x16xbf16>
    %cst_31 = arith.constant dense<0.000000e+00> : vector<16x16xf32>
    %82 = tpu.matmul %81, %68, %cst_31 {dimension_numbers = #tpu.dot_dimension_numbers<[1], [0], [0], [1], [0, 0, 1, 1], [], []>} : vector<16x16xbf16>, vector<16x16xbf16>, vector<16x16xf32> -> vector<16x16xf32>
    %c0_32 = arith.constant 0 : index
    %c32 = arith.constant 32 : index
    %83 = vector.load %arg6[%c0_32, %c32] : memref<16x64xf32, #tpu.memory_space<vmem>>, vector<16x16xf32>
    tpu.vector_store %arg6[%c0_32, %c32], %82 {strides = array<i32>} : memref<16x64xf32, #tpu.memory_space<vmem>>, vector<16x16xf32>,
    %84 = vector.extract_strided_slice %26 {offsets = [0, 48], sizes = [16, 16], strides = [1, 1]} : vector<16x64xbf16> to vector<16x16xbf16>
    %85 = vector.extract_strided_slice %32 {offsets = [0, 48], sizes = [16, 16], strides = [1, 1]} : vector<16x64xbf16> to vector<16x16xbf16>
    %86 = vector.extract_strided_slice %21 {offsets = [0, 48], sizes = [16, 16], strides = [1, 1]} : vector<16x64xbf16> to vector<16x16xbf16>
    %cst_33 = arith.constant dense<0.000000e+00> : vector<16x16xf32>
    %87 = tpu.matmul %86, %84, %cst_33 {dimension_numbers = #tpu.dot_dimension_numbers<[1], [1], [0], [0], [0, 0, 1, 0], [], []>} : vector<16x16xbf16>, vector<16x16xbf16>, vector<16x16xf32> -> vector<16x16xf32>
    %cst_34 = arith.constant dense<0xFF800000> : vector<16xf32>
    %88 = vector.multi_reduction <maximumf>, %87, %cst_34 [1] : vector<16x16xf32> to vector<16xf32>
    %89 = vector.shape_cast %88 : vector<16xf32> to vector<16x1xf32>
    %90 = vector.broadcast %89 : vector<16x1xf32> to vector<16x16xf32>
    %91 = arith.subf %87, %90 : vector<16x16xf32>
    %92 = math.exp %91 : vector<16x16xf32>
    %cst_35 = arith.constant dense<0.000000e+00> : vector<16xf32>
    %93 = vector.multi_reduction <add>, %92, %cst_35 [1] : vector<16x16xf32> to vector<16xf32>
    %94 = vector.shape_cast %93 : vector<16xf32> to vector<16x1xf32>
    %95 = tpu.reciprocal %94 {approx = true} : vector<16x1xf32> -> vector<16x1xf32>
    %96 = vector.broadcast %95 : vector<16x1xf32> to vector<16x16xf32>
    %97 = arith.mulf %92, %96 : vector<16x16xf32>
    %98 = arith.truncf %97 : vector<16x16xf32> to vector<16x16xbf16>
    %cst_36 = arith.constant dense<0.000000e+00> : vector<16x16xf32>
    %99 = tpu.matmul %98, %85, %cst_36 {dimension_numbers = #tpu.dot_dimension_numbers<[1], [0], [0], [1], [0, 0, 1, 1], [], []>} : vector<16x16xbf16>, vector<16x16xbf16>, vector<16x16xf32> -> vector<16x16xf32>
    %c0_37 = arith.constant 0 : index
    %c48 = arith.constant 48 : index
    %100 = vector.load %arg6[%c0_37, %c48] : memref<16x64xf32, #tpu.memory_space<vmem>>, vector<16x16xf32>
    tpu.vector_store %arg6[%c0_37, %c48], %99 {strides = array<i32>} : memref<16x64xf32, #tpu.memory_space<vmem>>, vector<16x16xf32>,
    %c0_38 = arith.constant 0 : index
    %c0_39 = arith.constant 0 : index
    %101 = vector.load %arg6[%c0_38, %c0_39] : memref<16x64xf32, #tpu.memory_space<vmem>>, vector<16x64xf32>
    %102 = arith.truncf %101 : vector<16x64xf32> to vector<16x64xbf16>
    %c64_40 = arith.constant 64 : index
    %c64_41 = arith.constant 64 : index
    %103 = vector.load %arg3[%c64_40, %c64_41] : memref<640x128xbf16, #tpu.memory_space<vmem>>, vector<64x64xbf16>
    %cst_42 = arith.constant dense<0.000000e+00> : vector<16x64xf32>
    %104 = tpu.matmul %102, %103, %cst_42 {dimension_numbers = #tpu.dot_dimension_numbers<[1], [0], [0], [1], [0, 0, 1, 1], [], []>} : vector<16x64xbf16>, vector<64x64xbf16>, vector<16x64xf32> -> vector<16x64xf32>
    %c3_43 = arith.constant 3 : index
    %c64_44 = arith.constant 64 : index
    %105 = vector.load %arg4[%c3_43, %c64_44] : memref<14x128xf32, #tpu.memory_space<vmem>>, vector<1x64xf32>
    %106 = vector.broadcast %105 : vector<1x64xf32> to vector<16x64xf32>
    %107 = arith.addf %104, %106 : vector<16x64xf32>
    %108 = arith.addf %11, %107 : vector<16x64xf32>
    %c5 = arith.constant 5 : index
    %c64_45 = arith.constant 64 : index
    %109 = vector.load %arg4[%c5, %c64_45] : memref<14x128xf32, #tpu.memory_space<vmem>>, vector<1x64xf32>
    %c6 = arith.constant 6 : index
    %c0_46 = arith.constant 0 : index
    %110 = vector.load %arg4[%c6, %c0_46] : memref<14x128xf32, #tpu.memory_space<vmem>>, vector<1x64xf32>
    %cst_47 = arith.constant dense<0.000000e+00> : vector<16xf32>
    %111 = vector.multi_reduction <add>, %108, %cst_47 [1] : vector<16x64xf32> to vector<16xf32>
    %112 = vector.shape_cast %111 : vector<16xf32> to vector<16x1xf32>
    %cst_48 = arith.constant 6.400000e+01 : f32
    %113 = vector.broadcast %cst_48 : f32 to vector<16x1xf32>
    %114 = arith.divf %112, %113 : vector<16x1xf32>
    %115 = vector.broadcast %114 : vector<16x1xf32> to vector<16x64xf32>
    %116 = arith.subf %108, %115 : vector<16x64xf32>
    %117 = arith.mulf %116, %116 : vector<16x64xf32>
    %cst_49 = arith.constant dense<0.000000e+00> : vector<16xf32>
    %118 = vector.multi_reduction <add>, %117, %cst_49 [1] : vector<16x64xf32> to vector<16xf32>
    %119 = vector.shape_cast %118 : vector<16xf32> to vector<16x1xf32>
    %cst_50 = arith.constant 6.400000e+01 : f32
    %120 = vector.broadcast %cst_50 : f32 to vector<16x1xf32>
    %121 = arith.divf %119, %120 : vector<16x1xf32>
    %cst_51 = arith.constant 9.99999974E-6 : f32
    %122 = vector.broadcast %cst_51 : f32 to vector<16x1xf32>
    %123 = arith.addf %121, %122 : vector<16x1xf32>
    %124 = math.rsqrt %123 : vector<16x1xf32>
    %125 = vector.broadcast %124 : vector<16x1xf32> to vector<16x64xf32>
    %126 = arith.mulf %116, %125 : vector<16x64xf32>
    %127 = vector.broadcast %109 : vector<1x64xf32> to vector<16x64xf32>
    %128 = arith.mulf %126, %127 : vector<16x64xf32>
    %129 = vector.broadcast %110 : vector<1x64xf32> to vector<16x64xf32>
    %130 = arith.addf %128, %129 : vector<16x64xf32>
    %131 = arith.truncf %130 : vector<16x64xf32> to vector<16x64xbf16>
    %c128 = arith.constant 128 : index
    %c0_52 = arith.constant 0 : index
    %132 = vector.load %arg3[%c128, %c0_52] : memref<640x128xbf16, #tpu.memory_space<vmem>>, vector<64x128xbf16>
    %cst_53 = arith.constant dense<0.000000e+00> : vector<16x128xf32>
    %133 = tpu.matmul %131, %132, %cst_53 {dimension_numbers = #tpu.dot_dimension_numbers<[1], [0], [0], [1], [0, 0, 1, 1], [], []>} : vector<16x64xbf16>, vector<64x128xbf16>, vector<16x128xf32> -> vector<16x128xf32>
    %c4 = arith.constant 4 : index
    %c0_54 = arith.constant 0 : index
    %134 = vector.load %arg4[%c4, %c0_54] : memref<14x128xf32, #tpu.memory_space<vmem>>, vector<1x128xf32>
    %135 = vector.broadcast %134 : vector<1x128xf32> to vector<16x128xf32>
    %136 = arith.addf %133, %135 : vector<16x128xf32>
    %cst_55 = arith.constant 0.000000e+00 : f32
    %137 = vector.broadcast %cst_55 : f32 to vector<16x128xf32>
    %138 = arith.maximumf %136, %137 : vector<16x128xf32>
    %139 = arith.truncf %138 : vector<16x128xf32> to vector<16x128xbf16>
    %c192 = arith.constant 192 : index
    %c0_56 = arith.constant 0 : index
    %140 = vector.load %arg3[%c192, %c0_56] : memref<640x128xbf16, #tpu.memory_space<vmem>>, vector<128x64xbf16>
    %cst_57 = arith.constant dense<0.000000e+00> : vector<16x64xf32>
    %141 = tpu.matmul %139, %140, %cst_57 {dimension_numbers = #tpu.dot_dimension_numbers<[1], [0], [0], [1], [0, 0, 1, 1], [], []>} : vector<16x128xbf16>, vector<128x64xbf16>, vector<16x64xf32> -> vector<16x64xf32>
    %c5_58 = arith.constant 5 : index
    %c0_59 = arith.constant 0 : index
    %142 = vector.load %arg4[%c5_58, %c0_59] : memref<14x128xf32, #tpu.memory_space<vmem>>, vector<1x64xf32>
    %143 = vector.broadcast %142 : vector<1x64xf32> to vector<16x64xf32>
    %144 = arith.addf %141, %143 : vector<16x64xf32>
    %145 = arith.addf %130, %144 : vector<16x64xf32>
    %c6_60 = arith.constant 6 : index
    %c64_61 = arith.constant 64 : index
    %146 = vector.load %arg4[%c6_60, %c64_61] : memref<14x128xf32, #tpu.memory_space<vmem>>, vector<1x64xf32>
    %c7 = arith.constant 7 : index
    %c0_62 = arith.constant 0 : index
    %147 = vector.load %arg4[%c7, %c0_62] : memref<14x128xf32, #tpu.memory_space<vmem>>, vector<1x64xf32>
    %cst_63 = arith.constant dense<0.000000e+00> : vector<16xf32>
    %148 = vector.multi_reduction <add>, %145, %cst_63 [1] : vector<16x64xf32> to vector<16xf32>
    %149 = vector.shape_cast %148 : vector<16xf32> to vector<16x1xf32>
    %cst_64 = arith.constant 6.400000e+01 : f32
    %150 = vector.broadcast %cst_64 : f32 to vector<16x1xf32>
    %151 = arith.divf %149, %150 : vector<16x1xf32>
    %152 = vector.broadcast %151 : vector<16x1xf32> to vector<16x64xf32>
    %153 = arith.subf %145, %152 : vector<16x64xf32>
    %154 = arith.mulf %153, %153 : vector<16x64xf32>
    %cst_65 = arith.constant dense<0.000000e+00> : vector<16xf32>
    %155 = vector.multi_reduction <add>, %154, %cst_65 [1] : vector<16x64xf32> to vector<16xf32>
    %156 = vector.shape_cast %155 : vector<16xf32> to vector<16x1xf32>
    %cst_66 = arith.constant 6.400000e+01 : f32
    %157 = vector.broadcast %cst_66 : f32 to vector<16x1xf32>
    %158 = arith.divf %156, %157 : vector<16x1xf32>
    %cst_67 = arith.constant 9.99999974E-6 : f32
    %159 = vector.broadcast %cst_67 : f32 to vector<16x1xf32>
    %160 = arith.addf %158, %159 : vector<16x1xf32>
    %161 = math.rsqrt %160 : vector<16x1xf32>
    %162 = vector.broadcast %161 : vector<16x1xf32> to vector<16x64xf32>
    %163 = arith.mulf %153, %162 : vector<16x64xf32>
    %164 = vector.broadcast %146 : vector<1x64xf32> to vector<16x64xf32>
    %165 = arith.mulf %163, %164 : vector<16x64xf32>
    %166 = vector.broadcast %147 : vector<1x64xf32> to vector<16x64xf32>
    %167 = arith.addf %165, %166 : vector<16x64xf32>
    %168 = arith.truncf %167 : vector<16x64xf32> to vector<16x64xbf16>
    %c320 = arith.constant 320 : index
    %c0_68 = arith.constant 0 : index
    %169 = vector.load %arg3[%c320, %c0_68] : memref<640x128xbf16, #tpu.memory_space<vmem>>, vector<64x128xbf16>
    %cst_69 = arith.constant dense<0.000000e+00> : vector<16x128xf32>
    %170 = tpu.matmul %168, %169, %cst_69 {dimension_numbers = #tpu.dot_dimension_numbers<[1], [0], [0], [1], [0, 0, 1, 1], [], []>} : vector<16x64xbf16>, vector<64x128xbf16>, vector<16x128xf32> -> vector<16x128xf32>
    %171 = vector.extract_strided_slice %170 {offsets = [0, 0], sizes = [16, 64], strides = [1, 1]} : vector<16x128xf32> to vector<16x64xf32>
    %c8 = arith.constant 8 : index
    %c0_70 = arith.constant 0 : index
    %172 = vector.load %arg4[%c8, %c0_70] : memref<14x128xf32, #tpu.memory_space<vmem>>, vector<1x64xf32>
    %173 = vector.broadcast %172 : vector<1x64xf32> to vector<16x64xf32>
    %174 = arith.addf %171, %173 : vector<16x64xf32>
    %cst_71 = arith.constant 2.500000e-01 : f32
    %175 = vector.broadcast %cst_71 : f32 to vector<16x64xf32>
    %176 = arith.mulf %174, %175 : vector<16x64xf32>
    %177 = arith.truncf %176 : vector<16x64xf32> to vector<16x64xbf16>
    %178 = vector.extract_strided_slice %170 {offsets = [0, 64], sizes = [16, 64], strides = [1, 1]} : vector<16x128xf32> to vector<16x64xf32>
    %c8_72 = arith.constant 8 : index
    %c64_73 = arith.constant 64 : index
    %179 = vector.load %arg4[%c8_72, %c64_73] : memref<14x128xf32, #tpu.memory_space<vmem>>, vector<1x64xf32>
    %180 = vector.broadcast %179 : vector<1x64xf32> to vector<16x64xf32>
    %181 = arith.addf %178, %180 : vector<16x64xf32>
    %182 = arith.truncf %181 : vector<16x64xf32> to vector<16x64xbf16>
    %c384 = arith.constant 384 : index
    %c0_74 = arith.constant 0 : index
    %183 = vector.load %arg3[%c384, %c0_74] : memref<640x128xbf16, #tpu.memory_space<vmem>>, vector<64x64xbf16>
    %cst_75 = arith.constant dense<0.000000e+00> : vector<16x64xf32>
    %184 = tpu.matmul %168, %183, %cst_75 {dimension_numbers = #tpu.dot_dimension_numbers<[1], [0], [0], [1], [0, 0, 1, 1], [], []>} : vector<16x64xbf16>, vector<64x64xbf16>, vector<16x64xf32> -> vector<16x64xf32>
    %c9 = arith.constant 9 : index
    %c0_76 = arith.constant 0 : index
    %185 = vector.load %arg4[%c9, %c0_76] : memref<14x128xf32, #tpu.memory_space<vmem>>, vector<1x64xf32>
    %186 = vector.broadcast %185 : vector<1x64xf32> to vector<16x64xf32>
    %187 = arith.addf %184, %186 : vector<16x64xf32>
    %188 = arith.truncf %187 : vector<16x64xf32> to vector<16x64xbf16>
    %189 = vector.extract_strided_slice %182 {offsets = [0, 0], sizes = [16, 16], strides = [1, 1]} : vector<16x64xbf16> to vector<16x16xbf16>
    %190 = vector.extract_strided_slice %188 {offsets = [0, 0], sizes = [16, 16], strides = [1, 1]} : vector<16x64xbf16> to vector<16x16xbf16>
    %191 = vector.extract_strided_slice %177 {offsets = [0, 0], sizes = [16, 16], strides = [1, 1]} : vector<16x64xbf16> to vector<16x16xbf16>
    %cst_77 = arith.constant dense<0.000000e+00> : vector<16x16xf32>
    %192 = tpu.matmul %191, %189, %cst_77 {dimension_numbers = #tpu.dot_dimension_numbers<[1], [1], [0], [0], [0, 0, 1, 0], [], []>} : vector<16x16xbf16>, vector<16x16xbf16>, vector<16x16xf32> -> vector<16x16xf32>
    %cst_78 = arith.constant dense<0xFF800000> : vector<16xf32>
    %193 = vector.multi_reduction <maximumf>, %192, %cst_78 [1] : vector<16x16xf32> to vector<16xf32>
    %194 = vector.shape_cast %193 : vector<16xf32> to vector<16x1xf32>
    %195 = vector.broadcast %194 : vector<16x1xf32> to vector<16x16xf32>
    %196 = arith.subf %192, %195 : vector<16x16xf32>
    %197 = math.exp %196 : vector<16x16xf32>
    %cst_79 = arith.constant dense<0.000000e+00> : vector<16xf32>
    %198 = vector.multi_reduction <add>, %197, %cst_79 [1] : vector<16x16xf32> to vector<16xf32>
    %199 = vector.shape_cast %198 : vector<16xf32> to vector<16x1xf32>
    %200 = tpu.reciprocal %199 {approx = true} : vector<16x1xf32> -> vector<16x1xf32>
    %201 = vector.broadcast %200 : vector<16x1xf32> to vector<16x16xf32>
    %202 = arith.mulf %197, %201 : vector<16x16xf32>
    %203 = arith.truncf %202 : vector<16x16xf32> to vector<16x16xbf16>
    %cst_80 = arith.constant dense<0.000000e+00> : vector<16x16xf32>
    %204 = tpu.matmul %203, %190, %cst_80 {dimension_numbers = #tpu.dot_dimension_numbers<[1], [0], [0], [1], [0, 0, 1, 1], [], []>} : vector<16x16xbf16>, vector<16x16xbf16>, vector<16x16xf32> -> vector<16x16xf32>
    %c0_81 = arith.constant 0 : index
    %c0_82 = arith.constant 0 : index
    %205 = vector.load %arg6[%c0_81, %c0_82] : memref<16x64xf32, #tpu.memory_space<vmem>>, vector<16x16xf32>
    tpu.vector_store %arg6[%c0_81, %c0_82], %204 {strides = array<i32>} : memref<16x64xf32, #tpu.memory_space<vmem>>, vector<16x16xf32>,
    %206 = vector.extract_strided_slice %182 {offsets = [0, 16], sizes = [16, 16], strides = [1, 1]} : vector<16x64xbf16> to vector<16x16xbf16>
    %207 = vector.extract_strided_slice %188 {offsets = [0, 16], sizes = [16, 16], strides = [1, 1]} : vector<16x64xbf16> to vector<16x16xbf16>
    %208 = vector.extract_strided_slice %177 {offsets = [0, 16], sizes = [16, 16], strides = [1, 1]} : vector<16x64xbf16> to vector<16x16xbf16>
    %cst_83 = arith.constant dense<0.000000e+00> : vector<16x16xf32>
    %209 = tpu.matmul %208, %206, %cst_83 {dimension_numbers = #tpu.dot_dimension_numbers<[1], [1], [0], [0], [0, 0, 1, 0], [], []>} : vector<16x16xbf16>, vector<16x16xbf16>, vector<16x16xf32> -> vector<16x16xf32>
    %cst_84 = arith.constant dense<0xFF800000> : vector<16xf32>
    %210 = vector.multi_reduction <maximumf>, %209, %cst_84 [1] : vector<16x16xf32> to vector<16xf32>
    %211 = vector.shape_cast %210 : vector<16xf32> to vector<16x1xf32>
    %212 = vector.broadcast %211 : vector<16x1xf32> to vector<16x16xf32>
    %213 = arith.subf %209, %212 : vector<16x16xf32>
    %214 = math.exp %213 : vector<16x16xf32>
    %cst_85 = arith.constant dense<0.000000e+00> : vector<16xf32>
    %215 = vector.multi_reduction <add>, %214, %cst_85 [1] : vector<16x16xf32> to vector<16xf32>
    %216 = vector.shape_cast %215 : vector<16xf32> to vector<16x1xf32>
    %217 = tpu.reciprocal %216 {approx = true} : vector<16x1xf32> -> vector<16x1xf32>
    %218 = vector.broadcast %217 : vector<16x1xf32> to vector<16x16xf32>
    %219 = arith.mulf %214, %218 : vector<16x16xf32>
    %220 = arith.truncf %219 : vector<16x16xf32> to vector<16x16xbf16>
    %cst_86 = arith.constant dense<0.000000e+00> : vector<16x16xf32>
    %221 = tpu.matmul %220, %207, %cst_86 {dimension_numbers = #tpu.dot_dimension_numbers<[1], [0], [0], [1], [0, 0, 1, 1], [], []>} : vector<16x16xbf16>, vector<16x16xbf16>, vector<16x16xf32> -> vector<16x16xf32>
    %c0_87 = arith.constant 0 : index
    %c16_88 = arith.constant 16 : index
    %222 = vector.load %arg6[%c0_87, %c16_88] : memref<16x64xf32, #tpu.memory_space<vmem>>, vector<16x16xf32>
    tpu.vector_store %arg6[%c0_87, %c16_88], %221 {strides = array<i32>} : memref<16x64xf32, #tpu.memory_space<vmem>>, vector<16x16xf32>,
    %223 = vector.extract_strided_slice %182 {offsets = [0, 32], sizes = [16, 16], strides = [1, 1]} : vector<16x64xbf16> to vector<16x16xbf16>
    %224 = vector.extract_strided_slice %188 {offsets = [0, 32], sizes = [16, 16], strides = [1, 1]} : vector<16x64xbf16> to vector<16x16xbf16>
    %225 = vector.extract_strided_slice %177 {offsets = [0, 32], sizes = [16, 16], strides = [1, 1]} : vector<16x64xbf16> to vector<16x16xbf16>
    %cst_89 = arith.constant dense<0.000000e+00> : vector<16x16xf32>
    %226 = tpu.matmul %225, %223, %cst_89 {dimension_numbers = #tpu.dot_dimension_numbers<[1], [1], [0], [0], [0, 0, 1, 0], [], []>} : vector<16x16xbf16>, vector<16x16xbf16>, vector<16x16xf32> -> vector<16x16xf32>
    %cst_90 = arith.constant dense<0xFF800000> : vector<16xf32>
    %227 = vector.multi_reduction <maximumf>, %226, %cst_90 [1] : vector<16x16xf32> to vector<16xf32>
    %228 = vector.shape_cast %227 : vector<16xf32> to vector<16x1xf32>
    %229 = vector.broadcast %228 : vector<16x1xf32> to vector<16x16xf32>
    %230 = arith.subf %226, %229 : vector<16x16xf32>
    %231 = math.exp %230 : vector<16x16xf32>
    %cst_91 = arith.constant dense<0.000000e+00> : vector<16xf32>
    %232 = vector.multi_reduction <add>, %231, %cst_91 [1] : vector<16x16xf32> to vector<16xf32>
    %233 = vector.shape_cast %232 : vector<16xf32> to vector<16x1xf32>
    %234 = tpu.reciprocal %233 {approx = true} : vector<16x1xf32> -> vector<16x1xf32>
    %235 = vector.broadcast %234 : vector<16x1xf32> to vector<16x16xf32>
    %236 = arith.mulf %231, %235 : vector<16x16xf32>
    %237 = arith.truncf %236 : vector<16x16xf32> to vector<16x16xbf16>
    %cst_92 = arith.constant dense<0.000000e+00> : vector<16x16xf32>
    %238 = tpu.matmul %237, %224, %cst_92 {dimension_numbers = #tpu.dot_dimension_numbers<[1], [0], [0], [1], [0, 0, 1, 1], [], []>} : vector<16x16xbf16>, vector<16x16xbf16>, vector<16x16xf32> -> vector<16x16xf32>
    %c0_93 = arith.constant 0 : index
    %c32_94 = arith.constant 32 : index
    %239 = vector.load %arg6[%c0_93, %c32_94] : memref<16x64xf32, #tpu.memory_space<vmem>>, vector<16x16xf32>
    tpu.vector_store %arg6[%c0_93, %c32_94], %238 {strides = array<i32>} : memref<16x64xf32, #tpu.memory_space<vmem>>, vector<16x16xf32>,
    %240 = vector.extract_strided_slice %182 {offsets = [0, 48], sizes = [16, 16], strides = [1, 1]} : vector<16x64xbf16> to vector<16x16xbf16>
    %241 = vector.extract_strided_slice %188 {offsets = [0, 48], sizes = [16, 16], strides = [1, 1]} : vector<16x64xbf16> to vector<16x16xbf16>
    %242 = vector.extract_strided_slice %177 {offsets = [0, 48], sizes = [16, 16], strides = [1, 1]} : vector<16x64xbf16> to vector<16x16xbf16>
    %cst_95 = arith.constant dense<0.000000e+00> : vector<16x16xf32>
    %243 = tpu.matmul %242, %240, %cst_95 {dimension_numbers = #tpu.dot_dimension_numbers<[1], [1], [0], [0], [0, 0, 1, 0], [], []>} : vector<16x16xbf16>, vector<16x16xbf16>, vector<16x16xf32> -> vector<16x16xf32>
    %cst_96 = arith.constant dense<0xFF800000> : vector<16xf32>
    %244 = vector.multi_reduction <maximumf>, %243, %cst_96 [1] : vector<16x16xf32> to vector<16xf32>
    %245 = vector.shape_cast %244 : vector<16xf32> to vector<16x1xf32>
    %246 = vector.broadcast %245 : vector<16x1xf32> to vector<16x16xf32>
    %247 = arith.subf %243, %246 : vector<16x16xf32>
    %248 = math.exp %247 : vector<16x16xf32>
    %cst_97 = arith.constant dense<0.000000e+00> : vector<16xf32>
    %249 = vector.multi_reduction <add>, %248, %cst_97 [1] : vector<16x16xf32> to vector<16xf32>
    %250 = vector.shape_cast %249 : vector<16xf32> to vector<16x1xf32>
    %251 = tpu.reciprocal %250 {approx = true} : vector<16x1xf32> -> vector<16x1xf32>
    %252 = vector.broadcast %251 : vector<16x1xf32> to vector<16x16xf32>
    %253 = arith.mulf %248, %252 : vector<16x16xf32>
    %254 = arith.truncf %253 : vector<16x16xf32> to vector<16x16xbf16>
    %cst_98 = arith.constant dense<0.000000e+00> : vector<16x16xf32>
    %255 = tpu.matmul %254, %241, %cst_98 {dimension_numbers = #tpu.dot_dimension_numbers<[1], [0], [0], [1], [0, 0, 1, 1], [], []>} : vector<16x16xbf16>, vector<16x16xbf16>, vector<16x16xf32> -> vector<16x16xf32>
    %c0_99 = arith.constant 0 : index
    %c48_100 = arith.constant 48 : index
    %256 = vector.load %arg6[%c0_99, %c48_100] : memref<16x64xf32, #tpu.memory_space<vmem>>, vector<16x16xf32>
    tpu.vector_store %arg6[%c0_99, %c48_100], %255 {strides = array<i32>} : memref<16x64xf32, #tpu.memory_space<vmem>>, vector<16x16xf32>,
    %c0_101 = arith.constant 0 : index
    %c0_102 = arith.constant 0 : index
    %257 = vector.load %arg6[%c0_101, %c0_102] : memref<16x64xf32, #tpu.memory_space<vmem>>, vector<16x64xf32>
    %258 = arith.truncf %257 : vector<16x64xf32> to vector<16x64xbf16>
    %c384_103 = arith.constant 384 : index
    %c64_104 = arith.constant 64 : index
    %259 = vector.load %arg3[%c384_103, %c64_104] : memref<640x128xbf16, #tpu.memory_space<vmem>>, vector<64x64xbf16>
    %cst_105 = arith.constant dense<0.000000e+00> : vector<16x64xf32>
    %260 = tpu.matmul %258, %259, %cst_105 {dimension_numbers = #tpu.dot_dimension_numbers<[1], [0], [0], [1], [0, 0, 1, 1], [], []>} : vector<16x64xbf16>, vector<64x64xbf16>, vector<16x64xf32> -> vector<16x64xf32>
    %c9_106 = arith.constant 9 : index
    %c64_107 = arith.constant 64 : index
    %261 = vector.load %arg4[%c9_106, %c64_107] : memref<14x128xf32, #tpu.memory_space<vmem>>, vector<1x64xf32>
    %262 = vector.broadcast %261 : vector<1x64xf32> to vector<16x64xf32>
    %263 = arith.addf %260, %262 : vector<16x64xf32>
    %264 = arith.addf %167, %263 : vector<16x64xf32>
    %c11 = arith.constant 11 : index
    %c64_108 = arith.constant 64 : index
    %265 = vector.load %arg4[%c11, %c64_108] : memref<14x128xf32, #tpu.memory_space<vmem>>, vector<1x64xf32>
    %c12 = arith.constant 12 : index
    %c0_109 = arith.constant 0 : index
    %266 = vector.load %arg4[%c12, %c0_109] : memref<14x128xf32, #tpu.memory_space<vmem>>, vector<1x64xf32>
    %cst_110 = arith.constant dense<0.000000e+00> : vector<16xf32>
    %267 = vector.multi_reduction <add>, %264, %cst_110 [1] : vector<16x64xf32> to vector<16xf32>
    %268 = vector.shape_cast %267 : vector<16xf32> to vector<16x1xf32>
    %cst_111 = arith.constant 6.400000e+01 : f32
    %269 = vector.broadcast %cst_111 : f32 to vector<16x1xf32>
    %270 = arith.divf %268, %269 : vector<16x1xf32>
    %271 = vector.broadcast %270 : vector<16x1xf32> to vector<16x64xf32>
    %272 = arith.subf %264, %271 : vector<16x64xf32>
    %273 = arith.mulf %272, %272 : vector<16x64xf32>
    %cst_112 = arith.constant dense<0.000000e+00> : vector<16xf32>
    %274 = vector.multi_reduction <add>, %273, %cst_112 [1] : vector<16x64xf32> to vector<16xf32>
    %275 = vector.shape_cast %274 : vector<16xf32> to vector<16x1xf32>
    %cst_113 = arith.constant 6.400000e+01 : f32
    %276 = vector.broadcast %cst_113 : f32 to vector<16x1xf32>
    %277 = arith.divf %275, %276 : vector<16x1xf32>
    %cst_114 = arith.constant 9.99999974E-6 : f32
    %278 = vector.broadcast %cst_114 : f32 to vector<16x1xf32>
    %279 = arith.addf %277, %278 : vector<16x1xf32>
    %280 = math.rsqrt %279 : vector<16x1xf32>
    %281 = vector.broadcast %280 : vector<16x1xf32> to vector<16x64xf32>
    %282 = arith.mulf %272, %281 : vector<16x64xf32>
    %283 = vector.broadcast %265 : vector<1x64xf32> to vector<16x64xf32>
    %284 = arith.mulf %282, %283 : vector<16x64xf32>
    %285 = vector.broadcast %266 : vector<1x64xf32> to vector<16x64xf32>
    %286 = arith.addf %284, %285 : vector<16x64xf32>
    %287 = arith.truncf %286 : vector<16x64xf32> to vector<16x64xbf16>
    %c448 = arith.constant 448 : index
    %c0_115 = arith.constant 0 : index
    %288 = vector.load %arg3[%c448, %c0_115] : memref<640x128xbf16, #tpu.memory_space<vmem>>, vector<64x128xbf16>
    %cst_116 = arith.constant dense<0.000000e+00> : vector<16x128xf32>
    %289 = tpu.matmul %287, %288, %cst_116 {dimension_numbers = #tpu.dot_dimension_numbers<[1], [0], [0], [1], [0, 0, 1, 1], [], []>} : vector<16x64xbf16>, vector<64x128xbf16>, vector<16x128xf32> -> vector<16x128xf32>
    %c10 = arith.constant 10 : index
    %c0_117 = arith.constant 0 : index
    %290 = vector.load %arg4[%c10, %c0_117] : memref<14x128xf32, #tpu.memory_space<vmem>>, vector<1x128xf32>
    %291 = vector.broadcast %290 : vector<1x128xf32> to vector<16x128xf32>
    %292 = arith.addf %289, %291 : vector<16x128xf32>
    %cst_118 = arith.constant 0.000000e+00 : f32
    %293 = vector.broadcast %cst_118 : f32 to vector<16x128xf32>
    %294 = arith.maximumf %292, %293 : vector<16x128xf32>
    %295 = arith.truncf %294 : vector<16x128xf32> to vector<16x128xbf16>
    %c512 = arith.constant 512 : index
    %c0_119 = arith.constant 0 : index
    %296 = vector.load %arg3[%c512, %c0_119] : memref<640x128xbf16, #tpu.memory_space<vmem>>, vector<128x64xbf16>
    %cst_120 = arith.constant dense<0.000000e+00> : vector<16x64xf32>
    %297 = tpu.matmul %295, %296, %cst_120 {dimension_numbers = #tpu.dot_dimension_numbers<[1], [0], [0], [1], [0, 0, 1, 1], [], []>} : vector<16x128xbf16>, vector<128x64xbf16>, vector<16x64xf32> -> vector<16x64xf32>
    %c11_121 = arith.constant 11 : index
    %c0_122 = arith.constant 0 : index
    %298 = vector.load %arg4[%c11_121, %c0_122] : memref<14x128xf32, #tpu.memory_space<vmem>>, vector<1x64xf32>
    %299 = vector.broadcast %298 : vector<1x64xf32> to vector<16x64xf32>
    %300 = arith.addf %297, %299 : vector<16x64xf32>
    %301 = arith.addf %286, %300 : vector<16x64xf32>
    %c12_123 = arith.constant 12 : index
    %c64_124 = arith.constant 64 : index
    %302 = vector.load %arg4[%c12_123, %c64_124] : memref<14x128xf32, #tpu.memory_space<vmem>>, vector<1x64xf32>
    %c13 = arith.constant 13 : index
    %c0_125 = arith.constant 0 : index
    %303 = vector.load %arg4[%c13, %c0_125] : memref<14x128xf32, #tpu.memory_space<vmem>>, vector<1x64xf32>
    %cst_126 = arith.constant dense<0.000000e+00> : vector<16xf32>
    %304 = vector.multi_reduction <add>, %301, %cst_126 [1] : vector<16x64xf32> to vector<16xf32>
    %305 = vector.shape_cast %304 : vector<16xf32> to vector<16x1xf32>
    %cst_127 = arith.constant 6.400000e+01 : f32
    %306 = vector.broadcast %cst_127 : f32 to vector<16x1xf32>
    %307 = arith.divf %305, %306 : vector<16x1xf32>
    %308 = vector.broadcast %307 : vector<16x1xf32> to vector<16x64xf32>
    %309 = arith.subf %301, %308 : vector<16x64xf32>
    %310 = arith.mulf %309, %309 : vector<16x64xf32>
    %cst_128 = arith.constant dense<0.000000e+00> : vector<16xf32>
    %311 = vector.multi_reduction <add>, %310, %cst_128 [1] : vector<16x64xf32> to vector<16xf32>
    %312 = vector.shape_cast %311 : vector<16xf32> to vector<16x1xf32>
    %cst_129 = arith.constant 6.400000e+01 : f32
    %313 = vector.broadcast %cst_129 : f32 to vector<16x1xf32>
    %314 = arith.divf %312, %313 : vector<16x1xf32>
    %cst_130 = arith.constant 9.99999974E-6 : f32
    %315 = vector.broadcast %cst_130 : f32 to vector<16x1xf32>
    %316 = arith.addf %314, %315 : vector<16x1xf32>
    %317 = math.rsqrt %316 : vector<16x1xf32>
    %318 = vector.broadcast %317 : vector<16x1xf32> to vector<16x64xf32>
    %319 = arith.mulf %309, %318 : vector<16x64xf32>
    %320 = vector.broadcast %302 : vector<1x64xf32> to vector<16x64xf32>
    %321 = arith.mulf %319, %320 : vector<16x64xf32>
    %322 = vector.broadcast %303 : vector<1x64xf32> to vector<16x64xf32>
    %323 = arith.addf %321, %322 : vector<16x64xf32>
    %324 = vector.extract_strided_slice %323 {offsets = [0, 0], sizes = [1, 64], strides = [1, 1]} : vector<16x64xf32> to vector<1x64xf32>
    %c1 = arith.constant 1 : index
    %c0_131 = arith.constant 0 : index
    %325 = vector.load %arg4[%c1, %c0_131] : memref<14x128xf32, #tpu.memory_space<vmem>>, vector<1x64xf32>
    %c1_132 = arith.constant 1 : index
    %c64_133 = arith.constant 64 : index
    %326 = vector.load %arg4[%c1_132, %c64_133] : memref<14x128xf32, #tpu.memory_space<vmem>>, vector<1x1xf32>
    %327 = arith.mulf %324, %325 : vector<1x64xf32>
    %cst_134 = arith.constant dense<0.000000e+00> : vector<1xf32>
    %328 = vector.multi_reduction <add>, %327, %cst_134 [1] : vector<1x64xf32> to vector<1xf32>
    %329 = vector.shape_cast %328 : vector<1xf32> to vector<1x1xf32>
    %330 = arith.addf %329, %326 : vector<1x1xf32>
    %331 = vector.shape_cast %330 : vector<1x1xf32> to vector<1x1xf32>
    %332 = vector.broadcast %331 : vector<1x1xf32> to vector<1x128xf32>
    %c0_135 = arith.constant 0 : index
    %c0_136 = arith.constant 0 : index
    %c0_137 = arith.constant 0 : index
    %333 = vector.load %arg5[%c0_135, %c0_136, %c0_137] : memref<1x1x128xf32, #tpu.memory_space<vmem>>, vector<1x1x128xf32>
    %334 = vector.shape_cast %333 : vector<1x1x128xf32> to vector<1x128xf32>
    %335 = vector.shape_cast %332 : vector<1x128xf32> to vector<1x1x128xf32>
    tpu.vector_store %arg5[%c0_135, %c0_136, %c0_137], %335 {strides = array<i32>} : memref<1x1x128xf32, #tpu.memory_space<vmem>>, vector<1x1x128xf32>,
    return
  }
  func.func @transform_0(%arg0: i32) -> (i32, i32, i32) {
    %c0_i32 = arith.constant 0 : i32
    %c0_i32_0 = arith.constant 0 : i32
    %c0_i32_1 = arith.constant 0 : i32
    return %arg0, %c0_i32, %c0_i32_0 : i32, i32, i32
  }
  func.func @transform_1(%arg0: i32) -> (i32, i32) {
    %c0_i32 = arith.constant 0 : i32
    %c0_i32_0 = arith.constant 0 : i32
    %c0_i32_1 = arith.constant 0 : i32
    return %c0_i32, %c0_i32_0 : i32, i32
  }
  func.func @transform_2(%arg0: i32) -> (i32, i32) {
    %c0_i32 = arith.constant 0 : i32
    %c0_i32_0 = arith.constant 0 : i32
    %c0_i32_1 = arith.constant 0 : i32
    return %c0_i32, %c0_i32_0 : i32, i32
  }
  func.func @transform_3(%arg0: i32) -> (i32, i32) {
    %c0_i32 = arith.constant 0 : i32
    %c0_i32_0 = arith.constant 0 : i32
    %c0_i32_1 = arith.constant 0 : i32
    return %c0_i32, %c0_i32_0 : i32, i32
  }
  func.func @transform_4(%arg0: i32) -> (i32, i32, i32) {
    %c0_i32 = arith.constant 0 : i32
    %c0_i32_0 = arith.constant 0 : i32
    %c0_i32_1 = arith.constant 0 : i32
    return %arg0, %c0_i32, %c0_i32_0 : i32, i32, i32
  }
}

</mosaic_0001>

<llo_original>
// kernel: tpu_custom_call.1
$region0: #{tpu_custom_call.1}
  #allocation0 [shape = 'u32[]', space=smem, size = 0x4, offset = 0x4, fixed_abs, tag = 'smem constant byte address 0x4 - core index']
  #allocation1 [shape = 'u32[144,128]{1,0:T(1,128)}', space=vmem, size = 0x12000, scoped, tag = 'internal scratch']
  #allocation2 [shape = 'f32[16,64]{1,0:T(8,128)}', space=vmem, size = 0x2000, scoped, tag = 'scratch operand']
  %s0 = inlined_call_operand.hbm [shape: f32[2,1,16], index: 0, kind: input, shape index: {}]
  %s1 = inlined_call_operand.hbm [shape: f32[16,64], index: 1, kind: input, shape index: {}]
  %s2 = inlined_call_operand.hbm [shape: bf16[640,128], index: 2, kind: input, shape index: {}]
  %s3 = inlined_call_operand.hbm [shape: f32[14,128], index: 3, kind: input, shape index: {}]
  %s4 = inlined_call_operand.hbm [shape: f32[2,1,128], index: 4, kind: output, shape index: {}]
  %s5 = sld [smem:[#allocation0]]
  $region65: #{tpu_custom_call.1} parent=0
    _
  %s7 = ssub.s32 1, %s5
  %s8 = scalar_select 0, %s7, %s5
  $region1: #{tpu_custom_call.1} parent=0
    #allocation3 [shape = 'u8[1024]{0}', space=vmem, size = 0x400, scoped, tag = 'input window, operand 0']
    #allocation4 [shape = 's32[2]{0}', space=sflag, size = 0x8, scoped, tag = 'scoped memory for tpu_custom_call.1']
    #allocation5 [shape = 's32[2]{0}', space=sflag, size = 0x8, scoped, tag = 'scoped memory for tpu_custom_call.1']
    #allocation6 [shape = 'u8[8192]{0}', space=vmem, size = 0x2000, scoped, tag = 'input window, operand 1, single buffered']
    #allocation7 [shape = 's32[1]{0}', space=sflag, size = 0x4, scoped, tag = 'scoped memory for tpu_custom_call.1']
    #allocation8 [shape = 'u8[163840]{0}', space=vmem, size = 0x28000, scoped, tag = 'input window, operand 2, single buffered']
    #allocation9 [shape = 'u8[8192]{0}', space=vmem, size = 0x2000, scoped, tag = 'input window, operand 3, single buffered']
    #allocation10 [shape = 's32[1]{0}', space=sflag, size = 0x4, scoped, tag = 'scoped memory for tpu_custom_call.1']
    #allocation11 [shape = 'u8[1024]{0}', space=vmem, size = 0x400, scoped, tag = 'output window, operand 0']
    %9 = vsyncpa [#allocation4], 0
    %s10 = scalar_lea.sflag [#allocation4], 1
    %11 = vsyncpa %s10, 0
    %12 = vsyncpa [#allocation7], 0
    %13 = vsyncpa [#allocation10], 0
    %14 = vsyncpa [#allocation5], 0
    %s15 = scalar_lea.sflag [#allocation5], 1
    %16 = vsyncpa %s15, 0
    loop: start=0, step=1, limit=4
    $region2: #{tpu_custom_call.1} parent=1 // loop_pre_header
      _
    $region3: #{tpu_custom_call.1} parent=1 // loop_header
      %s18 = sphi 0, %s22
      %p19 = scmp.ge.s32.totalorder %s18, 4
      %s28 = sphi 0, %s30
      %s31 = sphi 0, %s28
      %s32 = sphi 0, %s31
      %s48 = sphi 0, %s32
      %s52 = sphi 0, %s52
      %s54 = sphi 0, %s52
      %s55 = sphi 0, %s54
      %s69 = sphi 0, %s55
      %s73 = sphi 0, %s73
      %s75 = sphi 0, %s73
      %s76 = sphi 0, %s75
      %s90 = sphi 0, %s76
      %s94 = sphi 0, %s94
      %s96 = sphi 0, %s94
      %s97 = sphi 0, %s96
      %s111 = sphi 0, %s97
      %s117 = sphi 0, %s119
      %s120 = sphi 0, %s117
      %s121 = sphi 0, %s120
      %s137 = sphi 0, %s121
    $region4: #{tpu_custom_call.1} parent=1 // loop_header_branch
      %21 = sbr.rel (%p19) target = $region8
    $region5: #{tpu_custom_call.1} parent=1 // loop_body
      %s23 = ssub.s32 %s18, 1
      %s24 = ssub.s32 %s18, 2
      %s25 = sadd.s32 %s18, 1
      %s26 = ssub.s32 %s18, %s25
      %p27 = scmp.eq.s32.totalorder %s26, 0
      %s29 = sadd.s32 %s28, 1
      %s30 = scalar_select %p27, %s28, %s29
      %p33 = pneg %p27
      %p34 = scmp.eq.s32.totalorder %s18, 1
      %p35 = por %p33, %p34
      %p36 = scmp.ne.s32.totalorder %s28, %s31
      %p37 = scmp.eq.s32.totalorder %s18, 0
      %p38 = por %p36, %p37
      %p39 = scmp.ne.s32.totalorder %s28, %s31
      %p40 = scmp.eq.s32.totalorder %s23, 1
      %p41 = por %p39, %p40
      %p42 = scmp.ne.s32.totalorder %s31, %s32
      %p43 = scmp.eq.s32.totalorder %s23, 0
      %p44 = por %p42, %p43
      %p45 = scmp.ne.s32.totalorder %s31, %s32
      %p46 = scmp.eq.s32.totalorder %s24, 1
      %p47 = por %p45, %p46
      %p49 = scmp.ne.s32.totalorder %s32, %s48
      %p50 = scmp.eq.s32.totalorder %s24, 0
      %p51 = por %p49, %p50
      %s53 = sadd.s32 %s52, 1
      %p56 = scmp.eq.s32.totalorder %s18, 1
      %p57 = scmp.ne.s32.totalorder %s52, %s54
      %p58 = scmp.eq.s32.totalorder %s18, 0
      %p59 = por %p57, %p58
      %p60 = scmp.ne.s32.totalorder %s52, %s54
      %p61 = scmp.eq.s32.totalorder %s23, 1
      %p62 = por %p60, %p61
      %p63 = scmp.ne.s32.totalorder %s54, %s55
      %p64 = scmp.eq.s32.totalorder %s23, 0
      %p65 = por %p63, %p64
      %p66 = scmp.ne.s32.totalorder %s54, %s55
      %p67 = scmp.eq.s32.totalorder %s24, 1
      %p68 = por %p66, %p67
      %p70 = scmp.ne.s32.totalorder %s55, %s69
      %p71 = scmp.eq.s32.totalorder %s24, 0
      %p72 = por %p70, %p71
      %s74 = sadd.s32 %s73, 1
      %p77 = scmp.eq.s32.totalorder %s18, 1
      %p78 = scmp.ne.s32.totalorder %s73, %s75
      %p79 = scmp.eq.s32.totalorder %s18, 0
      %p80 = por %p78, %p79
      %p81 = scmp.ne.s32.totalorder %s73, %s75
      %p82 = scmp.eq.s32.totalorder %s23, 1
      %p83 = por %p81, %p82
      %p84 = scmp.ne.s32.totalorder %s75, %s76
      %p85 = scmp.eq.s32.totalorder %s23, 0
      %p86 = por %p84, %p85
      %p87 = scmp.ne.s32.totalorder %s75, %s76
      %p88 = scmp.eq.s32.totalorder %s24, 1
      %p89 = por %p87, %p88
      %p91 = scmp.ne.s32.totalorder %s76, %s90
      %p92 = scmp.eq.s32.totalorder %s24, 0
      %p93 = por %p91, %p92
      %s95 = sadd.s32 %s94, 1
      %p98 = scmp.eq.s32.totalorder %s18, 1
      %p99 = scmp.ne.s32.totalorder %s94, %s96
      %p100 = scmp.eq.s32.totalorder %s18, 0
      %p101 = por %p99, %p100
      %p102 = scmp.ne.s32.totalorder %s94, %s96
      %p103 = scmp.eq.s32.totalorder %s23, 1
      %p104 = por %p102, %p103
      %p105 = scmp.ne.s32.totalorder %s96, %s97
      %p106 = scmp.eq.s32.totalorder %s23, 0
      %p107 = por %p105, %p106
      %p108 = scmp.ne.s32.totalorder %s96, %s97
      %p109 = scmp.eq.s32.totalorder %s24, 1
      %p110 = por %p108, %p109
      %p112 = scmp.ne.s32.totalorder %s97, %s111
      %p113 = scmp.eq.s32.totalorder %s24, 0
      %p114 = por %p112, %p113
      %s115 = ssub.s32 %s18, %s25
      %p116 = scmp.eq.s32.totalorder %s115, 0
      %s118 = sadd.s32 %s117, 1
      %s119 = scalar_select %p116, %s117, %s118
      %p122 = pneg %p116
      %p123 = scmp.eq.s32.totalorder %s18, 1
      %p124 = por %p122, %p123
      %p125 = scmp.ne.s32.totalorder %s117, %s120
      %p126 = scmp.eq.s32.totalorder %s18, 0
      %p127 = por %p125, %p126
      %p128 = scmp.ne.s32.totalorder %s117, %s120
      %p129 = scmp.eq.s32.totalorder %s23, 1
      %p130 = por %p128, %p129
      %p131 = scmp.ne.s32.totalorder %s120, %s121
      %p132 = scmp.eq.s32.totalorder %s23, 0
      %p133 = por %p131, %p132
      %p134 = scmp.ne.s32.totalorder %s120, %s121
      %p135 = scmp.eq.s32.totalorder %s24, 1
      %p136 = por %p134, %p135
      %p138 = scmp.ne.s32.totalorder %s121, %s137
      %p139 = scmp.eq.s32.totalorder %s24, 0
      %p140 = por %p138, %p139
      %p141 = scmp.le.s32.totalorder 1, %s18
      %p142 = scmp.lt.s32.totalorder %s18, 3
      %p143 = pnand %p141, %p142
      %p144 = pneg %p143
      // Predicated region
      $region9: #{tpu_custom_call.1} parent=5 // pred_check
        _
      $region10: #{tpu_custom_call.1} parent=5 // pred_check_branch
        %146 = sbr.rel (%p143) target = $region12
      $region11: #{tpu_custom_call.1} parent=5 // pred_region
        %s147 = ssub.s32 %s18, 1
        // Predicated region
        $region13: #{tpu_custom_call.1} parent=11 // pred_check
          %p148 = pneg %p65
        $region14: #{tpu_custom_call.1} parent=11 // pred_check_branch
          %150 = sbr.rel (%p148) target = $region16
        $region15: #{tpu_custom_call.1} parent=11 // pred_region
          %s152 = ssub.s32 256, 256
          %153 = vsyncadd [#allocation7], %s152
          %s154 = sshll.u32 [#allocation6], 4
          %s155 = int_to_ptr.vmem [resolvable:$true] %s154
          %160 = dma.hbm_to_vmem [thread:$0]  %s1, 256, %s155, [#allocation7], 128, 128, 8
        $region16: #{tpu_custom_call.1} parent=11 // pred_fallthru
          _
        // Predicated region
        $region17: #{tpu_custom_call.1} parent=11 // pred_check
          %p161 = pneg %p86
        $region18: #{tpu_custom_call.1} parent=11 // pred_check_branch
          %163 = sbr.rel (%p161) target = $region20
        $region19: #{tpu_custom_call.1} parent=11 // pred_region
          %s165 = ssub.s32 5120, 5120
          %166 = vsyncadd [#allocation7], %s165
          %s167 = sshll.u32 [#allocation8], 4
          %s168 = int_to_ptr.vmem [resolvable:$true] %s167
          %173 = dma.hbm_to_vmem [thread:$0]  %s2, 5120, %s168, [#allocation7], 64, 64, 4
        $region20: #{tpu_custom_call.1} parent=11 // pred_fallthru
          _
        // Predicated region
        $region21: #{tpu_custom_call.1} parent=11 // pred_check
          %p174 = pneg %p107
        $region22: #{tpu_custom_call.1} parent=11 // pred_check_branch
          %176 = sbr.rel (%p174) target = $region24
        $region23: #{tpu_custom_call.1} parent=11 // pred_region
          %s178 = ssub.s32 256, 256
          %179 = vsyncadd [#allocation10], %s178
          %s180 = sshll.u32 [#allocation9], 4
          %s181 = int_to_ptr.vmem [resolvable:$true] %s180
          %186 = dma.hbm_to_vmem [thread:$0]  %s3, 256, %s181, [#allocation10], 128, 128, 8
        $region24: #{tpu_custom_call.1} parent=11 // pred_fallthru
          _
      $region12: #{tpu_custom_call.1} parent=5 // pred_fallthru
        _
      %p187 = scmp.lt.s32.totalorder %s18, 2
      // Predicated region
      $region25: #{tpu_custom_call.1} parent=5 // pred_check
        %p188 = pneg %p187
      $region26: #{tpu_custom_call.1} parent=5 // pred_check_branch
        %190 = sbr.rel (%p188) target = $region28
      $region27: #{tpu_custom_call.1} parent=5 // pred_region
        // Predicated region
        $region29: #{tpu_custom_call.1} parent=27 // pred_check
          %p191 = pneg %p38
        $region30: #{tpu_custom_call.1} parent=27 // pred_check_branch
          %193 = sbr.rel (%p191) target = $region32
        $region31: #{tpu_custom_call.1} parent=27 // pred_region
          %s194 = sand.u32 %s28, 1
          %s195 = scalar_lea.sflag [#allocation4], %s194
          %s196 = sand.u32 %s28, 1
          %s197 = scalar_lea.vmem [#allocation3], %s196
          %s199 = ssub.s32 16, 16
          %200 = vsyncadd %s195, %s199
          %s201 = smul.addr %s18, 16
          %s202 = scalar_lea.hbm %s0, %s201
          %s204 = sshll.u32 %s197, 4
          %s205 = int_to_ptr.vmem [resolvable:$true] %s204
          %207 = dma.hbm_to_vmem [thread:$0]  %s202, 16, %s205, %s195
        $region32: #{tpu_custom_call.1} parent=27 // pred_fallthru
          _
      $region28: #{tpu_custom_call.1} parent=5 // pred_fallthru
        _
      %p208 = scmp.le.s32.totalorder 1, %s18
      %p209 = scmp.lt.s32.totalorder %s18, 3
      %p210 = pnand %p208, %p209
      %p211 = pneg %p210
      // Predicated region
      $region33: #{tpu_custom_call.1} parent=5 // pred_check
        _
      $region34: #{tpu_custom_call.1} parent=5 // pred_check_branch
        %213 = sbr.rel (%p210) target = $region36
      $region35: #{tpu_custom_call.1} parent=5 // pred_region
        %s214 = ssub.s32 %s18, 1
        %s215 = sand.u32 %s31, 1
        %s216 = scalar_lea.sflag [#allocation4], %s215
        %s217 = sand.u32 %s31, 1
        %s218 = scalar_lea.vmem [#allocation3], %s217
        // Predicated region
        $region37: #{tpu_custom_call.1} parent=35 // pred_check
          %p219 = pneg %p44
        $region38: #{tpu_custom_call.1} parent=35 // pred_check_branch
          %221 = sbr.rel (%p219) target = $region40
        $region39: #{tpu_custom_call.1} parent=35 // pred_region
          %222 = dma.done %s216, 16
        $region40: #{tpu_custom_call.1} parent=35 // pred_fallthru
          _
        // Predicated region
        $region41: #{tpu_custom_call.1} parent=35 // pred_check
          %p223 = pneg %p65
        $region42: #{tpu_custom_call.1} parent=35 // pred_check_branch
          %225 = sbr.rel (%p223) target = $region44
        $region43: #{tpu_custom_call.1} parent=35 // pred_region
          %226 = dma.done [#allocation7], 256
        $region44: #{tpu_custom_call.1} parent=35 // pred_fallthru
          _
        // Predicated region
        $region45: #{tpu_custom_call.1} parent=35 // pred_check
          %p227 = pneg %p86
        $region46: #{tpu_custom_call.1} parent=35 // pred_check_branch
          %229 = sbr.rel (%p227) target = $region48
        $region47: #{tpu_custom_call.1} parent=35 // pred_region
          %230 = dma.done [#allocation7], 5120
        $region48: #{tpu_custom_call.1} parent=35 // pred_fallthru
          _
        // Predicated region
        $region49: #{tpu_custom_call.1} parent=35 // pred_check
          %p231 = pneg %p107
        $region50: #{tpu_custom_call.1} parent=35 // pred_check_branch
          %233 = sbr.rel (%p231) target = $region52
        $region51: #{tpu_custom_call.1} parent=35 // pred_region
          %234 = dma.done [#allocation10], 256
        $region52: #{tpu_custom_call.1} parent=35 // pred_fallthru
          _
        %s235 = sand.u32 %s31, 1
        %s236 = scalar_lea.sflag [#allocation4], %s235
        %s237 = sand.u32 %s31, 1
        %s238 = scalar_lea.vmem [#allocation3], %s237
        %p239 = pneg %p44
        %p240 = pneg %p41
        %p241 = pneg %p65
        %p242 = pneg %p62
        %p243 = pneg %p86
        %p244 = pneg %p83
        %p245 = pneg %p107
        %p246 = pneg %p104
        %p247 = pneg %p133
        %p248 = pneg %p130
        %s249 = sand.u32 %s120, 1
        %s250 = scalar_lea.sflag [#allocation5], %s249
        %s251 = sand.u32 %s120, 1
        %s252 = scalar_lea.vmem [#allocation11], %s251
        %v254 = vld [vmem:[#allocation6] sm:$0xff]
        %v255 = vld [vmem:[#allocation6 + $0x8] sm:$0xff]
        %v256 = vld [vmem:[#allocation9] sm:$0x1]
        %v257 = vld [vmem:[%s218] sm:$0x1]
        %258 = vxpose.xlu0.b32.start [1/16] %v257, 128
        %259 = vxpose.xlu0.b32.cont [2/16] 0.0, 128
        %260 = vxpose.xlu0.b32.cont [3/16] 0.0, 128
        %261 = vxpose.xlu0.b32.cont [4/16] 0.0, 128
        %262 = vxpose.xlu0.b32.cont [5/16] 0.0, 128
        %263 = vxpose.xlu0.b32.cont [6/16] 0.0, 128
        %264 = vxpose.xlu0.b32.cont [7/16] 0.0, 128
        %265 = vxpose.xlu0.b32.cont [8/16] 0.0, 128
        %266 = vxpose.xlu0.b32.cont [9/16] 0.0, 128
        %267 = vxpose.xlu0.b32.cont [10/16] 0.0, 128
        %268 = vxpose.xlu0.b32.cont [11/16] 0.0, 128
        %269 = vxpose.xlu0.b32.cont [12/16] 0.0, 128
        %270 = vxpose.xlu0.b32.cont [13/16] 0.0, 128
        %271 = vxpose.xlu0.b32.cont [14/16] 0.0, 128
        %272 = vxpose.xlu0.b32.cont [15/16] 0.0, 128
        %273 = vxpose.xlu0.b32.end [16/16] 0.0, 128
        %v274 = vpop.trf.xlu0
        %v275 = vpop.trf.xlu0
        %v276 = vpop.trf.xlu0
        %v277 = vpop.trf.xlu0
        %v278 = vpop.trf.xlu0
        %v279 = vpop.trf.xlu0
        %v280 = vpop.trf.xlu0
        %v281 = vpop.trf.xlu0
        %v282 = vpop.trf.xlu0
        %v283 = vpop.trf.xlu0
        %v284 = vpop.trf.xlu0
        %v285 = vpop.trf.xlu0
        %v286 = vpop.trf.xlu0
        %v287 = vpop.trf.xlu0
        %v288 = vpop.trf.xlu0
        %v289 = vpop.trf.xlu0
        %291 = vset.pattern.permute.xlu0 0
        %292 = vperm.xlu0 %291, %v274
        %v293 = vpop.permute.xlu0 %292
        %296 = vset.pattern.permute.xlu0 0
        %297 = vperm.xlu0 %296, %v275
        %v298 = vpop.permute.xlu0 %297
        %v300 = vlaneseq
        %v301 = vshrl.u32 %v300, 7
        %v302 = vsub.s32 0, %v301
        %v303 = vrot.slane %v256, %v302
        %v304 = vmul.f32 %v293, %v303
        %v305 = vmul.f32 %v298, %v303
        %307 = vrot.lane.b32.xlu0 %v303, 64
        %v308 = vpop.permute.xlu0 %307
        %v310 = vadd.f32 %v254, %v308
        %v311 = vadd.f32 %v255, %v308
        %v312 = vadd.f32 %v304, %v310
        %v313 = vadd.f32 %v305, %v311
        %v314 = vpack.c.bf16 %v313, %v312
        %v315 = vld [vmem:[#allocation8] sm:$0xf]
        %v316 = vld [vmem:[#allocation8 + $0x4] sm:$0xf]
        %v317 = vld [vmem:[#allocation8 + $0x8] sm:$0xf]
        %v318 = vld [vmem:[#allocation8 + $0xc] sm:$0xf]
        %v319 = vld [vmem:[#allocation8 + $0x10] sm:$0xf]
        %v320 = vld [vmem:[#allocation8 + $0x14] sm:$0xf]
        %v321 = vld [vmem:[#allocation8 + $0x18] sm:$0xf]
        %v322 = vld [vmem:[#allocation8 + $0x1c] sm:$0xf]
        %v331 = vunpack.c.l.b16 %v315
        %v332 = vunpack.c.l.b16 %v316
        %v333 = vunpack.c.l.b16 %v317
        %v334 = vunpack.c.l.b16 %v318
        %v335 = vunpack.c.l.b16 %v319
        %v336 = vunpack.c.l.b16 %v320
        %v337 = vunpack.c.l.b16 %v321
        %v338 = vunpack.c.l.b16 %v322
        %v339 = vpack.c.b16 %v332, %v331
        %v340 = vpack.c.b16 %v334, %v333
        %v341 = vpack.c.b16 %v336, %v335
        %v342 = vpack.c.b16 %v338, %v337
        %vm347 = vcmask 523264
        %v349 = vsel %vm347, %v314, 0
        %351 = vmatprep.subr.bf16.mxu0 0
        %352 = vmatpush1.bf16.msra.mxu0 %v339
        %353 = vmatprep.subr.bf16.mxu0 0
        %354 = vmatpush1.bf16.msra.mxu0 %v340
        %355 = vmatprep.subr.bf16.mxu0 0
        %356 = vmatpush1.bf16.msra.mxu0 %v341
        %357 = vmatprep.subr.bf16.mxu0 0
        %358 = vmatpush1.bf16.msra.mxu0 %v342
        %359 = vmatprep.subr.bf16.mxu0 0
        %360 = vmatpush1.bf16.msra.mxu0 0
        %361 = vmatprep.subr.bf16.mxu0 0
        %362 = vmatpush1.bf16.msra.mxu0 0
        %363 = vmatprep.subr.bf16.mxu0 0
        %364 = vmatpush1.bf16.msra.mxu0 0
        %365 = vmatprep.subr.bf16.mxu0 0
        %366 = vmatpush1.bf16.msra.mxu0 0
        %367 = vmatprep.subr.bf16.mxu0 0
        %368 = vmatpush1.bf16.msra.mxu0 0
        %369 = vmatprep.subr.bf16.mxu0 0
        %370 = vmatpush1.bf16.msra.mxu0 0
        %371 = vmatprep.subr.bf16.mxu0 0
        %372 = vmatpush1.bf16.msra.mxu0 0
        %373 = vmatprep.subr.bf16.mxu0 0
        %374 = vmatpush1.bf16.msra.mxu0 0
        %375 = vmatprep.subr.bf16.mxu0 0
        %376 = vmatpush1.bf16.msra.mxu0 0
        %377 = vmatprep.subr.bf16.mxu0 0
        %378 = vmatpush1.bf16.msra.mxu0 0
        %379 = vmatprep.subr.bf16.mxu0 0
        %380 = vmatpush1.bf16.msra.mxu0 0
        %381 = vmatprep.subr.bf16.mxu0 0
        %382 = vmatpush1.bf16.msra.mxu0 0
        %383 = vmatprep.mubr.bf16.mxu0 0
        %384 = vmatmul.mubr.bf16.gmra.mrb[0].mxu0 %v349
        %v385 = vpop.f32.mrb[0].mxu0
        %v386 = vadd.f32 0.0, %v385
        %v387 = vpop.f32.mrb[0].mxu0
        %v388 = vpop.f32.mrb[0].mxu0
        %v389 = vadd.f32 0.0, %v388
        %v390 = vpop.f32.mrb[0].mxu0
        %391 = vdwg.mxu0
        %v392 = vld [vmem:[#allocation9 + $0x2] sm:$0x1]
        %v393 = vlaneseq
        %v394 = vshrl.u32 %v393, 7
        %v395 = vsub.s32 0, %v394
        %v396 = vrot.slane %v392, %v395
        %v397 = vadd.f32 %v386, %v396
        %v398 = vadd.f32 %v389, %v396
        %v399 = vmul.f32 %v397, 0.25
        %v400 = vmul.f32 %v398, 0.25
        %v401 = vpack.c.bf16 %v400, %v399
        %v402 = vpack.c.bf16 %v398, %v397
        %v403 = vld [vmem:[#allocation8 + $0x20] sm:$0xf]
        %v404 = vld [vmem:[#allocation8 + $0x24] sm:$0xf]
        %v405 = vld [vmem:[#allocation8 + $0x28] sm:$0xf]
        %v406 = vld [vmem:[#allocation8 + $0x2c] sm:$0xf]
        %v407 = vld [vmem:[#allocation8 + $0x30] sm:$0xf]
        %v408 = vld [vmem:[#allocation8 + $0x34] sm:$0xf]
        %v409 = vld [vmem:[#allocation8 + $0x38] sm:$0xf]
        %v410 = vld [vmem:[#allocation8 + $0x3c] sm:$0xf]
        %v411 = vld [vmem:[#allocation9 + $0x3] sm:$0x1]
        %v412 = vlaneseq
        %v413 = vshrl.u32 %v412, 7
        %v414 = vsub.s32 0, %v413
        %v415 = vrot.slane %v411, %v414
        %v424 = vunpack.c.l.b16 %v403
        %v425 = vunpack.c.l.b16 %v404
        %v426 = vunpack.c.l.b16 %v405
        %v427 = vunpack.c.l.b16 %v406
        %v428 = vunpack.c.l.b16 %v407
        %v429 = vunpack.c.l.b16 %v408
        %v430 = vunpack.c.l.b16 %v409
        %v431 = vunpack.c.l.b16 %v410
        %v432 = vpack.c.b16 %v425, %v424
        %v433 = vpack.c.b16 %v427, %v426
        %v434 = vpack.c.b16 %v429, %v428
        %v435 = vpack.c.b16 %v431, %v430
        %440 = vmatprep.subr.bf16.mxu0 0
        %441 = vmatpush1.bf16.msra.mxu0 %v432
        %442 = vmatprep.subr.bf16.mxu0 0
        %443 = vmatpush1.bf16.msra.mxu0 %v433
        %444 = vmatprep.subr.bf16.mxu0 0
        %445 = vmatpush1.bf16.msra.mxu0 %v434
        %446 = vmatprep.subr.bf16.mxu0 0
        %447 = vmatpush1.bf16.msra.mxu0 %v435
        %448 = vmatprep.subr.bf16.mxu0 0
        %449 = vmatpush1.bf16.msra.mxu0 0
        %450 = vmatprep.subr.bf16.mxu0 0
        %451 = vmatpush1.bf16.msra.mxu0 0
        %452 = vmatprep.subr.bf16.mxu0 0
        %453 = vmatpush1.bf16.msra.mxu0 0
        %454 = vmatprep.subr.bf16.mxu0 0
        %455 = vmatpush1.bf16.msra.mxu0 0
        %456 = vmatprep.subr.bf16.mxu0 0
        %457 = vmatpush1.bf16.msra.mxu0 0
        %458 = vmatprep.subr.bf16.mxu0 0
        %459 = vmatpush1.bf16.msra.mxu0 0
        %460 = vmatprep.subr.bf16.mxu0 0
        %461 = vmatpush1.bf16.msra.mxu0 0
        %462 = vmatprep.subr.bf16.mxu0 0
        %463 = vmatpush1.bf16.msra.mxu0 0
        %464 = vmatprep.subr.bf16.mxu0 0
        %465 = vmatpush1.bf16.msra.mxu0 0
        %466 = vmatprep.subr.bf16.mxu0 0
        %467 = vmatpush1.bf16.msra.mxu0 0
        %468 = vmatprep.subr.bf16.mxu0 0
        %469 = vmatpush1.bf16.msra.mxu0 0
        %470 = vmatprep.subr.bf16.mxu0 0
        %471 = vmatpush1.bf16.msra.mxu0 0
        %472 = vmatprep.mubr.bf16.mxu0 0
        %473 = vmatmul.mubr.bf16.gmra.mrb[0].mxu0 %v349
        %v474 = vpop.f32.mrb[0].mxu0
        %v475 = vadd.f32 %v415, %v474
        %v476 = vpop.f32.mrb[0].mxu0
        %v477 = vpop.f32.mrb[0].mxu0
        %v478 = vadd.f32 %v415, %v477
        %v479 = vpop.f32.mrb[0].mxu0
        %480 = vdwg.mxu0
        %v481 = vpack.c.bf16 %v478, %v475
        %483 = vrot.lane.b32.xlu0 %v402, 64
        %v484 = vpop.permute.xlu0 %483
        %vm485 = vcmask 130048
        %v487 = vsel %vm485, %v401, 0
        %v490 = vsel %vm485, %v484, 0
        %492 = vmatprep.subr.bf16.mxu0 0
        %493 = vmatpush1.bf16.xpose.msra.mxu0 %v490
        %494 = vmatprep.subr.bf16.mxu0 0
        %495 = vmatpush1.bf16.xpose.msra.mxu0 0
        %496 = vmatprep.subr.bf16.mxu0 0
        %497 = vmatpush1.bf16.xpose.msra.mxu0 0
        %498 = vmatprep.subr.bf16.mxu0 0
        %499 = vmatpush1.bf16.xpose.msra.mxu0 0
        %500 = vmatprep.subr.bf16.mxu0 0
        %501 = vmatpush1.bf16.xpose.msra.mxu0 0
        %502 = vmatprep.subr.bf16.mxu0 0
        %503 = vmatpush1.bf16.xpose.msra.mxu0 0
        %504 = vmatprep.subr.bf16.mxu0 0
        %505 = vmatpush1.bf16.xpose.msra.mxu0 0
        %506 = vmatprep.subr.bf16.mxu0 0
        %507 = vmatpush1.bf16.xpose.msra.mxu0 0
        %508 = vmatprep.subr.bf16.mxu0 0
        %509 = vmatpush1.bf16.xpose.msra.mxu0 0
        %510 = vmatprep.subr.bf16.mxu0 0
        %511 = vmatpush1.bf16.xpose.msra.mxu0 0
        %512 = vmatprep.subr.bf16.mxu0 0
        %513 = vmatpush1.bf16.xpose.msra.mxu0 0
        %514 = vmatprep.subr.bf16.mxu0 0
        %515 = vmatpush1.bf16.xpose.msra.mxu0 0
        %516 = vmatprep.subr.bf16.mxu0 0
        %517 = vmatpush1.bf16.xpose.msra.mxu0 0
        %518 = vmatprep.subr.bf16.mxu0 0
        %519 = vmatpush1.bf16.xpose.msra.mxu0 0
        %520 = vmatprep.subr.bf16.mxu0 0
        %521 = vmatpush1.bf16.xpose.msra.mxu0 0
        %522 = vmatprep.subr.bf16.mxu0 0
        %523 = vmatpush1.bf16.xpose.msra.mxu0 0
        %524 = vmatprep.mubr.bf16.mxu0 0
        %525 = vmatmul.mubr.bf16.gmra.mrb[0].mxu0 %v487
        %v526 = vpop.f32.mrb[0].mxu0
        %v527 = vadd.f32 0.0, %v526
        %v528 = vpop.f32.mrb[0].mxu0
        %v529 = vpop.f32.mrb[0].mxu0
        %v530 = vadd.f32 0.0, %v529
        %v531 = vpop.f32.mrb[0].mxu0
        %532 = vdwg.mxu0
        %v533 = vsel %vm485, %v527, -inf
        %534 = vmax.xlane.f32.xlu0 %v533
        %v535 = vpop.xlane.xlu0 %534
        %v536 = vsel %vm485, %v530, -inf
        %537 = vmax.xlane.f32.xlu0 %v536
        %v538 = vpop.xlane.xlu0 %537
        %v539 = vsub.f32 %v527, %v535
        %v540 = vsub.f32 %v530, %v538
        %v541 = vmul.f32 %v539, 1.442695
        %v542 = vpow.pop %v541
        %v543 = vmul.f32 %v540, 1.442695
        %v544 = vpow.pop %v543
        %v545 = vsel %vm485, %v542, 0.0
        %546 = vadd.xlane.f32.xlu0 %v545
        %v547 = vpop.xlane.xlu0 %546
        %v548 = vsel %vm485, %v544, 0.0
        %549 = vadd.xlane.f32.xlu0 %v548
        %v550 = vpop.xlane.xlu0 %549
        %v551 = vrcp.pop %v547
        %v552 = vrcp.pop %v550
        %v553 = vmul.f32 %v542, %v551
        %v554 = vmul.f32 %v544, %v552
        %v555 = vpack.c.bf16 %v554, %v553
        %v557 = vsel %vm485, %v555, 0
        %559 = vmatprep.subr.bf16.mxu0 0
        %560 = vmatpush1.bf16.msra.mxu0 %v481
        %561 = vmatprep.subr.bf16.mxu0 0
        %562 = vmatpush1.bf16.msra.mxu0 0
        %563 = vmatprep.subr.bf16.mxu0 0
        %564 = vmatpush1.bf16.msra.mxu0 0
        %565 = vmatprep.subr.bf16.mxu0 0
        %566 = vmatpush1.bf16.msra.mxu0 0
        %567 = vmatprep.subr.bf16.mxu0 0
        %568 = vmatpush1.bf16.msra.mxu0 0
        %569 = vmatprep.subr.bf16.mxu0 0
        %570 = vmatpush1.bf16.msra.mxu0 0
        %571 = vmatprep.subr.bf16.mxu0 0
        %572 = vmatpush1.bf16.msra.mxu0 0
        %573 = vmatprep.subr.bf16.mxu0 0
        %574 = vmatpush1.bf16.msra.mxu0 0
        %575 = vmatprep.subr.bf16.mxu0 0
        %576 = vmatpush1.bf16.msra.mxu0 0
        %577 = vmatprep.subr.bf16.mxu0 0
        %578 = vmatpush1.bf16.msra.mxu0 0
        %579 = vmatprep.subr.bf16.mxu0 0
        %580 = vmatpush1.bf16.msra.mxu0 0
        %581 = vmatprep.subr.bf16.mxu0 0
        %582 = vmatpush1.bf16.msra.mxu0 0
        %583 = vmatprep.subr.bf16.mxu0 0
        %584 = vmatpush1.bf16.msra.mxu0 0
        %585 = vmatprep.subr.bf16.mxu0 0
        %586 = vmatpush1.bf16.msra.mxu0 0
        %587 = vmatprep.subr.bf16.mxu0 0
        %588 = vmatpush1.bf16.msra.mxu0 0
        %589 = vmatprep.subr.bf16.mxu0 0
        %590 = vmatpush1.bf16.msra.mxu0 0
        %591 = vmatprep.mubr.bf16.mxu0 0
        %592 = vmatmul.mubr.bf16.gmra.mrb[0].mxu0 %v557
        %v593 = vpop.f32.mrb[0].mxu0
        %v594 = vadd.f32 0.0, %v593
        %v595 = vpop.f32.mrb[0].mxu0
        %v596 = vpop.f32.mrb[0].mxu0
        %v597 = vadd.f32 0.0, %v596
        %v598 = vpop.f32.mrb[0].mxu0
        %599 = vdwg.mxu0
        %600 = vst.msk [vmem:[#allocation2] sm:$0xff] %vm485, %v594
        %601 = vst.msk [vmem:[#allocation2 + $0x8] sm:$0xff] %vm485, %v597
        %603 = vrot.lane.b32.xlu0 %v401, 112
        %v604 = vpop.permute.xlu0 %603
        %605 = vrot.lane.b32.xlu0 %v402, 48
        %v606 = vpop.permute.xlu0 %605
        %v608 = vsel %vm485, %v604, 0
        %v611 = vsel %vm485, %v606, 0
        %613 = vmatprep.subr.bf16.mxu0 0
        %614 = vmatpush1.bf16.xpose.msra.mxu0 %v611
        %615 = vmatprep.subr.bf16.mxu0 0
        %616 = vmatpush1.bf16.xpose.msra.mxu0 0
        %617 = vmatprep.subr.bf16.mxu0 0
        %618 = vmatpush1.bf16.xpose.msra.mxu0 0
        %619 = vmatprep.subr.bf16.mxu0 0
        %620 = vmatpush1.bf16.xpose.msra.mxu0 0
        %621 = vmatprep.subr.bf16.mxu0 0
        %622 = vmatpush1.bf16.xpose.msra.mxu0 0
        %623 = vmatprep.subr.bf16.mxu0 0
        %624 = vmatpush1.bf16.xpose.msra.mxu0 0
        %625 = vmatprep.subr.bf16.mxu0 0
        %626 = vmatpush1.bf16.xpose.msra.mxu0 0
        %627 = vmatprep.subr.bf16.mxu0 0
        %628 = vmatpush1.bf16.xpose.msra.mxu0 0
        %629 = vmatprep.subr.bf16.mxu0 0
        %630 = vmatpush1.bf16.xpose.msra.mxu0 0
        %631 = vmatprep.subr.bf16.mxu0 0
        %632 = vmatpush1.bf16.xpose.msra.mxu0 0
        %633 = vmatprep.subr.bf16.mxu0 0
        %634 = vmatpush1.bf16.xpose.msra.mxu0 0
        %635 = vmatprep.subr.bf16.mxu0 0
        %636 = vmatpush1.bf16.xpose.msra.mxu0 0
        %637 = vmatprep.subr.bf16.mxu0 0
        %638 = vmatpush1.bf16.xpose.msra.mxu0 0
        %639 = vmatprep.subr.bf16.mxu0 0
        %640 = vmatpush1.bf16.xpose.msra.mxu0 0
        %641 = vmatprep.subr.bf16.mxu0 0
        %642 = vmatpush1.bf16.xpose.msra.mxu0 0
        %643 = vmatprep.subr.bf16.mxu0 0
        %644 = vmatpush1.bf16.xpose.msra.mxu0 0
        %645 = vmatprep.mubr.bf16.mxu0 0
        %646 = vmatmul.mubr.bf16.gmra.mrb[0].mxu0 %v608
        %v647 = vpop.f32.mrb[0].mxu0
        %v648 = vadd.f32 0.0, %v647
        %v649 = vpop.f32.mrb[0].mxu0
        %v650 = vpop.f32.mrb[0].mxu0
        %v651 = vadd.f32 0.0, %v650
        %v652 = vpop.f32.mrb[0].mxu0
        %653 = vdwg.mxu0
        %v654 = vsel %vm485, %v648, -inf
        %655 = vmax.xlane.f32.xlu0 %v654
        %v656 = vpop.xlane.xlu0 %655
        %v657 = vsel %vm485, %v651, -inf
        %658 = vmax.xlane.f32.xlu0 %v657
        %v659 = vpop.xlane.xlu0 %658
        %v660 = vsub.f32 %v648, %v656
        %v661 = vsub.f32 %v651, %v659
        %v662 = vmul.f32 %v660, 1.442695
        %v663 = vpow.pop %v662
        %v664 = vmul.f32 %v661, 1.442695
        %v665 = vpow.pop %v664
        %v666 = vsel %vm485, %v663, 0.0
        %667 = vadd.xlane.f32.xlu0 %v666
        %v668 = vpop.xlane.xlu0 %667
        %v669 = vsel %vm485, %v665, 0.0
        %670 = vadd.xlane.f32.xlu0 %v669
        %v671 = vpop.xlane.xlu0 %670
        %v672 = vrcp.pop %v668
        %v673 = vrcp.pop %v671
        %v674 = vmul.f32 %v663, %v672
        %v675 = vmul.f32 %v665, %v673
        %v676 = vpack.c.bf16 %v675, %v674
        %678 = vrot.lane.b32.xlu0 %v481, 112
        %v679 = vpop.permute.xlu0 %678
        %v682 = vsel %vm485, %v676, 0
        %684 = vmatprep.subr.bf16.mxu0 0
        %685 = vmatpush1.bf16.msra.mxu0 %v679
        %686 = vmatprep.subr.bf16.mxu0 0
        %687 = vmatpush1.bf16.msra.mxu0 0
        %688 = vmatprep.subr.bf16.mxu0 0
        %689 = vmatpush1.bf16.msra.mxu0 0
        %690 = vmatprep.subr.bf16.mxu0 0
        %691 = vmatpush1.bf16.msra.mxu0 0
        %692 = vmatprep.subr.bf16.mxu0 0
        %693 = vmatpush1.bf16.msra.mxu0 0
        %694 = vmatprep.subr.bf16.mxu0 0
        %695 = vmatpush1.bf16.msra.mxu0 0
        %696 = vmatprep.subr.bf16.mxu0 0
        %697 = vmatpush1.bf16.msra.mxu0 0
        %698 = vmatprep.subr.bf16.mxu0 0
        %699 = vmatpush1.bf16.msra.mxu0 0
        %700 = vmatprep.subr.bf16.mxu0 0
        %701 = vmatpush1.bf16.msra.mxu0 0
        %702 = vmatprep.subr.bf16.mxu0 0
        %703 = vmatpush1.bf16.msra.mxu0 0
        %704 = vmatprep.subr.bf16.mxu0 0
        %705 = vmatpush1.bf16.msra.mxu0 0
        %706 = vmatprep.subr.bf16.mxu0 0
        %707 = vmatpush1.bf16.msra.mxu0 0
        %708 = vmatprep.subr.bf16.mxu0 0
        %709 = vmatpush1.bf16.msra.mxu0 0
        %710 = vmatprep.subr.bf16.mxu0 0
        %711 = vmatpush1.bf16.msra.mxu0 0
        %712 = vmatprep.subr.bf16.mxu0 0
        %713 = vmatpush1.bf16.msra.mxu0 0
        %714 = vmatprep.subr.bf16.mxu0 0
        %715 = vmatpush1.bf16.msra.mxu0 0
        %716 = vmatprep.mubr.bf16.mxu0 0
        %717 = vmatmul.mubr.bf16.gmra.mrb[0].mxu0 %v682
        %v718 = vpop.f32.mrb[0].mxu0
        %v719 = vadd.f32 0.0, %v718
        %v720 = vpop.f32.mrb[0].mxu0
        %v721 = vpop.f32.mrb[0].mxu0
        %v722 = vadd.f32 0.0, %v721
        %v723 = vpop.f32.mrb[0].mxu0
        %724 = vdwg.mxu0
        %727 = vrot.lane.b32.xlu0 %v719, 16
        %v728 = vpop.permute.xlu0 %727
        %729 = vrot.lane.b32.xlu0 %v722, 16
        %v730 = vpop.permute.xlu0 %729
        %vm733 = vcmask 261248
        %734 = vst.msk [vmem:[#allocation2] sm:$0xff] %vm733, %v728
        %735 = vst.msk [vmem:[#allocation2 + $0x8] sm:$0xff] %vm733, %v730
        %736 = vrot.lane.b32.xlu0 %v401, 96
        %v737 = vpop.permute.xlu0 %736
        %738 = vrot.lane.b32.xlu0 %v402, 32
        %v739 = vpop.permute.xlu0 %738
        %v741 = vsel %vm485, %v737, 0
        %v744 = vsel %vm485, %v739, 0
        %746 = vmatprep.subr.bf16.mxu0 0
        %747 = vmatpush1.bf16.xpose.msra.mxu0 %v744
        %748 = vmatprep.subr.bf16.mxu0 0
        %749 = vmatpush1.bf16.xpose.msra.mxu0 0
        %750 = vmatprep.subr.bf16.mxu0 0
        %751 = vmatpush1.bf16.xpose.msra.mxu0 0
        %752 = vmatprep.subr.bf16.mxu0 0
        %753 = vmatpush1.bf16.xpose.msra.mxu0 0
        %754 = vmatprep.subr.bf16.mxu0 0
        %755 = vmatpush1.bf16.xpose.msra.mxu0 0
        %756 = vmatprep.subr.bf16.mxu0 0
        %757 = vmatpush1.bf16.xpose.msra.mxu0 0
        %758 = vmatprep.subr.bf16.mxu0 0
        %759 = vmatpush1.bf16.xpose.msra.mxu0 0
        %760 = vmatprep.subr.bf16.mxu0 0
        %761 = vmatpush1.bf16.xpose.msra.mxu0 0
        %762 = vmatprep.subr.bf16.mxu0 0
        %763 = vmatpush1.bf16.xpose.msra.mxu0 0
        %764 = vmatprep.subr.bf16.mxu0 0
        %765 = vmatpush1.bf16.xpose.msra.mxu0 0
        %766 = vmatprep.subr.bf16.mxu0 0
        %767 = vmatpush1.bf16.xpose.msra.mxu0 0
        %768 = vmatprep.subr.bf16.mxu0 0
        %769 = vmatpush1.bf16.xpose.msra.mxu0 0
        %770 = vmatprep.subr.bf16.mxu0 0
        %771 = vmatpush1.bf16.xpose.msra.mxu0 0
        %772 = vmatprep.subr.bf16.mxu0 0
        %773 = vmatpush1.bf16.xpose.msra.mxu0 0
        %774 = vmatprep.subr.bf16.mxu0 0
        %775 = vmatpush1.bf16.xpose.msra.mxu0 0
        %776 = vmatprep.subr.bf16.mxu0 0
        %777 = vmatpush1.bf16.xpose.msra.mxu0 0
        %778 = vmatprep.mubr.bf16.mxu0 0
        %779 = vmatmul.mubr.bf16.gmra.mrb[0].mxu0 %v741
        %v780 = vpop.f32.mrb[0].mxu0
        %v781 = vadd.f32 0.0, %v780
        %v782 = vpop.f32.mrb[0].mxu0
        %v783 = vpop.f32.mrb[0].mxu0
        %v784 = vadd.f32 0.0, %v783
        %v785 = vpop.f32.mrb[0].mxu0
        %786 = vdwg.mxu0
        %v787 = vsel %vm485, %v781, -inf
        %788 = vmax.xlane.f32.xlu0 %v787
        %v789 = vpop.xlane.xlu0 %788
        %v790 = vsel %vm485, %v784, -inf
        %791 = vmax.xlane.f32.xlu0 %v790
        %v792 = vpop.xlane.xlu0 %791
        %v793 = vsub.f32 %v781, %v789
        %v794 = vsub.f32 %v784, %v792
        %v795 = vmul.f32 %v793, 1.442695
        %v796 = vpow.pop %v795
        %v797 = vmul.f32 %v794, 1.442695
        %v798 = vpow.pop %v797
        %v799 = vsel %vm485, %v796, 0.0
        %800 = vadd.xlane.f32.xlu0 %v799
        %v801 = vpop.xlane.xlu0 %800
        %v802 = vsel %vm485, %v798, 0.0
        %803 = vadd.xlane.f32.xlu0 %v802
        %v804 = vpop.xlane.xlu0 %803
        %v805 = vrcp.pop %v801
        %v806 = vrcp.pop %v804
        %v807 = vmul.f32 %v796, %v805
        %v808 = vmul.f32 %v798, %v806
        %v809 = vpack.c.bf16 %v808, %v807
        %810 = vrot.lane.b32.xlu0 %v481, 96
        %v811 = vpop.permute.xlu0 %810
        %v814 = vsel %vm485, %v809, 0
        %816 = vmatprep.subr.bf16.mxu0 0
        %817 = vmatpush1.bf16.msra.mxu0 %v811
        %818 = vmatprep.subr.bf16.mxu0 0
        %819 = vmatpush1.bf16.msra.mxu0 0
        %820 = vmatprep.subr.bf16.mxu0 0
        %821 = vmatpush1.bf16.msra.mxu0 0
        %822 = vmatprep.subr.bf16.mxu0 0
        %823 = vmatpush1.bf16.msra.mxu0 0
        %824 = vmatprep.subr.bf16.mxu0 0
        %825 = vmatpush1.bf16.msra.mxu0 0
        %826 = vmatprep.subr.bf16.mxu0 0
        %827 = vmatpush1.bf16.msra.mxu0 0
        %828 = vmatprep.subr.bf16.mxu0 0
        %829 = vmatpush1.bf16.msra.mxu0 0
        %830 = vmatprep.subr.bf16.mxu0 0
        %831 = vmatpush1.bf16.msra.mxu0 0
        %832 = vmatprep.subr.bf16.mxu0 0
        %833 = vmatpush1.bf16.msra.mxu0 0
        %834 = vmatprep.subr.bf16.mxu0 0
        %835 = vmatpush1.bf16.msra.mxu0 0
        %836 = vmatprep.subr.bf16.mxu0 0
        %837 = vmatpush1.bf16.msra.mxu0 0
        %838 = vmatprep.subr.bf16.mxu0 0
        %839 = vmatpush1.bf16.msra.mxu0 0
        %840 = vmatprep.subr.bf16.mxu0 0
        %841 = vmatpush1.bf16.msra.mxu0 0
        %842 = vmatprep.subr.bf16.mxu0 0
        %843 = vmatpush1.bf16.msra.mxu0 0
        %844 = vmatprep.subr.bf16.mxu0 0
        %845 = vmatpush1.bf16.msra.mxu0 0
        %846 = vmatprep.subr.bf16.mxu0 0
        %847 = vmatpush1.bf16.msra.mxu0 0
        %848 = vmatprep.mubr.bf16.mxu0 0
        %849 = vmatmul.mubr.bf16.gmra.mrb[0].mxu0 %v814
        %v850 = vpop.f32.mrb[0].mxu0
        %v851 = vadd.f32 0.0, %v850
        %v852 = vpop.f32.mrb[0].mxu0
        %v853 = vpop.f32.mrb[0].mxu0
        %v854 = vadd.f32 0.0, %v853
        %v855 = vpop.f32.mrb[0].mxu0
        %856 = vdwg.mxu0
        %859 = vrot.lane.b32.xlu0 %v851, 32
        %v860 = vpop.permute.xlu0 %859
        %861 = vrot.lane.b32.xlu0 %v854, 32
        %v862 = vpop.permute.xlu0 %861
        %vm865 = vcmask 392448
        %866 = vst.msk [vmem:[#allocation2] sm:$0xff] %vm865, %v860
        %867 = vst.msk [vmem:[#allocation2 + $0x8] sm:$0xff] %vm865, %v862
        %868 = vrot.lane.b32.xlu0 %v401, 80
        %v869 = vpop.permute.xlu0 %868
        %870 = vrot.lane.b32.xlu0 %v402, 16
        %v871 = vpop.permute.xlu0 %870
        %v873 = vsel %vm485, %v869, 0
        %v876 = vsel %vm485, %v871, 0
        %878 = vmatprep.subr.bf16.mxu0 0
        %879 = vmatpush1.bf16.xpose.msra.mxu0 %v876
        %880 = vmatprep.subr.bf16.mxu0 0
        %881 = vmatpush1.bf16.xpose.msra.mxu0 0
        %882 = vmatprep.subr.bf16.mxu0 0
        %883 = vmatpush1.bf16.xpose.msra.mxu0 0
        %884 = vmatprep.subr.bf16.mxu0 0
        %885 = vmatpush1.bf16.xpose.msra.mxu0 0
        %886 = vmatprep.subr.bf16.mxu0 0
        %887 = vmatpush1.bf16.xpose.msra.mxu0 0
        %888 = vmatprep.subr.bf16.mxu0 0
        %889 = vmatpush1.bf16.xpose.msra.mxu0 0
        %890 = vmatprep.subr.bf16.mxu0 0
        %891 = vmatpush1.bf16.xpose.msra.mxu0 0
        %892 = vmatprep.subr.bf16.mxu0 0
        %893 = vmatpush1.bf16.xpose.msra.mxu0 0
        %894 = vmatprep.subr.bf16.mxu0 0
        %895 = vmatpush1.bf16.xpose.msra.mxu0 0
        %896 = vmatprep.subr.bf16.mxu0 0
        %897 = vmatpush1.bf16.xpose.msra.mxu0 0
        %898 = vmatprep.subr.bf16.mxu0 0
        %899 = vmatpush1.bf16.xpose.msra.mxu0 0
        %900 = vmatprep.subr.bf16.mxu0 0
        %901 = vmatpush1.bf16.xpose.msra.mxu0 0
        %902 = vmatprep.subr.bf16.mxu0 0
        %903 = vmatpush1.bf16.xpose.msra.mxu0 0
        %904 = vmatprep.subr.bf16.mxu0 0
        %905 = vmatpush1.bf16.xpose.msra.mxu0 0
        %906 = vmatprep.subr.bf16.mxu0 0
        %907 = vmatpush1.bf16.xpose.msra.mxu0 0
        %908 = vmatprep.subr.bf16.mxu0 0
        %909 = vmatpush1.bf16.xpose.msra.mxu0 0
        %910 = vmatprep.mubr.bf16.mxu0 0
        %911 = vmatmul.mubr.bf16.gmra.mrb[0].mxu0 %v873
        %v912 = vpop.f32.mrb[0].mxu0
        %v913 = vadd.f32 0.0, %v912
        %v914 = vpop.f32.mrb[0].mxu0
        %v915 = vpop.f32.mrb[0].mxu0
        %v916 = vadd.f32 0.0, %v915
        %v917 = vpop.f32.mrb[0].mxu0
        %918 = vdwg.mxu0
        %v919 = vsel %vm485, %v913, -inf
        %920 = vmax.xlane.f32.xlu0 %v919
        %v921 = vpop.xlane.xlu0 %920
        %v922 = vsel %vm485, %v916, -inf
        %923 = vmax.xlane.f32.xlu0 %v922
        %v924 = vpop.xlane.xlu0 %923
        %v925 = vsub.f32 %v913, %v921
        %v926 = vsub.f32 %v916, %v924
        %v927 = vmul.f32 %v925, 1.442695
        %v928 = vpow.pop %v927
        %v929 = vmul.f32 %v926, 1.442695
        %v930 = vpow.pop %v929
        %v931 = vsel %vm485, %v928, 0.0
        %932 = vadd.xlane.f32.xlu0 %v931
        %v933 = vpop.xlane.xlu0 %932
        %v934 = vsel %vm485, %v930, 0.0
        %935 = vadd.xlane.f32.xlu0 %v934
        %v936 = vpop.xlane.xlu0 %935
        %v937 = vrcp.pop %v933
        %v938 = vrcp.pop %v936
        %v939 = vmul.f32 %v928, %v937
        %v940 = vmul.f32 %v930, %v938
        %v941 = vpack.c.bf16 %v940, %v939
        %942 = vrot.lane.b32.xlu0 %v481, 80
        %v943 = vpop.permute.xlu0 %942
        %v946 = vsel %vm485, %v941, 0
        %948 = vmatprep.subr.bf16.mxu0 0
        %949 = vmatpush1.bf16.msra.mxu0 %v943
        %950 = vmatprep.subr.bf16.mxu0 0
        %951 = vmatpush1.bf16.msra.mxu0 0
        %952 = vmatprep.subr.bf16.mxu0 0
        %953 = vmatpush1.bf16.msra.mxu0 0
        %954 = vmatprep.subr.bf16.mxu0 0
        %955 = vmatpush1.bf16.msra.mxu0 0
        %956 = vmatprep.subr.bf16.mxu0 0
        %957 = vmatpush1.bf16.msra.mxu0 0
        %958 = vmatprep.subr.bf16.mxu0 0
        %959 = vmatpush1.bf16.msra.mxu0 0
        %960 = vmatprep.subr.bf16.mxu0 0
        %961 = vmatpush1.bf16.msra.mxu0 0
        %962 = vmatprep.subr.bf16.mxu0 0
        %963 = vmatpush1.bf16.msra.mxu0 0
        %964 = vmatprep.subr.bf16.mxu0 0
        %965 = vmatpush1.bf16.msra.mxu0 0
        %966 = vmatprep.subr.bf16.mxu0 0
        %967 = vmatpush1.bf16.msra.mxu0 0
        %968 = vmatprep.subr.bf16.mxu0 0
        %969 = vmatpush1.bf16.msra.mxu0 0
        %970 = vmatprep.subr.bf16.mxu0 0
        %971 = vmatpush1.bf16.msra.mxu0 0
        %972 = vmatprep.subr.bf16.mxu0 0
        %973 = vmatpush1.bf16.msra.mxu0 0
        %974 = vmatprep.subr.bf16.mxu0 0
        %975 = vmatpush1.bf16.msra.mxu0 0
        %976 = vmatprep.subr.bf16.mxu0 0
        %977 = vmatpush1.bf16.msra.mxu0 0
        %978 = vmatprep.subr.bf16.mxu0 0
        %979 = vmatpush1.bf16.msra.mxu0 0
        %980 = vmatprep.mubr.bf16.mxu0 0
        %981 = vmatmul.mubr.bf16.gmra.mrb[0].mxu0 %v946
        %v982 = vpop.f32.mrb[0].mxu0
        %v983 = vadd.f32 0.0, %v982
        %v984 = vpop.f32.mrb[0].mxu0
        %v985 = vpop.f32.mrb[0].mxu0
        %v986 = vadd.f32 0.0, %v985
        %v987 = vpop.f32.mrb[0].mxu0
        %988 = vdwg.mxu0
        %991 = vrot.lane.b32.xlu0 %v983, 48
        %v992 = vpop.permute.xlu0 %991
        %993 = vrot.lane.b32.xlu0 %v986, 48
        %v994 = vpop.permute.xlu0 %993
        %vm997 = vcmask 523648
        %998 = vst.msk [vmem:[#allocation2] sm:$0xff] %vm997, %v992
        %999 = vst.msk [vmem:[#allocation2 + $0x8] sm:$0xff] %vm997, %v994
        %v1000 = vld [vmem:[#allocation2] sm:$0xff]
        %v1001 = vld [vmem:[#allocation2 + $0x8] sm:$0xff]
        %v1002 = vpack.c.bf16 %v1001, %v1000
        %v1003 = vld [vmem:[#allocation8 + $0x20] sm:$0xf]
        %v1004 = vld [vmem:[#allocation8 + $0x24] sm:$0xf]
        %v1005 = vld [vmem:[#allocation8 + $0x28] sm:$0xf]
        %v1006 = vld [vmem:[#allocation8 + $0x2c] sm:$0xf]
        %v1007 = vld [vmem:[#allocation8 + $0x30] sm:$0xf]
        %v1008 = vld [vmem:[#allocation8 + $0x34] sm:$0xf]
        %v1009 = vld [vmem:[#allocation8 + $0x38] sm:$0xf]
        %v1010 = vld [vmem:[#allocation8 + $0x3c] sm:$0xf]
        %v1011 = vld [vmem:[#allocation9 + $0x3] sm:$0x1]
        %v1012 = vlaneseq
        %v1013 = vshrl.u32 %v1012, 7
        %v1014 = vsub.s32 0, %v1013
        %v1015 = vrot.slane %v1011, %v1014
        %v1024 = vunpack.c.l.b16 %v1003
        %v1025 = vunpack.c.l.b16 %v1004
        %v1026 = vunpack.c.l.b16 %v1005
        %v1027 = vunpack.c.l.b16 %v1006
        %v1028 = vunpack.c.l.b16 %v1007
        %v1029 = vunpack.c.l.b16 %v1008
        %v1030 = vunpack.c.l.b16 %v1009
        %v1031 = vunpack.c.l.b16 %v1010
        %v1032 = vpack.c.b16 %v1025, %v1024
        %v1033 = vpack.c.b16 %v1027, %v1026
        %v1034 = vpack.c.b16 %v1029, %v1028
        %v1035 = vpack.c.b16 %v1031, %v1030
        %1036 = vrot.lane.b32.xlu0 %v1032, 64
        %v1037 = vpop.permute.xlu0 %1036
        %1038 = vrot.lane.b32.xlu0 %v1033, 64
        %v1039 = vpop.permute.xlu0 %1038
        %1040 = vrot.lane.b32.xlu0 %v1034, 64
        %v1041 = vpop.permute.xlu0 %1040
        %1042 = vrot.lane.b32.xlu0 %v1035, 64
        %v1043 = vpop.permute.xlu0 %1042
        %1049 = vrot.lane.b32.xlu0 %v1015, 64
        %v1050 = vpop.permute.xlu0 %1049
        %v1053 = vsel %vm347, %v1002, 0
        %1055 = vmatprep.subr.bf16.mxu0 0
        %1056 = vmatpush1.bf16.msra.mxu0 %v1037
        %1057 = vmatprep.subr.bf16.mxu0 0
        %1058 = vmatpush1.bf16.msra.mxu0 %v1039
        %1059 = vmatprep.subr.bf16.mxu0 0
        %1060 = vmatpush1.bf16.msra.mxu0 %v1041
        %1061 = vmatprep.subr.bf16.mxu0 0
        %1062 = vmatpush1.bf16.msra.mxu0 %v1043
        %1063 = vmatprep.subr.bf16.mxu0 0
        %1064 = vmatpush1.bf16.msra.mxu0 0
        %1065 = vmatprep.subr.bf16.mxu0 0
        %1066 = vmatpush1.bf16.msra.mxu0 0
        %1067 = vmatprep.subr.bf16.mxu0 0
        %1068 = vmatpush1.bf16.msra.mxu0 0
        %1069 = vmatprep.subr.bf16.mxu0 0
        %1070 = vmatpush1.bf16.msra.mxu0 0
        %1071 = vmatprep.subr.bf16.mxu0 0
        %1072 = vmatpush1.bf16.msra.mxu0 0
        %1073 = vmatprep.subr.bf16.mxu0 0
        %1074 = vmatpush1.bf16.msra.mxu0 0
        %1075 = vmatprep.subr.bf16.mxu0 0
        %1076 = vmatpush1.bf16.msra.mxu0 0
        %1077 = vmatprep.subr.bf16.mxu0 0
        %1078 = vmatpush1.bf16.msra.mxu0 0
        %1079 = vmatprep.subr.bf16.mxu0 0
        %1080 = vmatpush1.bf16.msra.mxu0 0
        %1081 = vmatprep.subr.bf16.mxu0 0
        %1082 = vmatpush1.bf16.msra.mxu0 0
        %1083 = vmatprep.subr.bf16.mxu0 0
        %1084 = vmatpush1.bf16.msra.mxu0 0
        %1085 = vmatprep.subr.bf16.mxu0 0
        %1086 = vmatpush1.bf16.msra.mxu0 0
        %1087 = vmatprep.mubr.bf16.mxu0 0
        %1088 = vmatmul.mubr.bf16.gmra.mrb[0].mxu0 %v1053
        %v1089 = vpop.f32.mrb[0].mxu0
        %v1090 = vadd.f32 %v1050, %v1089
        %v1091 = vpop.f32.mrb[0].mxu0
        %v1092 = vpop.f32.mrb[0].mxu0
        %v1093 = vadd.f32 %v1050, %v1092
        %v1094 = vpop.f32.mrb[0].mxu0
        %1095 = vdwg.mxu0
        %v1096 = vadd.f32 %v312, %v1090
        %v1097 = vadd.f32 %v313, %v1093
        %v1098 = vld [vmem:[#allocation9 + $0x5] sm:$0x1]
        %v1099 = vld [vmem:[#allocation9 + $0x6] sm:$0x1]
        %v1100 = vsel %vm347, %v1096, 0.0
        %1101 = vadd.xlane.f32.xlu0 %v1100
        %v1102 = vpop.xlane.xlu0 %1101
        %v1103 = vsel %vm347, %v1097, 0.0
        %1104 = vadd.xlane.f32.xlu0 %v1103
        %v1105 = vpop.xlane.xlu0 %1104
        %v1106 = vrcp.pop 64.0
        %v1107 = vmul.f32 %v1102, %v1106
        %v1108 = vmul.f32 %v1105, %v1106
        %v1109 = vsub.f32 %v1096, %v1107
        %v1110 = vsub.f32 %v1097, %v1108
        %v1111 = vmul.f32 %v1109, %v1109
        %v1112 = vmul.f32 %v1110, %v1110
        %v1113 = vsel %vm347, %v1111, 0.0
        %1114 = vadd.xlane.f32.xlu0 %v1113
        %v1115 = vpop.xlane.xlu0 %1114
        %v1116 = vsel %vm347, %v1112, 0.0
        %1117 = vadd.xlane.f32.xlu0 %v1116
        %v1118 = vpop.xlane.xlu0 %1117
        %v1119 = vmul.f32 %v1115, %v1106
        %v1120 = vmul.f32 %v1118, %v1106
        %v1121 = vadd.f32 %v1119, 1e-05
        %v1122 = vadd.f32 %v1120, 1e-05
        %v1123 = vrsqrt.pop %v1121
        %v1124 = vrsqrt.pop %v1122
        %v1125 = vmul.f32 %v1109, %v1123
        %v1126 = vmul.f32 %v1110, %v1124
        %v1127 = vlaneseq
        %v1128 = vshrl.u32 %v1127, 7
        %v1129 = vsub.s32 0, %v1128
        %v1130 = vrot.slane %v1098, %v1129
        %1132 = vrot.lane.b32.xlu0 %v1130, 64
        %v1133 = vpop.permute.xlu0 %1132
        %v1135 = vmul.f32 %v1125, %v1133
        %v1136 = vmul.f32 %v1126, %v1133
        %v1137 = vlaneseq
        %v1138 = vshrl.u32 %v1137, 7
        %v1139 = vsub.s32 0, %v1138
        %v1140 = vrot.slane %v1099, %v1139
        %v1141 = vadd.f32 %v1135, %v1140
        %v1142 = vadd.f32 %v1136, %v1140
        %v1143 = vpack.c.bf16 %v1142, %v1141
        %v1144 = vld [vmem:[#allocation8 + $0x40] sm:$0xf]
        %v1145 = vld [vmem:[#allocation8 + $0x44] sm:$0xf]
        %v1146 = vld [vmem:[#allocation8 + $0x48] sm:$0xf]
        %v1147 = vld [vmem:[#allocation8 + $0x4c] sm:$0xf]
        %v1148 = vld [vmem:[#allocation8 + $0x50] sm:$0xf]
        %v1149 = vld [vmem:[#allocation8 + $0x54] sm:$0xf]
        %v1150 = vld [vmem:[#allocation8 + $0x58] sm:$0xf]
        %v1151 = vld [vmem:[#allocation8 + $0x5c] sm:$0xf]
        %v1152 = vld [vmem:[#allocation9 + $0x4] sm:$0x1]
        %v1153 = vlaneseq
        %v1154 = vshrl.u32 %v1153, 7
        %v1155 = vsub.s32 0, %v1154
        %v1156 = vrot.slane %v1152, %v1155
        %v1165 = vunpack.c.l.b16 %v1144
        %v1166 = vunpack.c.l.b16 %v1145
        %v1167 = vunpack.c.l.b16 %v1146
        %v1168 = vunpack.c.l.b16 %v1147
        %v1169 = vunpack.c.l.b16 %v1148
        %v1170 = vunpack.c.l.b16 %v1149
        %v1171 = vunpack.c.l.b16 %v1150
        %v1172 = vunpack.c.l.b16 %v1151
        %v1173 = vpack.c.b16 %v1166, %v1165
        %v1174 = vpack.c.b16 %v1168, %v1167
        %v1175 = vpack.c.b16 %v1170, %v1169
        %v1176 = vpack.c.b16 %v1172, %v1171
        %v1182 = vsel %vm347, %v1143, 0
        %1184 = vmatprep.subr.bf16.mxu0 0
        %1185 = vmatpush1.bf16.msra.mxu0 %v1173
        %1186 = vmatprep.subr.bf16.mxu0 0
        %1187 = vmatpush1.bf16.msra.mxu0 %v1174
        %1188 = vmatprep.subr.bf16.mxu0 0
        %1189 = vmatpush1.bf16.msra.mxu0 %v1175
        %1190 = vmatprep.subr.bf16.mxu0 0
        %1191 = vmatpush1.bf16.msra.mxu0 %v1176
        %1192 = vmatprep.subr.bf16.mxu0 0
        %1193 = vmatpush1.bf16.msra.mxu0 0
        %1194 = vmatprep.subr.bf16.mxu0 0
        %1195 = vmatpush1.bf16.msra.mxu0 0
        %1196 = vmatprep.subr.bf16.mxu0 0
        %1197 = vmatpush1.bf16.msra.mxu0 0
        %1198 = vmatprep.subr.bf16.mxu0 0
        %1199 = vmatpush1.bf16.msra.mxu0 0
        %1200 = vmatprep.subr.bf16.mxu0 0
        %1201 = vmatpush1.bf16.msra.mxu0 0
        %1202 = vmatprep.subr.bf16.mxu0 0
        %1203 = vmatpush1.bf16.msra.mxu0 0
        %1204 = vmatprep.subr.bf16.mxu0 0
        %1205 = vmatpush1.bf16.msra.mxu0 0
        %1206 = vmatprep.subr.bf16.mxu0 0
        %1207 = vmatpush1.bf16.msra.mxu0 0
        %1208 = vmatprep.subr.bf16.mxu0 0
        %1209 = vmatpush1.bf16.msra.mxu0 0
        %1210 = vmatprep.subr.bf16.mxu0 0
        %1211 = vmatpush1.bf16.msra.mxu0 0
        %1212 = vmatprep.subr.bf16.mxu0 0
        %1213 = vmatpush1.bf16.msra.mxu0 0
        %1214 = vmatprep.subr.bf16.mxu0 0
        %1215 = vmatpush1.bf16.msra.mxu0 0
        %1216 = vmatprep.mubr.bf16.mxu0 0
        %1217 = vmatmul.mubr.bf16.gmra.mrb[0].mxu0 %v1182
        %v1218 = vpop.f32.mrb[0].mxu0
        %v1219 = vadd.f32 %v1156, %v1218
        %v1220 = vpop.f32.mrb[0].mxu0
        %v1221 = vpop.f32.mrb[0].mxu0
        %v1222 = vadd.f32 %v1156, %v1221
        %v1223 = vpop.f32.mrb[0].mxu0
        %1224 = vdwg.mxu0
        %v1225 = vmax.f32 %v1219, 0.0
        %v1226 = vmax.f32 %v1222, 0.0
        %v1227 = vpack.c.bf16 %v1226, %v1225
        %v1228 = vld [vmem:[#allocation8 + $0x60] sm:$0xf]
        %v1229 = vld [vmem:[#allocation8 + $0x64] sm:$0xf]
        %v1230 = vld [vmem:[#allocation8 + $0x68] sm:$0xf]
        %v1231 = vld [vmem:[#allocation8 + $0x6c] sm:$0xf]
        %v1232 = vld [vmem:[#allocation8 + $0x70] sm:$0xf]
        %v1233 = vld [vmem:[#allocation8 + $0x74] sm:$0xf]
        %v1234 = vld [vmem:[#allocation8 + $0x78] sm:$0xf]
        %v1235 = vld [vmem:[#allocation8 + $0x7c] sm:$0xf]
        %v1236 = vld [vmem:[#allocation8 + $0x80] sm:$0xf]
        %v1237 = vld [vmem:[#allocation8 + $0x84] sm:$0xf]
        %v1238 = vld [vmem:[#allocation8 + $0x88] sm:$0xf]
        %v1239 = vld [vmem:[#allocation8 + $0x8c] sm:$0xf]
        %v1240 = vld [vmem:[#allocation8 + $0x90] sm:$0xf]
        %v1241 = vld [vmem:[#allocation8 + $0x94] sm:$0xf]
        %v1242 = vld [vmem:[#allocation8 + $0x98] sm:$0xf]
        %v1243 = vld [vmem:[#allocation8 + $0x9c] sm:$0xf]
        %v1260 = vunpack.c.l.b16 %v1228
        %v1261 = vunpack.c.l.b16 %v1229
        %v1262 = vunpack.c.l.b16 %v1230
        %v1263 = vunpack.c.l.b16 %v1231
        %v1264 = vunpack.c.l.b16 %v1232
        %v1265 = vunpack.c.l.b16 %v1233
        %v1266 = vunpack.c.l.b16 %v1234
        %v1267 = vunpack.c.l.b16 %v1235
        %v1268 = vunpack.c.l.b16 %v1236
        %v1269 = vunpack.c.l.b16 %v1237
        %v1270 = vunpack.c.l.b16 %v1238
        %v1271 = vunpack.c.l.b16 %v1239
        %v1272 = vunpack.c.l.b16 %v1240
        %v1273 = vunpack.c.l.b16 %v1241
        %v1274 = vunpack.c.l.b16 %v1242
        %v1275 = vunpack.c.l.b16 %v1243
        %v1276 = vpack.c.b16 %v1261, %v1260
        %v1277 = vpack.c.b16 %v1263, %v1262
        %v1278 = vpack.c.b16 %v1265, %v1264
        %v1279 = vpack.c.b16 %v1267, %v1266
        %v1280 = vpack.c.b16 %v1269, %v1268
        %v1281 = vpack.c.b16 %v1271, %v1270
        %v1282 = vpack.c.b16 %v1273, %v1272
        %v1283 = vpack.c.b16 %v1275, %v1274
        %1292 = vmatprep.subr.bf16.mxu0 0
        %1293 = vmatpush1.bf16.msra.mxu0 %v1276
        %1294 = vmatprep.subr.bf16.mxu0 0
        %1295 = vmatpush1.bf16.msra.mxu0 %v1277
        %1296 = vmatprep.subr.bf16.mxu0 0
        %1297 = vmatpush1.bf16.msra.mxu0 %v1278
        %1298 = vmatprep.subr.bf16.mxu0 0
        %1299 = vmatpush1.bf16.msra.mxu0 %v1279
        %1300 = vmatprep.subr.bf16.mxu0 0
        %1301 = vmatpush1.bf16.msra.mxu0 %v1280
        %1302 = vmatprep.subr.bf16.mxu0 0
        %1303 = vmatpush1.bf16.msra.mxu0 %v1281
        %1304 = vmatprep.subr.bf16.mxu0 0
        %1305 = vmatpush1.bf16.msra.mxu0 %v1282
        %1306 = vmatprep.subr.bf16.mxu0 0
        %1307 = vmatpush1.bf16.msra.mxu0 %v1283
        %1308 = vmatprep.subr.bf16.mxu0 0
        %1309 = vmatpush1.bf16.msra.mxu0 0
        %1310 = vmatprep.subr.bf16.mxu0 0
        %1311 = vmatpush1.bf16.msra.mxu0 0
        %1312 = vmatprep.subr.bf16.mxu0 0
        %1313 = vmatpush1.bf16.msra.mxu0 0
        %1314 = vmatprep.subr.bf16.mxu0 0
        %1315 = vmatpush1.bf16.msra.mxu0 0
        %1316 = vmatprep.subr.bf16.mxu0 0
        %1317 = vmatpush1.bf16.msra.mxu0 0
        %1318 = vmatprep.subr.bf16.mxu0 0
        %1319 = vmatpush1.bf16.msra.mxu0 0
        %1320 = vmatprep.subr.bf16.mxu0 0
        %1321 = vmatpush1.bf16.msra.mxu0 0
        %1322 = vmatprep.subr.bf16.mxu0 0
        %1323 = vmatpush1.bf16.msra.mxu0 0
        %1324 = vmatprep.mubr.bf16.mxu0 0
        %1325 = vmatmul.mubr.bf16.gmra.mrb[0].mxu0 %v1227
        %v1326 = vpop.f32.mrb[0].mxu0
        %v1327 = vadd.f32 %v1130, %v1326
        %v1328 = vpop.f32.mrb[0].mxu0
        %v1329 = vpop.f32.mrb[0].mxu0
        %v1330 = vadd.f32 %v1130, %v1329
        %v1331 = vpop.f32.mrb[0].mxu0
        %1332 = vdwg.mxu0
        %v1333 = vadd.f32 %v1141, %v1327
        %v1334 = vadd.f32 %v1142, %v1330
        %v1335 = vld [vmem:[#allocation9 + $0x7] sm:$0x1]
        %v1336 = vsel %vm347, %v1333, 0.0
        %1337 = vadd.xlane.f32.xlu0 %v1336
        %v1338 = vpop.xlane.xlu0 %1337
        %v1339 = vsel %vm347, %v1334, 0.0
        %1340 = vadd.xlane.f32.xlu0 %v1339
        %v1341 = vpop.xlane.xlu0 %1340
        %v1342 = vmul.f32 %v1338, %v1106
        %v1343 = vmul.f32 %v1341, %v1106
        %v1344 = vsub.f32 %v1333, %v1342
        %v1345 = vsub.f32 %v1334, %v1343
        %v1346 = vmul.f32 %v1344, %v1344
        %v1347 = vmul.f32 %v1345, %v1345
        %v1348 = vsel %vm347, %v1346, 0.0
        %1349 = vadd.xlane.f32.xlu0 %v1348
        %v1350 = vpop.xlane.xlu0 %1349
        %v1351 = vsel %vm347, %v1347, 0.0
        %1352 = vadd.xlane.f32.xlu0 %v1351
        %v1353 = vpop.xlane.xlu0 %1352
        %v1354 = vmul.f32 %v1350, %v1106
        %v1355 = vmul.f32 %v1353, %v1106
        %v1356 = vadd.f32 %v1354, 1e-05
        %v1357 = vadd.f32 %v1355, 1e-05
        %v1358 = vrsqrt.pop %v1356
        %v1359 = vrsqrt.pop %v1357
        %v1360 = vmul.f32 %v1344, %v1358
        %v1361 = vmul.f32 %v1345, %v1359
        %1363 = vrot.lane.b32.xlu0 %v1140, 64
        %v1364 = vpop.permute.xlu0 %1363
        %v1366 = vmul.f32 %v1360, %v1364
        %v1367 = vmul.f32 %v1361, %v1364
        %v1368 = vlaneseq
        %v1369 = vshrl.u32 %v1368, 7
        %v1370 = vsub.s32 0, %v1369
        %v1371 = vrot.slane %v1335, %v1370
        %v1372 = vadd.f32 %v1366, %v1371
        %v1373 = vadd.f32 %v1367, %v1371
        %v1374 = vpack.c.bf16 %v1373, %v1372
        %v1375 = vld [vmem:[#allocation8 + $0xa0] sm:$0xf]
        %v1376 = vld [vmem:[#allocation8 + $0xa4] sm:$0xf]
        %v1377 = vld [vmem:[#allocation8 + $0xa8] sm:$0xf]
        %v1378 = vld [vmem:[#allocation8 + $0xac] sm:$0xf]
        %v1379 = vld [vmem:[#allocation8 + $0xb0] sm:$0xf]
        %v1380 = vld [vmem:[#allocation8 + $0xb4] sm:$0xf]
        %v1381 = vld [vmem:[#allocation8 + $0xb8] sm:$0xf]
        %v1382 = vld [vmem:[#allocation8 + $0xbc] sm:$0xf]
        %v1391 = vunpack.c.l.b16 %v1375
        %v1392 = vunpack.c.l.b16 %v1376
        %v1393 = vunpack.c.l.b16 %v1377
        %v1394 = vunpack.c.l.b16 %v1378
        %v1395 = vunpack.c.l.b16 %v1379
        %v1396 = vunpack.c.l.b16 %v1380
        %v1397 = vunpack.c.l.b16 %v1381
        %v1398 = vunpack.c.l.b16 %v1382
        %v1399 = vpack.c.b16 %v1392, %v1391
        %v1400 = vpack.c.b16 %v1394, %v1393
        %v1401 = vpack.c.b16 %v1396, %v1395
        %v1402 = vpack.c.b16 %v1398, %v1397
        %v1408 = vsel %vm347, %v1374, 0
        %1410 = vmatprep.subr.bf16.mxu0 0
        %1411 = vmatpush1.bf16.msra.mxu0 %v1399
        %1412 = vmatprep.subr.bf16.mxu0 0
        %1413 = vmatpush1.bf16.msra.mxu0 %v1400
        %1414 = vmatprep.subr.bf16.mxu0 0
        %1415 = vmatpush1.bf16.msra.mxu0 %v1401
        %1416 = vmatprep.subr.bf16.mxu0 0
        %1417 = vmatpush1.bf16.msra.mxu0 %v1402
        %1418 = vmatprep.subr.bf16.mxu0 0
        %1419 = vmatpush1.bf16.msra.mxu0 0
        %1420 = vmatprep.subr.bf16.mxu0 0
        %1421 = vmatpush1.bf16.msra.mxu0 0
        %1422 = vmatprep.subr.bf16.mxu0 0
        %1423 = vmatpush1.bf16.msra.mxu0 0
        %1424 = vmatprep.subr.bf16.mxu0 0
        %1425 = vmatpush1.bf16.msra.mxu0 0
        %1426 = vmatprep.subr.bf16.mxu0 0
        %1427 = vmatpush1.bf16.msra.mxu0 0
        %1428 = vmatprep.subr.bf16.mxu0 0
        %1429 = vmatpush1.bf16.msra.mxu0 0
        %1430 = vmatprep.subr.bf16.mxu0 0
        %1431 = vmatpush1.bf16.msra.mxu0 0
        %1432 = vmatprep.subr.bf16.mxu0 0
        %1433 = vmatpush1.bf16.msra.mxu0 0
        %1434 = vmatprep.subr.bf16.mxu0 0
        %1435 = vmatpush1.bf16.msra.mxu0 0
        %1436 = vmatprep.subr.bf16.mxu0 0
        %1437 = vmatpush1.bf16.msra.mxu0 0
        %1438 = vmatprep.subr.bf16.mxu0 0
        %1439 = vmatpush1.bf16.msra.mxu0 0
        %1440 = vmatprep.subr.bf16.mxu0 0
        %1441 = vmatpush1.bf16.msra.mxu0 0
        %1442 = vmatprep.mubr.bf16.mxu0 0
        %1443 = vmatmul.mubr.bf16.gmra.mrb[0].mxu0 %v1408
        %v1444 = vpop.f32.mrb[0].mxu0
        %v1445 = vadd.f32 0.0, %v1444
        %v1446 = vpop.f32.mrb[0].mxu0
        %v1447 = vpop.f32.mrb[0].mxu0
        %v1448 = vadd.f32 0.0, %v1447
        %v1449 = vpop.f32.mrb[0].mxu0
        %1450 = vdwg.mxu0
        %v1451 = vld [vmem:[#allocation9 + $0x8] sm:$0x1]
        %v1452 = vlaneseq
        %v1453 = vshrl.u32 %v1452, 7
        %v1454 = vsub.s32 0, %v1453
        %v1455 = vrot.slane %v1451, %v1454
        %v1456 = vadd.f32 %v1445, %v1455
        %v1457 = vadd.f32 %v1448, %v1455
        %v1458 = vmul.f32 %v1456, 0.25
        %v1459 = vmul.f32 %v1457, 0.25
        %v1460 = vpack.c.bf16 %v1459, %v1458
        %v1461 = vpack.c.bf16 %v1457, %v1456
        %v1462 = vld [vmem:[#allocation8 + $0xc0] sm:$0xf]
        %v1463 = vld [vmem:[#allocation8 + $0xc4] sm:$0xf]
        %v1464 = vld [vmem:[#allocation8 + $0xc8] sm:$0xf]
        %v1465 = vld [vmem:[#allocation8 + $0xcc] sm:$0xf]
        %v1466 = vld [vmem:[#allocation8 + $0xd0] sm:$0xf]
        %v1467 = vld [vmem:[#allocation8 + $0xd4] sm:$0xf]
        %v1468 = vld [vmem:[#allocation8 + $0xd8] sm:$0xf]
        %v1469 = vld [vmem:[#allocation8 + $0xdc] sm:$0xf]
        %v1470 = vld [vmem:[#allocation9 + $0x9] sm:$0x1]
        %v1471 = vlaneseq
        %v1472 = vshrl.u32 %v1471, 7
        %v1473 = vsub.s32 0, %v1472
        %v1474 = vrot.slane %v1470, %v1473
        %v1483 = vunpack.c.l.b16 %v1462
        %v1484 = vunpack.c.l.b16 %v1463
        %v1485 = vunpack.c.l.b16 %v1464
        %v1486 = vunpack.c.l.b16 %v1465
        %v1487 = vunpack.c.l.b16 %v1466
        %v1488 = vunpack.c.l.b16 %v1467
        %v1489 = vunpack.c.l.b16 %v1468
        %v1490 = vunpack.c.l.b16 %v1469
        %v1491 = vpack.c.b16 %v1484, %v1483
        %v1492 = vpack.c.b16 %v1486, %v1485
        %v1493 = vpack.c.b16 %v1488, %v1487
        %v1494 = vpack.c.b16 %v1490, %v1489
        %1499 = vmatprep.subr.bf16.mxu0 0
        %1500 = vmatpush1.bf16.msra.mxu0 %v1491
        %1501 = vmatprep.subr.bf16.mxu0 0
        %1502 = vmatpush1.bf16.msra.mxu0 %v1492
        %1503 = vmatprep.subr.bf16.mxu0 0
        %1504 = vmatpush1.bf16.msra.mxu0 %v1493
        %1505 = vmatprep.subr.bf16.mxu0 0
        %1506 = vmatpush1.bf16.msra.mxu0 %v1494
        %1507 = vmatprep.subr.bf16.mxu0 0
        %1508 = vmatpush1.bf16.msra.mxu0 0
        %1509 = vmatprep.subr.bf16.mxu0 0
        %1510 = vmatpush1.bf16.msra.mxu0 0
        %1511 = vmatprep.subr.bf16.mxu0 0
        %1512 = vmatpush1.bf16.msra.mxu0 0
        %1513 = vmatprep.subr.bf16.mxu0 0
        %1514 = vmatpush1.bf16.msra.mxu0 0
        %1515 = vmatprep.subr.bf16.mxu0 0
        %1516 = vmatpush1.bf16.msra.mxu0 0
        %1517 = vmatprep.subr.bf16.mxu0 0
        %1518 = vmatpush1.bf16.msra.mxu0 0
        %1519 = vmatprep.subr.bf16.mxu0 0
        %1520 = vmatpush1.bf16.msra.mxu0 0
        %1521 = vmatprep.subr.bf16.mxu0 0
        %1522 = vmatpush1.bf16.msra.mxu0 0
        %1523 = vmatprep.subr.bf16.mxu0 0
        %1524 = vmatpush1.bf16.msra.mxu0 0
        %1525 = vmatprep.subr.bf16.mxu0 0
        %1526 = vmatpush1.bf16.msra.mxu0 0
        %1527 = vmatprep.subr.bf16.mxu0 0
        %1528 = vmatpush1.bf16.msra.mxu0 0
        %1529 = vmatprep.subr.bf16.mxu0 0
        %1530 = vmatpush1.bf16.msra.mxu0 0
        %1531 = vmatprep.mubr.bf16.mxu0 0
        %1532 = vmatmul.mubr.bf16.gmra.mrb[0].mxu0 %v1408
        %v1533 = vpop.f32.mrb[0].mxu0
        %v1534 = vadd.f32 %v1474, %v1533
        %v1535 = vpop.f32.mrb[0].mxu0
        %v1536 = vpop.f32.mrb[0].mxu0
        %v1537 = vadd.f32 %v1474, %v1536
        %v1538 = vpop.f32.mrb[0].mxu0
        %1539 = vdwg.mxu0
        %v1540 = vpack.c.bf16 %v1537, %v1534
        %1542 = vrot.lane.b32.xlu0 %v1461, 64
        %v1543 = vpop.permute.xlu0 %1542
        %v1545 = vsel %vm485, %v1460, 0
        %v1548 = vsel %vm485, %v1543, 0
        %1550 = vmatprep.subr.bf16.mxu0 0
        %1551 = vmatpush1.bf16.xpose.msra.mxu0 %v1548
        %1552 = vmatprep.subr.bf16.mxu0 0
        %1553 = vmatpush1.bf16.xpose.msra.mxu0 0
        %1554 = vmatprep.subr.bf16.mxu0 0
        %1555 = vmatpush1.bf16.xpose.msra.mxu0 0
        %1556 = vmatprep.subr.bf16.mxu0 0
        %1557 = vmatpush1.bf16.xpose.msra.mxu0 0
        %1558 = vmatprep.subr.bf16.mxu0 0
        %1559 = vmatpush1.bf16.xpose.msra.mxu0 0
        %1560 = vmatprep.subr.bf16.mxu0 0
        %1561 = vmatpush1.bf16.xpose.msra.mxu0 0
        %1562 = vmatprep.subr.bf16.mxu0 0
        %1563 = vmatpush1.bf16.xpose.msra.mxu0 0
        %1564 = vmatprep.subr.bf16.mxu0 0
        %1565 = vmatpush1.bf16.xpose.msra.mxu0 0
        %1566 = vmatprep.subr.bf16.mxu0 0
        %1567 = vmatpush1.bf16.xpose.msra.mxu0 0
        %1568 = vmatprep.subr.bf16.mxu0 0
        %1569 = vmatpush1.bf16.xpose.msra.mxu0 0
        %1570 = vmatprep.subr.bf16.mxu0 0
        %1571 = vmatpush1.bf16.xpose.msra.mxu0 0
        %1572 = vmatprep.subr.bf16.mxu0 0
        %1573 = vmatpush1.bf16.xpose.msra.mxu0 0
        %1574 = vmatprep.subr.bf16.mxu0 0
        %1575 = vmatpush1.bf16.xpose.msra.mxu0 0
        %1576 = vmatprep.subr.bf16.mxu0 0
        %1577 = vmatpush1.bf16.xpose.msra.mxu0 0
        %1578 = vmatprep.subr.bf16.mxu0 0
        %1579 = vmatpush1.bf16.xpose.msra.mxu0 0
        %1580 = vmatprep.subr.bf16.mxu0 0
        %1581 = vmatpush1.bf16.xpose.msra.mxu0 0
        %1582 = vmatprep.mubr.bf16.mxu0 0
        %1583 = vmatmul.mubr.bf16.gmra.mrb[0].mxu0 %v1545
        %v1584 = vpop.f32.mrb[0].mxu0
        %v1585 = vadd.f32 0.0, %v1584
        %v1586 = vpop.f32.mrb[0].mxu0
        %v1587 = vpop.f32.mrb[0].mxu0
        %v1588 = vadd.f32 0.0, %v1587
        %v1589 = vpop.f32.mrb[0].mxu0
        %1590 = vdwg.mxu0
        %v1591 = vsel %vm485, %v1585, -inf
        %1592 = vmax.xlane.f32.xlu0 %v1591
        %v1593 = vpop.xlane.xlu0 %1592
        %v1594 = vsel %vm485, %v1588, -inf
        %1595 = vmax.xlane.f32.xlu0 %v1594
        %v1596 = vpop.xlane.xlu0 %1595
        %v1597 = vsub.f32 %v1585, %v1593
        %v1598 = vsub.f32 %v1588, %v1596
        %v1599 = vmul.f32 %v1597, 1.442695
        %v1600 = vpow.pop %v1599
        %v1601 = vmul.f32 %v1598, 1.442695
        %v1602 = vpow.pop %v1601
        %v1603 = vsel %vm485, %v1600, 0.0
        %1604 = vadd.xlane.f32.xlu0 %v1603
        %v1605 = vpop.xlane.xlu0 %1604
        %v1606 = vsel %vm485, %v1602, 0.0
        %1607 = vadd.xlane.f32.xlu0 %v1606
        %v1608 = vpop.xlane.xlu0 %1607
        %v1609 = vrcp.pop %v1605
        %v1610 = vrcp.pop %v1608
        %v1611 = vmul.f32 %v1600, %v1609
        %v1612 = vmul.f32 %v1602, %v1610
        %v1613 = vpack.c.bf16 %v1612, %v1611
        %v1615 = vsel %vm485, %v1613, 0
        %1617 = vmatprep.subr.bf16.mxu0 0
        %1618 = vmatpush1.bf16.msra.mxu0 %v1540
        %1619 = vmatprep.subr.bf16.mxu0 0
        %1620 = vmatpush1.bf16.msra.mxu0 0
        %1621 = vmatprep.subr.bf16.mxu0 0
        %1622 = vmatpush1.bf16.msra.mxu0 0
        %1623 = vmatprep.subr.bf16.mxu0 0
        %1624 = vmatpush1.bf16.msra.mxu0 0
        %1625 = vmatprep.subr.bf16.mxu0 0
        %1626 = vmatpush1.bf16.msra.mxu0 0
        %1627 = vmatprep.subr.bf16.mxu0 0
        %1628 = vmatpush1.bf16.msra.mxu0 0
        %1629 = vmatprep.subr.bf16.mxu0 0
        %1630 = vmatpush1.bf16.msra.mxu0 0
        %1631 = vmatprep.subr.bf16.mxu0 0
        %1632 = vmatpush1.bf16.msra.mxu0 0
        %1633 = vmatprep.subr.bf16.mxu0 0
        %1634 = vmatpush1.bf16.msra.mxu0 0
        %1635 = vmatprep.subr.bf16.mxu0 0
        %1636 = vmatpush1.bf16.msra.mxu0 0
        %1637 = vmatprep.subr.bf16.mxu0 0
        %1638 = vmatpush1.bf16.msra.mxu0 0
        %1639 = vmatprep.subr.bf16.mxu0 0
        %1640 = vmatpush1.bf16.msra.mxu0 0
        %1641 = vmatprep.subr.bf16.mxu0 0
        %1642 = vmatpush1.bf16.msra.mxu0 0
        %1643 = vmatprep.subr.bf16.mxu0 0
        %1644 = vmatpush1.bf16.msra.mxu0 0
        %1645 = vmatprep.subr.bf16.mxu0 0
        %1646 = vmatpush1.bf16.msra.mxu0 0
        %1647 = vmatprep.subr.bf16.mxu0 0
        %1648 = vmatpush1.bf16.msra.mxu0 0
        %1649 = vmatprep.mubr.bf16.mxu0 0
        %1650 = vmatmul.mubr.bf16.gmra.mrb[0].mxu0 %v1615
        %v1651 = vpop.f32.mrb[0].mxu0
        %v1652 = vadd.f32 0.0, %v1651
        %v1653 = vpop.f32.mrb[0].mxu0
        %v1654 = vpop.f32.mrb[0].mxu0
        %v1655 = vadd.f32 0.0, %v1654
        %v1656 = vpop.f32.mrb[0].mxu0
        %1657 = vdwg.mxu0
        %1658 = vst.msk [vmem:[#allocation2] sm:$0xff] %vm485, %v1652
        %1659 = vst.msk [vmem:[#allocation2 + $0x8] sm:$0xff] %vm485, %v1655
        %1661 = vrot.lane.b32.xlu0 %v1460, 112
        %v1662 = vpop.permute.xlu0 %1661
        %1663 = vrot.lane.b32.xlu0 %v1461, 48
        %v1664 = vpop.permute.xlu0 %1663
        %v1666 = vsel %vm485, %v1662, 0
        %v1669 = vsel %vm485, %v1664, 0
        %1671 = vmatprep.subr.bf16.mxu0 0
        %1672 = vmatpush1.bf16.xpose.msra.mxu0 %v1669
        %1673 = vmatprep.subr.bf16.mxu0 0
        %1674 = vmatpush1.bf16.xpose.msra.mxu0 0
        %1675 = vmatprep.subr.bf16.mxu0 0
        %1676 = vmatpush1.bf16.xpose.msra.mxu0 0
        %1677 = vmatprep.subr.bf16.mxu0 0
        %1678 = vmatpush1.bf16.xpose.msra.mxu0 0
        %1679 = vmatprep.subr.bf16.mxu0 0
        %1680 = vmatpush1.bf16.xpose.msra.mxu0 0
        %1681 = vmatprep.subr.bf16.mxu0 0
        %1682 = vmatpush1.bf16.xpose.msra.mxu0 0
        %1683 = vmatprep.subr.bf16.mxu0 0
        %1684 = vmatpush1.bf16.xpose.msra.mxu0 0
        %1685 = vmatprep.subr.bf16.mxu0 0
        %1686 = vmatpush1.bf16.xpose.msra.mxu0 0
        %1687 = vmatprep.subr.bf16.mxu0 0
        %1688 = vmatpush1.bf16.xpose.msra.mxu0 0
        %1689 = vmatprep.subr.bf16.mxu0 0
        %1690 = vmatpush1.bf16.xpose.msra.mxu0 0
        %1691 = vmatprep.subr.bf16.mxu0 0
        %1692 = vmatpush1.bf16.xpose.msra.mxu0 0
        %1693 = vmatprep.subr.bf16.mxu0 0
        %1694 = vmatpush1.bf16.xpose.msra.mxu0 0
        %1695 = vmatprep.subr.bf16.mxu0 0
        %1696 = vmatpush1.bf16.xpose.msra.mxu0 0
        %1697 = vmatprep.subr.bf16.mxu0 0
        %1698 = vmatpush1.bf16.xpose.msra.mxu0 0
        %1699 = vmatprep.subr.bf16.mxu0 0
        %1700 = vmatpush1.bf16.xpose.msra.mxu0 0
        %1701 = vmatprep.subr.bf16.mxu0 0
        %1702 = vmatpush1.bf16.xpose.msra.mxu0 0
        %1703 = vmatprep.mubr.bf16.mxu0 0
        %1704 = vmatmul.mubr.bf16.gmra.mrb[0].mxu0 %v1666
        %v1705 = vpop.f32.mrb[0].mxu0
        %v1706 = vadd.f32 0.0, %v1705
        %v1707 = vpop.f32.mrb[0].mxu0
        %v1708 = vpop.f32.mrb[0].mxu0
        %v1709 = vadd.f32 0.0, %v1708
        %v1710 = vpop.f32.mrb[0].mxu0
        %1711 = vdwg.mxu0
        %v1712 = vsel %vm485, %v1706, -inf
        %1713 = vmax.xlane.f32.xlu0 %v1712
        %v1714 = vpop.xlane.xlu0 %1713
        %v1715 = vsel %vm485, %v1709, -inf
        %1716 = vmax.xlane.f32.xlu0 %v1715
        %v1717 = vpop.xlane.xlu0 %1716
        %v1718 = vsub.f32 %v1706, %v1714
        %v1719 = vsub.f32 %v1709, %v1717
        %v1720 = vmul.f32 %v1718, 1.442695
        %v1721 = vpow.pop %v1720
        %v1722 = vmul.f32 %v1719, 1.442695
        %v1723 = vpow.pop %v1722
        %v1724 = vsel %vm485, %v1721, 0.0
        %1725 = vadd.xlane.f32.xlu0 %v1724
        %v1726 = vpop.xlane.xlu0 %1725
        %v1727 = vsel %vm485, %v1723, 0.0
        %1728 = vadd.xlane.f32.xlu0 %v1727
        %v1729 = vpop.xlane.xlu0 %1728
        %v1730 = vrcp.pop %v1726
        %v1731 = vrcp.pop %v1729
        %v1732 = vmul.f32 %v1721, %v1730
        %v1733 = vmul.f32 %v1723, %v1731
        %v1734 = vpack.c.bf16 %v1733, %v1732
        %1736 = vrot.lane.b32.xlu0 %v1540, 112
        %v1737 = vpop.permute.xlu0 %1736
        %v1740 = vsel %vm485, %v1734, 0
        %1742 = vmatprep.subr.bf16.mxu0 0
        %1743 = vmatpush1.bf16.msra.mxu0 %v1737
        %1744 = vmatprep.subr.bf16.mxu0 0
        %1745 = vmatpush1.bf16.msra.mxu0 0
        %1746 = vmatprep.subr.bf16.mxu0 0
        %1747 = vmatpush1.bf16.msra.mxu0 0
        %1748 = vmatprep.subr.bf16.mxu0 0
        %1749 = vmatpush1.bf16.msra.mxu0 0
        %1750 = vmatprep.subr.bf16.mxu0 0
        %1751 = vmatpush1.bf16.msra.mxu0 0
        %1752 = vmatprep.subr.bf16.mxu0 0
        %1753 = vmatpush1.bf16.msra.mxu0 0
        %1754 = vmatprep.subr.bf16.mxu0 0
        %1755 = vmatpush1.bf16.msra.mxu0 0
        %1756 = vmatprep.subr.bf16.mxu0 0
        %1757 = vmatpush1.bf16.msra.mxu0 0
        %1758 = vmatprep.subr.bf16.mxu0 0
        %1759 = vmatpush1.bf16.msra.mxu0 0
        %1760 = vmatprep.subr.bf16.mxu0 0
        %1761 = vmatpush1.bf16.msra.mxu0 0
        %1762 = vmatprep.subr.bf16.mxu0 0
        %1763 = vmatpush1.bf16.msra.mxu0 0
        %1764 = vmatprep.subr.bf16.mxu0 0
        %1765 = vmatpush1.bf16.msra.mxu0 0
        %1766 = vmatprep.subr.bf16.mxu0 0
        %1767 = vmatpush1.bf16.msra.mxu0 0
        %1768 = vmatprep.subr.bf16.mxu0 0
        %1769 = vmatpush1.bf16.msra.mxu0 0
        %1770 = vmatprep.subr.bf16.mxu0 0
        %1771 = vmatpush1.bf16.msra.mxu0 0
        %1772 = vmatprep.subr.bf16.mxu0 0
        %1773 = vmatpush1.bf16.msra.mxu0 0
        %1774 = vmatprep.mubr.bf16.mxu0 0
        %1775 = vmatmul.mubr.bf16.gmra.mrb[0].mxu0 %v1740
        %v1776 = vpop.f32.mrb[0].mxu0
        %v1777 = vadd.f32 0.0, %v1776
        %v1778 = vpop.f32.mrb[0].mxu0
        %v1779 = vpop.f32.mrb[0].mxu0
        %v1780 = vadd.f32 0.0, %v1779
        %v1781 = vpop.f32.mrb[0].mxu0
        %1782 = vdwg.mxu0
        %1785 = vrot.lane.b32.xlu0 %v1777, 16
        %v1786 = vpop.permute.xlu0 %1785
        %1787 = vrot.lane.b32.xlu0 %v1780, 16
        %v1788 = vpop.permute.xlu0 %1787
        %1791 = vst.msk [vmem:[#allocation2] sm:$0xff] %vm733, %v1786
        %1792 = vst.msk [vmem:[#allocation2 + $0x8] sm:$0xff] %vm733, %v1788
        %1793 = vrot.lane.b32.xlu0 %v1460, 96
        %v1794 = vpop.permute.xlu0 %1793
        %1795 = vrot.lane.b32.xlu0 %v1461, 32
        %v1796 = vpop.permute.xlu0 %1795
        %v1798 = vsel %vm485, %v1794, 0
        %v1801 = vsel %vm485, %v1796, 0
        %1803 = vmatprep.subr.bf16.mxu0 0
        %1804 = vmatpush1.bf16.xpose.msra.mxu0 %v1801
        %1805 = vmatprep.subr.bf16.mxu0 0
        %1806 = vmatpush1.bf16.xpose.msra.mxu0 0
        %1807 = vmatprep.subr.bf16.mxu0 0
        %1808 = vmatpush1.bf16.xpose.msra.mxu0 0
        %1809 = vmatprep.subr.bf16.mxu0 0
        %1810 = vmatpush1.bf16.xpose.msra.mxu0 0
        %1811 = vmatprep.subr.bf16.mxu0 0
        %1812 = vmatpush1.bf16.xpose.msra.mxu0 0
        %1813 = vmatprep.subr.bf16.mxu0 0
        %1814 = vmatpush1.bf16.xpose.msra.mxu0 0
        %1815 = vmatprep.subr.bf16.mxu0 0
        %1816 = vmatpush1.bf16.xpose.msra.mxu0 0
        %1817 = vmatprep.subr.bf16.mxu0 0
        %1818 = vmatpush1.bf16.xpose.msra.mxu0 0
        %1819 = vmatprep.subr.bf16.mxu0 0
        %1820 = vmatpush1.bf16.xpose.msra.mxu0 0
        %1821 = vmatprep.subr.bf16.mxu0 0
        %1822 = vmatpush1.bf16.xpose.msra.mxu0 0
        %1823 = vmatprep.subr.bf16.mxu0 0
        %1824 = vmatpush1.bf16.xpose.msra.mxu0 0
        %1825 = vmatprep.subr.bf16.mxu0 0
        %1826 = vmatpush1.bf16.xpose.msra.mxu0 0
        %1827 = vmatprep.subr.bf16.mxu0 0
        %1828 = vmatpush1.bf16.xpose.msra.mxu0 0
        %1829 = vmatprep.subr.bf16.mxu0 0
        %1830 = vmatpush1.bf16.xpose.msra.mxu0 0
        %1831 = vmatprep.subr.bf16.mxu0 0
        %1832 = vmatpush1.bf16.xpose.msra.mxu0 0
        %1833 = vmatprep.subr.bf16.mxu0 0
        %1834 = vmatpush1.bf16.xpose.msra.mxu0 0
        %1835 = vmatprep.mubr.bf16.mxu0 0
        %1836 = vmatmul.mubr.bf16.gmra.mrb[0].mxu0 %v1798
        %v1837 = vpop.f32.mrb[0].mxu0
        %v1838 = vadd.f32 0.0, %v1837
        %v1839 = vpop.f32.mrb[0].mxu0
        %v1840 = vpop.f32.mrb[0].mxu0
        %v1841 = vadd.f32 0.0, %v1840
        %v1842 = vpop.f32.mrb[0].mxu0
        %1843 = vdwg.mxu0
        %v1844 = vsel %vm485, %v1838, -inf
        %1845 = vmax.xlane.f32.xlu0 %v1844
        %v1846 = vpop.xlane.xlu0 %1845
        %v1847 = vsel %vm485, %v1841, -inf
        %1848 = vmax.xlane.f32.xlu0 %v1847
        %v1849 = vpop.xlane.xlu0 %1848
        %v1850 = vsub.f32 %v1838, %v1846
        %v1851 = vsub.f32 %v1841, %v1849
        %v1852 = vmul.f32 %v1850, 1.442695
        %v1853 = vpow.pop %v1852
        %v1854 = vmul.f32 %v1851, 1.442695
        %v1855 = vpow.pop %v1854
        %v1856 = vsel %vm485, %v1853, 0.0
        %1857 = vadd.xlane.f32.xlu0 %v1856
        %v1858 = vpop.xlane.xlu0 %1857
        %v1859 = vsel %vm485, %v1855, 0.0
        %1860 = vadd.xlane.f32.xlu0 %v1859
        %v1861 = vpop.xlane.xlu0 %1860
        %v1862 = vrcp.pop %v1858
        %v1863 = vrcp.pop %v1861
        %v1864 = vmul.f32 %v1853, %v1862
        %v1865 = vmul.f32 %v1855, %v1863
        %v1866 = vpack.c.bf16 %v1865, %v1864
        %1867 = vrot.lane.b32.xlu0 %v1540, 96
        %v1868 = vpop.permute.xlu0 %1867
        %v1871 = vsel %vm485, %v1866, 0
        %1873 = vmatprep.subr.bf16.mxu0 0
        %1874 = vmatpush1.bf16.msra.mxu0 %v1868
        %1875 = vmatprep.subr.bf16.mxu0 0
        %1876 = vmatpush1.bf16.msra.mxu0 0
        %1877 = vmatprep.subr.bf16.mxu0 0
        %1878 = vmatpush1.bf16.msra.mxu0 0
        %1879 = vmatprep.subr.bf16.mxu0 0
        %1880 = vmatpush1.bf16.msra.mxu0 0
        %1881 = vmatprep.subr.bf16.mxu0 0
        %1882 = vmatpush1.bf16.msra.mxu0 0
        %1883 = vmatprep.subr.bf16.mxu0 0
        %1884 = vmatpush1.bf16.msra.mxu0 0
        %1885 = vmatprep.subr.bf16.mxu0 0
        %1886 = vmatpush1.bf16.msra.mxu0 0
        %1887 = vmatprep.subr.bf16.mxu0 0
        %1888 = vmatpush1.bf16.msra.mxu0 0
        %1889 = vmatprep.subr.bf16.mxu0 0
        %1890 = vmatpush1.bf16.msra.mxu0 0
        %1891 = vmatprep.subr.bf16.mxu0 0
        %1892 = vmatpush1.bf16.msra.mxu0 0
        %1893 = vmatprep.subr.bf16.mxu0 0
        %1894 = vmatpush1.bf16.msra.mxu0 0
        %1895 = vmatprep.subr.bf16.mxu0 0
        %1896 = vmatpush1.bf16.msra.mxu0 0
        %1897 = vmatprep.subr.bf16.mxu0 0
        %1898 = vmatpush1.bf16.msra.mxu0 0
        %1899 = vmatprep.subr.bf16.mxu0 0
        %1900 = vmatpush1.bf16.msra.mxu0 0
        %1901 = vmatprep.subr.bf16.mxu0 0
        %1902 = vmatpush1.bf16.msra.mxu0 0
        %1903 = vmatprep.subr.bf16.mxu0 0
        %1904 = vmatpush1.bf16.msra.mxu0 0
        %1905 = vmatprep.mubr.bf16.mxu0 0
        %1906 = vmatmul.mubr.bf16.gmra.mrb[0].mxu0 %v1871
        %v1907 = vpop.f32.mrb[0].mxu0
        %v1908 = vadd.f32 0.0, %v1907
        %v1909 = vpop.f32.mrb[0].mxu0
        %v1910 = vpop.f32.mrb[0].mxu0
        %v1911 = vadd.f32 0.0, %v1910
        %v1912 = vpop.f32.mrb[0].mxu0
        %1913 = vdwg.mxu0
        %1916 = vrot.lane.b32.xlu0 %v1908, 32
        %v1917 = vpop.permute.xlu0 %1916
        %1918 = vrot.lane.b32.xlu0 %v1911, 32
        %v1919 = vpop.permute.xlu0 %1918
        %1922 = vst.msk [vmem:[#allocation2] sm:$0xff] %vm865, %v1917
        %1923 = vst.msk [vmem:[#allocation2 + $0x8] sm:$0xff] %vm865, %v1919
        %1924 = vrot.lane.b32.xlu0 %v1460, 80
        %v1925 = vpop.permute.xlu0 %1924
        %1926 = vrot.lane.b32.xlu0 %v1461, 16
        %v1927 = vpop.permute.xlu0 %1926
        %v1929 = vsel %vm485, %v1925, 0
        %v1932 = vsel %vm485, %v1927, 0
        %1934 = vmatprep.subr.bf16.mxu0 0
        %1935 = vmatpush1.bf16.xpose.msra.mxu0 %v1932
        %1936 = vmatprep.subr.bf16.mxu0 0
        %1937 = vmatpush1.bf16.xpose.msra.mxu0 0
        %1938 = vmatprep.subr.bf16.mxu0 0
        %1939 = vmatpush1.bf16.xpose.msra.mxu0 0
        %1940 = vmatprep.subr.bf16.mxu0 0
        %1941 = vmatpush1.bf16.xpose.msra.mxu0 0
        %1942 = vmatprep.subr.bf16.mxu0 0
        %1943 = vmatpush1.bf16.xpose.msra.mxu0 0
        %1944 = vmatprep.subr.bf16.mxu0 0
        %1945 = vmatpush1.bf16.xpose.msra.mxu0 0
        %1946 = vmatprep.subr.bf16.mxu0 0
        %1947 = vmatpush1.bf16.xpose.msra.mxu0 0
        %1948 = vmatprep.subr.bf16.mxu0 0
        %1949 = vmatpush1.bf16.xpose.msra.mxu0 0
        %1950 = vmatprep.subr.bf16.mxu0 0
        %1951 = vmatpush1.bf16.xpose.msra.mxu0 0
        %1952 = vmatprep.subr.bf16.mxu0 0
        %1953 = vmatpush1.bf16.xpose.msra.mxu0 0
        %1954 = vmatprep.subr.bf16.mxu0 0
        %1955 = vmatpush1.bf16.xpose.msra.mxu0 0
        %1956 = vmatprep.subr.bf16.mxu0 0
        %1957 = vmatpush1.bf16.xpose.msra.mxu0 0
        %1958 = vmatprep.subr.bf16.mxu0 0
        %1959 = vmatpush1.bf16.xpose.msra.mxu0 0
        %1960 = vmatprep.subr.bf16.mxu0 0
        %1961 = vmatpush1.bf16.xpose.msra.mxu0 0
        %1962 = vmatprep.subr.bf16.mxu0 0
        %1963 = vmatpush1.bf16.xpose.msra.mxu0 0
        %1964 = vmatprep.subr.bf16.mxu0 0
        %1965 = vmatpush1.bf16.xpose.msra.mxu0 0
        %1966 = vmatprep.mubr.bf16.mxu0 0
        %1967 = vmatmul.mubr.bf16.gmra.mrb[0].mxu0 %v1929
        %v1968 = vpop.f32.mrb[0].mxu0
        %v1969 = vadd.f32 0.0, %v1968
        %v1970 = vpop.f32.mrb[0].mxu0
        %v1971 = vpop.f32.mrb[0].mxu0
        %v1972 = vadd.f32 0.0, %v1971
        %v1973 = vpop.f32.mrb[0].mxu0
        %1974 = vdwg.mxu0
        %v1975 = vsel %vm485, %v1969, -inf
        %1976 = vmax.xlane.f32.xlu0 %v1975
        %v1977 = vpop.xlane.xlu0 %1976
        %v1978 = vsel %vm485, %v1972, -inf
        %1979 = vmax.xlane.f32.xlu0 %v1978
        %v1980 = vpop.xlane.xlu0 %1979
        %v1981 = vsub.f32 %v1969, %v1977
        %v1982 = vsub.f32 %v1972, %v1980
        %v1983 = vmul.f32 %v1981, 1.442695
        %v1984 = vpow.pop %v1983
        %v1985 = vmul.f32 %v1982, 1.442695
        %v1986 = vpow.pop %v1985
        %v1987 = vsel %vm485, %v1984, 0.0
        %1988 = vadd.xlane.f32.xlu0 %v1987
        %v1989 = vpop.xlane.xlu0 %1988
        %v1990 = vsel %vm485, %v1986, 0.0
        %1991 = vadd.xlane.f32.xlu0 %v1990
        %v1992 = vpop.xlane.xlu0 %1991
        %v1993 = vrcp.pop %v1989
        %v1994 = vrcp.pop %v1992
        %v1995 = vmul.f32 %v1984, %v1993
        %v1996 = vmul.f32 %v1986, %v1994
        %v1997 = vpack.c.bf16 %v1996, %v1995
        %1998 = vrot.lane.b32.xlu0 %v1540, 80
        %v1999 = vpop.permute.xlu0 %1998
        %v2002 = vsel %vm485, %v1997, 0
        %2004 = vmatprep.subr.bf16.mxu0 0
        %2005 = vmatpush1.bf16.msra.mxu0 %v1999
        %2006 = vmatprep.subr.bf16.mxu0 0
        %2007 = vmatpush1.bf16.msra.mxu0 0
        %2008 = vmatprep.subr.bf16.mxu0 0
        %2009 = vmatpush1.bf16.msra.mxu0 0
        %2010 = vmatprep.subr.bf16.mxu0 0
        %2011 = vmatpush1.bf16.msra.mxu0 0
        %2012 = vmatprep.subr.bf16.mxu0 0
        %2013 = vmatpush1.bf16.msra.mxu0 0
        %2014 = vmatprep.subr.bf16.mxu0 0
        %2015 = vmatpush1.bf16.msra.mxu0 0
        %2016 = vmatprep.subr.bf16.mxu0 0
        %2017 = vmatpush1.bf16.msra.mxu0 0
        %2018 = vmatprep.subr.bf16.mxu0 0
        %2019 = vmatpush1.bf16.msra.mxu0 0
        %2020 = vmatprep.subr.bf16.mxu0 0
        %2021 = vmatpush1.bf16.msra.mxu0 0
        %2022 = vmatprep.subr.bf16.mxu0 0
        %2023 = vmatpush1.bf16.msra.mxu0 0
        %2024 = vmatprep.subr.bf16.mxu0 0
        %2025 = vmatpush1.bf16.msra.mxu0 0
        %2026 = vmatprep.subr.bf16.mxu0 0
        %2027 = vmatpush1.bf16.msra.mxu0 0
        %2028 = vmatprep.subr.bf16.mxu0 0
        %2029 = vmatpush1.bf16.msra.mxu0 0
        %2030 = vmatprep.subr.bf16.mxu0 0
        %2031 = vmatpush1.bf16.msra.mxu0 0
        %2032 = vmatprep.subr.bf16.mxu0 0
        %2033 = vmatpush1.bf16.msra.mxu0 0
        %2034 = vmatprep.subr.bf16.mxu0 0
        %2035 = vmatpush1.bf16.msra.mxu0 0
        %2036 = vmatprep.mubr.bf16.mxu0 0
        %2037 = vmatmul.mubr.bf16.gmra.mrb[0].mxu0 %v2002
        %v2038 = vpop.f32.mrb[0].mxu0
        %v2039 = vadd.f32 0.0, %v2038
        %v2040 = vpop.f32.mrb[0].mxu0
        %v2041 = vpop.f32.mrb[0].mxu0
        %v2042 = vadd.f32 0.0, %v2041
        %v2043 = vpop.f32.mrb[0].mxu0
        %2044 = vdwg.mxu0
        %2047 = vrot.lane.b32.xlu0 %v2039, 48
        %v2048 = vpop.permute.xlu0 %2047
        %2049 = vrot.lane.b32.xlu0 %v2042, 48
        %v2050 = vpop.permute.xlu0 %2049
        %2053 = vst.msk [vmem:[#allocation2] sm:$0xff] %vm997, %v2048
        %2054 = vst.msk [vmem:[#allocation2 + $0x8] sm:$0xff] %vm997, %v2050
        %v2055 = vld [vmem:[#allocation2] sm:$0xff]
        %v2056 = vld [vmem:[#allocation2 + $0x8] sm:$0xff]
        %v2057 = vpack.c.bf16 %v2056, %v2055
        %v2058 = vld [vmem:[#allocation8 + $0xc0] sm:$0xf]
        %v2059 = vld [vmem:[#allocation8 + $0xc4] sm:$0xf]
        %v2060 = vld [vmem:[#allocation8 + $0xc8] sm:$0xf]
        %v2061 = vld [vmem:[#allocation8 + $0xcc] sm:$0xf]
        %v2062 = vld [vmem:[#allocation8 + $0xd0] sm:$0xf]
        %v2063 = vld [vmem:[#allocation8 + $0xd4] sm:$0xf]
        %v2064 = vld [vmem:[#allocation8 + $0xd8] sm:$0xf]
        %v2065 = vld [vmem:[#allocation8 + $0xdc] sm:$0xf]
        %v2066 = vld [vmem:[#allocation9 + $0x9] sm:$0x1]
        %v2067 = vlaneseq
        %v2068 = vshrl.u32 %v2067, 7
        %v2069 = vsub.s32 0, %v2068
        %v2070 = vrot.slane %v2066, %v2069
        %v2079 = vunpack.c.l.b16 %v2058
        %v2080 = vunpack.c.l.b16 %v2059
        %v2081 = vunpack.c.l.b16 %v2060
        %v2082 = vunpack.c.l.b16 %v2061
        %v2083 = vunpack.c.l.b16 %v2062
        %v2084 = vunpack.c.l.b16 %v2063
        %v2085 = vunpack.c.l.b16 %v2064
        %v2086 = vunpack.c.l.b16 %v2065
        %v2087 = vpack.c.b16 %v2080, %v2079
        %v2088 = vpack.c.b16 %v2082, %v2081
        %v2089 = vpack.c.b16 %v2084, %v2083
        %v2090 = vpack.c.b16 %v2086, %v2085
        %2091 = vrot.lane.b32.xlu0 %v2087, 64
        %v2092 = vpop.permute.xlu0 %2091
        %2093 = vrot.lane.b32.xlu0 %v2088, 64
        %v2094 = vpop.permute.xlu0 %2093
        %2095 = vrot.lane.b32.xlu0 %v2089, 64
        %v2096 = vpop.permute.xlu0 %2095
        %2097 = vrot.lane.b32.xlu0 %v2090, 64
        %v2098 = vpop.permute.xlu0 %2097
        %2104 = vrot.lane.b32.xlu0 %v2070, 64
        %v2105 = vpop.permute.xlu0 %2104
        %v2108 = vsel %vm347, %v2057, 0
        %2110 = vmatprep.subr.bf16.mxu0 0
        %2111 = vmatpush1.bf16.msra.mxu0 %v2092
        %2112 = vmatprep.subr.bf16.mxu0 0
        %2113 = vmatpush1.bf16.msra.mxu0 %v2094
        %2114 = vmatprep.subr.bf16.mxu0 0
        %2115 = vmatpush1.bf16.msra.mxu0 %v2096
        %2116 = vmatprep.subr.bf16.mxu0 0
        %2117 = vmatpush1.bf16.msra.mxu0 %v2098
        %2118 = vmatprep.subr.bf16.mxu0 0
        %2119 = vmatpush1.bf16.msra.mxu0 0
        %2120 = vmatprep.subr.bf16.mxu0 0
        %2121 = vmatpush1.bf16.msra.mxu0 0
        %2122 = vmatprep.subr.bf16.mxu0 0
        %2123 = vmatpush1.bf16.msra.mxu0 0
        %2124 = vmatprep.subr.bf16.mxu0 0
        %2125 = vmatpush1.bf16.msra.mxu0 0
        %2126 = vmatprep.subr.bf16.mxu0 0
        %2127 = vmatpush1.bf16.msra.mxu0 0
        %2128 = vmatprep.subr.bf16.mxu0 0
        %2129 = vmatpush1.bf16.msra.mxu0 0
        %2130 = vmatprep.subr.bf16.mxu0 0
        %2131 = vmatpush1.bf16.msra.mxu0 0
        %2132 = vmatprep.subr.bf16.mxu0 0
        %2133 = vmatpush1.bf16.msra.mxu0 0
        %2134 = vmatprep.subr.bf16.mxu0 0
        %2135 = vmatpush1.bf16.msra.mxu0 0
        %2136 = vmatprep.subr.bf16.mxu0 0
        %2137 = vmatpush1.bf16.msra.mxu0 0
        %2138 = vmatprep.subr.bf16.mxu0 0
        %2139 = vmatpush1.bf16.msra.mxu0 0
        %2140 = vmatprep.subr.bf16.mxu0 0
        %2141 = vmatpush1.bf16.msra.mxu0 0
        %2142 = vmatprep.mubr.bf16.mxu0 0
        %2143 = vmatmul.mubr.bf16.gmra.mrb[0].mxu0 %v2108
        %v2144 = vpop.f32.mrb[0].mxu0
        %v2145 = vadd.f32 %v2105, %v2144
        %v2146 = vpop.f32.mrb[0].mxu0
        %v2147 = vpop.f32.mrb[0].mxu0
        %v2148 = vadd.f32 %v2105, %v2147
        %v2149 = vpop.f32.mrb[0].mxu0
        %2150 = vdwg.mxu0
        %v2151 = vadd.f32 %v1372, %v2145
        %v2152 = vadd.f32 %v1373, %v2148
        %v2153 = vld [vmem:[#allocation9 + $0xb] sm:$0x1]
        %v2154 = vld [vmem:[#allocation9 + $0xc] sm:$0x1]
        %v2155 = vsel %vm347, %v2151, 0.0
        %2156 = vadd.xlane.f32.xlu0 %v2155
        %v2157 = vpop.xlane.xlu0 %2156
        %v2158 = vsel %vm347, %v2152, 0.0
        %2159 = vadd.xlane.f32.xlu0 %v2158
        %v2160 = vpop.xlane.xlu0 %2159
        %v2161 = vmul.f32 %v2157, %v1106
        %v2162 = vmul.f32 %v2160, %v1106
        %v2163 = vsub.f32 %v2151, %v2161
        %v2164 = vsub.f32 %v2152, %v2162
        %v2165 = vmul.f32 %v2163, %v2163
        %v2166 = vmul.f32 %v2164, %v2164
        %v2167 = vsel %vm347, %v2165, 0.0
        %2168 = vadd.xlane.f32.xlu0 %v2167
        %v2169 = vpop.xlane.xlu0 %2168
        %v2170 = vsel %vm347, %v2166, 0.0
        %2171 = vadd.xlane.f32.xlu0 %v2170
        %v2172 = vpop.xlane.xlu0 %2171
        %v2173 = vmul.f32 %v2169, %v1106
        %v2174 = vmul.f32 %v2172, %v1106
        %v2175 = vadd.f32 %v2173, 1e-05
        %v2176 = vadd.f32 %v2174, 1e-05
        %v2177 = vrsqrt.pop %v2175
        %v2178 = vrsqrt.pop %v2176
        %v2179 = vmul.f32 %v2163, %v2177
        %v2180 = vmul.f32 %v2164, %v2178
        %v2181 = vlaneseq
        %v2182 = vshrl.u32 %v2181, 7
        %v2183 = vsub.s32 0, %v2182
        %v2184 = vrot.slane %v2153, %v2183
        %2186 = vrot.lane.b32.xlu0 %v2184, 64
        %v2187 = vpop.permute.xlu0 %2186
        %v2189 = vmul.f32 %v2179, %v2187
        %v2190 = vmul.f32 %v2180, %v2187
        %v2191 = vlaneseq
        %v2192 = vshrl.u32 %v2191, 7
        %v2193 = vsub.s32 0, %v2192
        %v2194 = vrot.slane %v2154, %v2193
        %v2195 = vadd.f32 %v2189, %v2194
        %v2196 = vadd.f32 %v2190, %v2194
        %v2197 = vpack.c.bf16 %v2196, %v2195
        %v2198 = vld [vmem:[#allocation8 + $0xe0] sm:$0xf]
        %v2199 = vld [vmem:[#allocation8 + $0xe4] sm:$0xf]
        %v2200 = vld [vmem:[#allocation8 + $0xe8] sm:$0xf]
        %v2201 = vld [vmem:[#allocation8 + $0xec] sm:$0xf]
        %v2202 = vld [vmem:[#allocation8 + $0xf0] sm:$0xf]
        %v2203 = vld [vmem:[#allocation8 + $0xf4] sm:$0xf]
        %v2204 = vld [vmem:[#allocation8 + $0xf8] sm:$0xf]
        %v2205 = vld [vmem:[#allocation8 + $0xfc] sm:$0xf]
        %v2206 = vld [vmem:[#allocation9 + $0xa] sm:$0x1]
        %v2207 = vlaneseq
        %v2208 = vshrl.u32 %v2207, 7
        %v2209 = vsub.s32 0, %v2208
        %v2210 = vrot.slane %v2206, %v2209
        %v2219 = vunpack.c.l.b16 %v2198
        %v2220 = vunpack.c.l.b16 %v2199
        %v2221 = vunpack.c.l.b16 %v2200
        %v2222 = vunpack.c.l.b16 %v2201
        %v2223 = vunpack.c.l.b16 %v2202
        %v2224 = vunpack.c.l.b16 %v2203
        %v2225 = vunpack.c.l.b16 %v2204
        %v2226 = vunpack.c.l.b16 %v2205
        %v2227 = vpack.c.b16 %v2220, %v2219
        %v2228 = vpack.c.b16 %v2222, %v2221
        %v2229 = vpack.c.b16 %v2224, %v2223
        %v2230 = vpack.c.b16 %v2226, %v2225
        %v2236 = vsel %vm347, %v2197, 0
        %2238 = vmatprep.subr.bf16.mxu0 0
        %2239 = vmatpush1.bf16.msra.mxu0 %v2227
        %2240 = vmatprep.subr.bf16.mxu0 0
        %2241 = vmatpush1.bf16.msra.mxu0 %v2228
        %2242 = vmatprep.subr.bf16.mxu0 0
        %2243 = vmatpush1.bf16.msra.mxu0 %v2229
        %2244 = vmatprep.subr.bf16.mxu0 0
        %2245 = vmatpush1.bf16.msra.mxu0 %v2230
        %2246 = vmatprep.subr.bf16.mxu0 0
        %2247 = vmatpush1.bf16.msra.mxu0 0
        %2248 = vmatprep.subr.bf16.mxu0 0
        %2249 = vmatpush1.bf16.msra.mxu0 0
        %2250 = vmatprep.subr.bf16.mxu0 0
        %2251 = vmatpush1.bf16.msra.mxu0 0
        %2252 = vmatprep.subr.bf16.mxu0 0
        %2253 = vmatpush1.bf16.msra.mxu0 0
        %2254 = vmatprep.subr.bf16.mxu0 0
        %2255 = vmatpush1.bf16.msra.mxu0 0
        %2256 = vmatprep.subr.bf16.mxu0 0
        %2257 = vmatpush1.bf16.msra.mxu0 0
        %2258 = vmatprep.subr.bf16.mxu0 0
        %2259 = vmatpush1.bf16.msra.mxu0 0
        %2260 = vmatprep.subr.bf16.mxu0 0
        %2261 = vmatpush1.bf16.msra.mxu0 0
        %2262 = vmatprep.subr.bf16.mxu0 0
        %2263 = vmatpush1.bf16.msra.mxu0 0
        %2264 = vmatprep.subr.bf16.mxu0 0
        %2265 = vmatpush1.bf16.msra.mxu0 0
        %2266 = vmatprep.subr.bf16.mxu0 0
        %2267 = vmatpush1.bf16.msra.mxu0 0
        %2268 = vmatprep.subr.bf16.mxu0 0
        %2269 = vmatpush1.bf16.msra.mxu0 0
        %2270 = vmatprep.mubr.bf16.mxu0 0
        %2271 = vmatmul.mubr.bf16.gmra.mrb[0].mxu0 %v2236
        %v2272 = vpop.f32.mrb[0].mxu0
        %v2273 = vadd.f32 %v2210, %v2272
        %v2274 = vpop.f32.mrb[0].mxu0
        %v2275 = vpop.f32.mrb[0].mxu0
        %v2276 = vadd.f32 %v2210, %v2275
        %v2277 = vpop.f32.mrb[0].mxu0
        %2278 = vdwg.mxu0
        %v2279 = vmax.f32 %v2273, 0.0
        %v2280 = vmax.f32 %v2276, 0.0
        %v2281 = vpack.c.bf16 %v2280, %v2279
        %v2282 = vld [vmem:[#allocation8 + $0x100] sm:$0xf]
        %v2283 = vld [vmem:[#allocation8 + $0x104] sm:$0xf]
        %v2284 = vld [vmem:[#allocation8 + $0x108] sm:$0xf]
        %v2285 = vld [vmem:[#allocation8 + $0x10c] sm:$0xf]
        %v2286 = vld [vmem:[#allocation8 + $0x110] sm:$0xf]
        %v2287 = vld [vmem:[#allocation8 + $0x114] sm:$0xf]
        %v2288 = vld [vmem:[#allocation8 + $0x118] sm:$0xf]
        %v2289 = vld [vmem:[#allocation8 + $0x11c] sm:$0xf]
        %v2290 = vld [vmem:[#allocation8 + $0x120] sm:$0xf]
        %v2291 = vld [vmem:[#allocation8 + $0x124] sm:$0xf]
        %v2292 = vld [vmem:[#allocation8 + $0x128] sm:$0xf]
        %v2293 = vld [vmem:[#allocation8 + $0x12c] sm:$0xf]
        %v2294 = vld [vmem:[#allocation8 + $0x130] sm:$0xf]
        %v2295 = vld [vmem:[#allocation8 + $0x134] sm:$0xf]
        %v2296 = vld [vmem:[#allocation8 + $0x138] sm:$0xf]
        %v2297 = vld [vmem:[#allocation8 + $0x13c] sm:$0xf]
        %v2314 = vunpack.c.l.b16 %v2282
        %v2315 = vunpack.c.l.b16 %v2283
        %v2316 = vunpack.c.l.b16 %v2284
        %v2317 = vunpack.c.l.b16 %v2285
        %v2318 = vunpack.c.l.b16 %v2286
        %v2319 = vunpack.c.l.b16 %v2287
        %v2320 = vunpack.c.l.b16 %v2288
        %v2321 = vunpack.c.l.b16 %v2289
        %v2322 = vunpack.c.l.b16 %v2290
        %v2323 = vunpack.c.l.b16 %v2291
        %v2324 = vunpack.c.l.b16 %v2292
        %v2325 = vunpack.c.l.b16 %v2293
        %v2326 = vunpack.c.l.b16 %v2294
        %v2327 = vunpack.c.l.b16 %v2295
        %v2328 = vunpack.c.l.b16 %v2296
        %v2329 = vunpack.c.l.b16 %v2297
        %v2330 = vpack.c.b16 %v2315, %v2314
        %v2331 = vpack.c.b16 %v2317, %v2316
        %v2332 = vpack.c.b16 %v2319, %v2318
        %v2333 = vpack.c.b16 %v2321, %v2320
        %v2334 = vpack.c.b16 %v2323, %v2322
        %v2335 = vpack.c.b16 %v2325, %v2324
        %v2336 = vpack.c.b16 %v2327, %v2326
        %v2337 = vpack.c.b16 %v2329, %v2328
        %2346 = vmatprep.subr.bf16.mxu0 0
        %2347 = vmatpush1.bf16.msra.mxu0 %v2330
        %2348 = vmatprep.subr.bf16.mxu0 0
        %2349 = vmatpush1.bf16.msra.mxu0 %v2331
        %2350 = vmatprep.subr.bf16.mxu0 0
        %2351 = vmatpush1.bf16.msra.mxu0 %v2332
        %2352 = vmatprep.subr.bf16.mxu0 0
        %2353 = vmatpush1.bf16.msra.mxu0 %v2333
        %2354 = vmatprep.subr.bf16.mxu0 0
        %2355 = vmatpush1.bf16.msra.mxu0 %v2334
        %2356 = vmatprep.subr.bf16.mxu0 0
        %2357 = vmatpush1.bf16.msra.mxu0 %v2335
        %2358 = vmatprep.subr.bf16.mxu0 0
        %2359 = vmatpush1.bf16.msra.mxu0 %v2336
        %2360 = vmatprep.subr.bf16.mxu0 0
        %2361 = vmatpush1.bf16.msra.mxu0 %v2337
        %2362 = vmatprep.subr.bf16.mxu0 0
        %2363 = vmatpush1.bf16.msra.mxu0 0
        %2364 = vmatprep.subr.bf16.mxu0 0
        %2365 = vmatpush1.bf16.msra.mxu0 0
        %2366 = vmatprep.subr.bf16.mxu0 0
        %2367 = vmatpush1.bf16.msra.mxu0 0
        %2368 = vmatprep.subr.bf16.mxu0 0
        %2369 = vmatpush1.bf16.msra.mxu0 0
        %2370 = vmatprep.subr.bf16.mxu0 0
        %2371 = vmatpush1.bf16.msra.mxu0 0
        %2372 = vmatprep.subr.bf16.mxu0 0
        %2373 = vmatpush1.bf16.msra.mxu0 0
        %2374 = vmatprep.subr.bf16.mxu0 0
        %2375 = vmatpush1.bf16.msra.mxu0 0
        %2376 = vmatprep.subr.bf16.mxu0 0
        %2377 = vmatpush1.bf16.msra.mxu0 0
        %2378 = vmatprep.mubr.bf16.mxu0 0
        %2379 = vmatmul.mubr.bf16.gmra.mrb[0].mxu0 %v2281
        %v2380 = vpop.f32.mrb[0].mxu0
        %v2381 = vadd.f32 %v2184, %v2380
        %v2382 = vpop.f32.mrb[0].mxu0
        %v2383 = vpop.f32.mrb[0].mxu0
        %v2384 = vpop.f32.mrb[0].mxu0
        %2385 = vdwg.mxu0
        %v2386 = vadd.f32 %v2195, %v2381
        %v2387 = vld [vmem:[#allocation9 + $0xd] sm:$0x1]
        %v2388 = vsel %vm347, %v2386, 0.0
        %2389 = vadd.xlane.f32.xlu0 %v2388
        %v2390 = vpop.xlane.xlu0 %2389
        %v2391 = vmul.f32 %v2390, %v1106
        %v2392 = vsub.f32 %v2386, %v2391
        %v2393 = vmul.f32 %v2392, %v2392
        %v2394 = vsel %vm347, %v2393, 0.0
        %2395 = vadd.xlane.f32.xlu0 %v2394
        %v2396 = vpop.xlane.xlu0 %2395
        %v2397 = vmul.f32 %v2396, %v1106
        %v2398 = vadd.f32 %v2397, 1e-05
        %v2399 = vrsqrt.pop %v2398
        %v2400 = vmul.f32 %v2392, %v2399
        %2402 = vrot.lane.b32.xlu0 %v2194, 64
        %v2403 = vpop.permute.xlu0 %2402
        %v2405 = vmul.f32 %v2400, %v2403
        %v2406 = vlaneseq
        %v2407 = vshrl.u32 %v2406, 7
        %v2408 = vsub.s32 0, %v2407
        %v2409 = vrot.slane %v2387, %v2408
        %v2410 = vadd.f32 %v2405, %v2409
        %v2411 = vld [vmem:[#allocation9 + $0x1] sm:$0x1]
        %v2412 = vmul.f32 %v2410, %v2411
        %vm2413 = vcmask 516096
        %v2414 = vsel %vm2413, %v2412, 0.0
        %2415 = vadd.xlane.f32.xlu0 %v2414
        %v2416 = vpop.xlane.xlu0 %2415
        %v2417 = vadd.f32 %v2416, %v2411
        %2419 = vset.pattern.permute.xlu0 64
        %2420 = vperm.xlu0 %2419, %v2417
        %v2421 = vpop.permute.xlu0 %2420
        %2423 = vst [vmem:[%s252] sm:$0x1] %v2421
        %s2424 = sand.u32 %s120, 1
        %s2425 = scalar_lea.sflag [#allocation5], %s2424
        %s2426 = sand.u32 %s120, 1
        %s2427 = scalar_lea.vmem [#allocation11], %s2426
        // Predicated region
        $region53: #{tpu_custom_call.1} parent=35 // pred_check
          %p2428 = pneg %p130
        $region54: #{tpu_custom_call.1} parent=35 // pred_check_branch
          %2430 = sbr.rel (%p2428) target = $region56
        $region55: #{tpu_custom_call.1} parent=35 // pred_region
          %s2432 = ssub.s32 16, 16
          %2433 = vsyncadd %s2425, %s2432
          %s2434 = smul.addr %s23, 16
          %s2435 = scalar_lea.hbm %s4, %s2434
          %s2437 = sshll.u32 %s2427, 4
          %s2438 = int_to_ptr.vmem [resolvable:$true] %s2437
          %2440 = dma.vmem_to_hbm [thread:$0]  %s2438, 16, %s2435, %s2425
        $region56: #{tpu_custom_call.1} parent=35 // pred_fallthru
          _
      $region36: #{tpu_custom_call.1} parent=5 // pred_fallthru
        _
      %p2441 = scmp.le.s32.totalorder 2, %s18
      // Predicated region
      $region57: #{tpu_custom_call.1} parent=5 // pred_check
        %p2442 = pneg %p2441
      $region58: #{tpu_custom_call.1} parent=5 // pred_check_branch
        %2444 = sbr.rel (%p2442) target = $region60
      $region59: #{tpu_custom_call.1} parent=5 // pred_region
        %s2445 = ssub.s32 %s18, 2
        // Predicated region
        $region61: #{tpu_custom_call.1} parent=59 // pred_check
          %p2446 = pneg %p136
        $region62: #{tpu_custom_call.1} parent=59 // pred_check_branch
          %2448 = sbr.rel (%p2446) target = $region64
        $region63: #{tpu_custom_call.1} parent=59 // pred_region
          %s2449 = sand.u32 %s121, 1
          %s2450 = scalar_lea.sflag [#allocation5], %s2449
          %s2451 = sand.u32 %s121, 1
          %s2452 = scalar_lea.vmem [#allocation11], %s2451
          %2453 = dma.done %s2450, 16
        $region64: #{tpu_custom_call.1} parent=59 // pred_fallthru
          _
      $region60: #{tpu_custom_call.1} parent=5 // pred_fallthru
        _
    $region6: #{tpu_custom_call.1} parent=1 // loop_footer
      %s22 = sadd.s32 1, %s18
    $region7: #{tpu_custom_call.1} parent=1 // loop_footer_branch
      %17 = sbr.rel target = $region3
    $region8: #{tpu_custom_call.1} parent=1 // loop_exit
      _
    %2454 = vsyncpa [#allocation4], 1
    %s2455 = scalar_lea.sflag [#allocation4], 1
    %2456 = vsyncpa %s2455, 1
    %2457 = vsyncpa [#allocation7], 1
    %2458 = vsyncpa [#allocation10], 1
    %2459 = vsyncpa [#allocation5], 1
    %s2460 = scalar_lea.sflag [#allocation5], 1
    %2461 = vsyncpa %s2460, 1

</llo_original>
